<compile_context>
chip_gen: v6e
topology: v6e:2x2x1
jax: 0.10.0
libtpu: 0.0.40
codegen_flags: <defaults>
</compile_context>

<pallas_src>
import jax
import jax.numpy as jnp
from jax.experimental import pallas as pl
from jax.experimental.pallas import tpu as pltpu

DILATIONS = (12, 24, 36)


# ----------------------------------------------------------------------------
# Fused kernel: all 5 branches + out_conv for one image per grid step.
# ----------------------------------------------------------------------------
def make_spp_kernel(h, w, pad, dilations, cout):
    hw = h * w

    def kernel(xp_ref, w0_ref, wd_ref, w4_ref, wout_ref, b_ref, o_ref):
        cin = xp_ref.shape[-1]

        def window(dh, dw):
            # Statically shifted (h, w) window of the halo-padded image,
            # flattened to pixel rows.  dh/dw are Python ints (trace-time).
            blk = xp_ref[pad + dh:pad + dh + h, pad + dw:pad + dw + w, :]
            return blk.reshape(hw, cin)                     # (hw, cin) bf16

        xc = window(0, 0)

        # --- branch 0: 1x1 conv (BN scale folded into W) + bias + ReLU ----
        o0 = jnp.maximum(
            jnp.dot(xc, w0_ref[...], preferred_element_type=jnp.float32)
            + b_ref[0], 0.0)

        # --- fused out_conv accumulator: out = sum_k branch_k @ Wout_k ----
        acc = jnp.dot(o0.astype(jnp.bfloat16), wout_ref[0],
                      preferred_element_type=jnp.float32)

        # --- branches 1..3: dilated 3x3 conv as 9 per-tap matmuls ---------
        for di, d in enumerate(dilations):
            bacc = jnp.zeros((hw, cout), jnp.float32)
            for kh in range(3):
                for kw in range(3):
                    dh, dw = (kh - 1) * d, (kw - 1) * d
                    if abs(dh) >= h or abs(dw) >= w:
                        continue  # window entirely inside the zero halo
                    xs = window(dh, dw)
                    bacc = bacc + jnp.dot(
                        xs, wd_ref[di * 9 + kh * 3 + kw],
                        preferred_element_type=jnp.float32)
            ob = jnp.maximum(bacc + b_ref[1 + di], 0.0)
            acc = acc + jnp.dot(ob.astype(jnp.bfloat16), wout_ref[1 + di],
                                preferred_element_type=jnp.float32)

        # --- branch 4: global avg-pool -> 1x1 conv -> BN -> ReLU ----------
        # (bilinear upsample from 1x1 == constant broadcast, so it enters
        #  the fused out_conv as a single broadcast row)
        pooled = jnp.mean(xc.astype(jnp.float32), axis=0, keepdims=True)
        o4 = jnp.maximum(
            jnp.dot(pooled, w4_ref[...].astype(jnp.float32),
                    preferred_element_type=jnp.float32) + b_ref[4], 0.0)
        c4 = jnp.dot(o4, wout_ref[4].astype(jnp.float32),
                     preferred_element_type=jnp.float32)     # (1, cout)

        # --- out_conv epilogue: bias + ReLU -------------------------------
        # TODO(synk): training-mode Dropout(0.25) would need in-kernel PRNG
        # masking (pltpu.prng_seed / prng_random_bits); identity at eval.
        o_ref[...] = jnp.maximum(acc + c4 + b_ref[5], 0.0)

    return kernel


# ----------------------------------------------------------------------------
# Forward pass (mirrors SPPModule.forward).  Input/output are NCHW like torch.
# ----------------------------------------------------------------------------
@jax.jit
def spp_module_forward(x_nchw, params):
    n, cin, h, w = x_nchw.shape
    cout = cin // 2
    pad = max(DILATIONS)
    hw = h * w

    # NCHW -> NHWC, halo-pad once by the max dilation (shared by every
    # dilated branch), cast the MXU operand to bf16.
    x = jnp.transpose(x_nchw, (0, 2, 3, 1))
    xp = jnp.pad(x, ((0, 0), (pad, pad), (pad, pad), (0, 0)))
    xp = xp.astype(jnp.bfloat16)
    hp, wp = h + 2 * pad, w + 2 * pad

    out = pl.pallas_call(
        make_spp_kernel(h, w, pad, DILATIONS, cout),
        out_shape=jax.ShapeDtypeStruct((n, hw, cout), jnp.float32),
        grid_spec=pltpu.PrefetchScalarGridSpec(
            num_scalar_prefetch=0,
            grid=(n,),
            in_specs=[
                pl.BlockSpec((None, hp, wp, cin), lambda b: (b, 0, 0, 0)),
                pl.BlockSpec((cin, cout), lambda b: (0, 0)),
                pl.BlockSpec((27, cin, cout), lambda b: (0, 0, 0)),
                pl.BlockSpec((cin, cout), lambda b: (0, 0)),
                pl.BlockSpec((5, cout, cout), lambda b: (0, 0, 0)),
                pl.BlockSpec((6, 1, cout), lambda b: (0, 0, 0)),
            ],
            out_specs=pl.BlockSpec((None, hw, cout), lambda b: (b, 0, 0)),
        ),
        compiler_params=pltpu.CompilerParams(
            dimension_semantics=("parallel",),
            vmem_limit_bytes=32 * 1024 * 1024),
    )(xp, params["w0"], params["wd"], params["w4"], params["wout"],
      params["b"])

    # (n, h*w, cout) -> NCHW.  cout is tiny at the test size so the
    # lane-dense-store question is moot; at real ASPP widths (cout >= 128)
    # this store is already lane-dense.
    return out.transpose(0, 2, 1).reshape(n, cout, h, w)


# ----------------------------------------------------------------------------
# Deterministic synthetic parameters.  BN (inference) scale is folded into
# the conv weights; kernel copies are bf16, reference copies stay f32.
# ----------------------------------------------------------------------------
def init_params(key, cin):
    cout = cin // 2
    keys = iter(jax.random.split(key, 32))

    def folded_bn(c):
        gamma = 0.5 + jax.random.uniform(next(keys), (c,))
        beta = 0.1 * jax.random.normal(next(keys), (c,))
        mean = 0.1 * jax.random.normal(next(keys), (c,))
        var = 0.5 + jax.random.uniform(next(keys), (c,))
        scale = gamma / jnp.sqrt(var + 1e-5)
        return scale.astype(jnp.float32), (beta - mean * scale).astype(jnp.float32)

    biases = []

    # branch 0: Conv2d(cin, cout, 1, bias=False) + BN
    w0 = 0.1 * jax.random.normal(next(keys), (cout, cin, 1, 1))
    s, b = folded_bn(cout)
    w0 = w0[:, :, 0, 0].T * s[None, :]
    biases.append(b)

    # branches 1-3: Conv2d(cin, cout, 3, padding=d, dilation=d, bias=False) + BN
    wd = []
    for _ in range(3):
        wk = 0.1 * jax.random.normal(next(keys), (cout, cin, 3, 3))
        s, b = folded_bn(cout)
        # (cout, cin, kh, kw) -> (kh, kw, cin, cout), fold BN scale on cout
        wd.append((jnp.transpose(wk, (2, 3, 1, 0)) * s).reshape(9, cin, cout))
        biases.append(b)
    wd = jnp.concatenate(wd, axis=0)                          # (27, cin, cout)

    # branch 4: SPPPooling 1x1 conv + BN
    w4 = 0.1 * jax.random.normal(next(keys), (cout, cin, 1, 1))
    s, b = folded_bn(cout)
    w4 = w4[:, :, 0, 0].T * s[None, :]
    biases.append(b)

    # out_conv: Conv2d(5*cout, cout, 1, bias=False) + BN
    wo = 0.1 * jax.random.normal(next(keys), (cout, 5 * cout, 1, 1))
    s, b = folded_bn(cout)
    wout = (wo[:, :, 0, 0].T * s[None, :]).reshape(5, cout, cout)
    biases.append(b)

    bias = jnp.stack(biases)[:, None, :].astype(jnp.float32)  # (6, 1, cout)

    ref = {"w0": w0.astype(jnp.float32), "wd": wd.astype(jnp.float32),
           "w4": w4.astype(jnp.float32), "wout": wout.astype(jnp.float32),
           "b": bias}
    kern = {"w0": w0.astype(jnp.bfloat16), "wd": wd.astype(jnp.bfloat16),
            "w4": w4.astype(jnp.bfloat16), "wout": wout.astype(jnp.bfloat16),
            "b": bias}
    return kern, ref


# ----------------------------------------------------------------------------
# Pure-JAX f32 reference (im2col formulation) for the correctness check.
# ----------------------------------------------------------------------------
def reference_forward(x_nchw, p):
    n, cin, h, w = x_nchw.shape
    cout = cin // 2
    x = jnp.transpose(x_nchw, (0, 2, 3, 1)).astype(jnp.float32)
    rows = x.reshape(n * h * w, cin)
    outs = [jnp.maximum(rows @ p["w0"] + p["b"][0], 0.0)]
    for i, d in enumerate(DILATIONS):
        xp = jnp.pad(x, ((0, 0), (d, d), (d, d), (0, 0)))
        cols = jnp.concatenate(
            [xp[:, kh * d:kh * d + h, kw * d:kw * d + w, :]
             for kh in range(3) for kw in range(3)], axis=-1)
        wmat = p["wd"][i * 9:(i + 1) * 9].reshape(9 * cin, cout)
        outs.append(jnp.maximum(
            cols.reshape(n * h * w, 9 * cin) @ wmat + p["b"][1 + i], 0.0))
    pooled = jnp.mean(x, axis=(1, 2))                                  # (n, cin)
    o4 = jnp.maximum(pooled @ p["w4"] + p["b"][4], 0.0)                # (n, cout)
    outs.append(jnp.broadcast_to(o4[:, None, :], (n, h * w, cout))
                .reshape(n * h * w, cout))
    cat = jnp.concatenate(outs, axis=-1)
    out = jnp.maximum(cat @ p["wout"].reshape(5 * cout, cout) + p["b"][5], 0.0)
    return out.reshape(n, h, w, cout).transpose(0, 3, 1, 2)


if __name__ == "__main__":
    key = jax.random.PRNGKey(0)
    k_x, k_p = jax.random.split(key)

    N, C_IN, H, W = 2, 8, 16, 16
    x = jax.random.normal(k_x, (N, C_IN, H, W), dtype=jnp.float32)
    kparams, rparams = init_params(k_p, C_IN)

    y = spp_module_forward(x, kparams)
    y = jax.block_until_ready(y)

    assert y.shape == (N, C_IN // 2, H, W), y.shape
    assert bool(jnp.all(jnp.isfinite(y)))
    assert bool(jnp.all(y >= 0.0))            # final ReLU

    # Correctness vs. pure-JAX f32 reference (kernel uses bf16 MXU operands,
    # so allow a mixed-precision tolerance).
    y_ref = reference_forward(x, rparams)
    max_err = float(jnp.max(jnp.abs(y - y_ref)))
    tol = 5e-2 * (1.0 + float(jnp.max(jnp.abs(y_ref))))
    assert max_err < tol, (max_err, tol)

    print("KERNEL_OK")
</pallas_src>

<mosaic_0001>
module attributes {stable_mosaic.version = 11 : i64} {
  func.func @kernel(%arg0: i32, %arg1: memref<1x88x88x8xbf16, #tpu.memory_space<vmem>>, %arg2: memref<8x4xbf16, #tpu.memory_space<vmem>>, %arg3: memref<27x8x4xbf16, #tpu.memory_space<vmem>>, %arg4: memref<8x4xbf16, #tpu.memory_space<vmem>>, %arg5: memref<5x4x4xbf16, #tpu.memory_space<vmem>>, %arg6: memref<6x1x4xf32, #tpu.memory_space<vmem>>, %arg7: memref<1x256x4xf32, #tpu.memory_space<vmem>>) attributes {dimension_semantics = [#tpu.dimension_semantics<parallel>], iteration_bounds = array<i64: 2>, scalar_prefetch = 0 : i64, scratch_operands = 0 : i64, tpu.core_type = #tpu.core_type<tc>, window_params = [{transform_indices = @transform_0, window_bounds = array<i64: 1, 88, 88, 8>}, {pipeline_mode = #tpu.pipeline_mode<synchronous>, transform_indices = @transform_1, window_bounds = array<i64: 8, 4>}, {pipeline_mode = #tpu.pipeline_mode<synchronous>, transform_indices = @transform_2, window_bounds = array<i64: 27, 8, 4>}, {pipeline_mode = #tpu.pipeline_mode<synchronous>, transform_indices = @transform_3, window_bounds = array<i64: 8, 4>}, {pipeline_mode = #tpu.pipeline_mode<synchronous>, transform_indices = @transform_4, window_bounds = array<i64: 5, 4, 4>}, {pipeline_mode = #tpu.pipeline_mode<synchronous>, transform_indices = @transform_5, window_bounds = array<i64: 6, 1, 4>}, {transform_indices = @transform_6, window_bounds = array<i64: 1, 256, 4>}]} {
    %c0 = arith.constant 0 : index
    %c36 = arith.constant 36 : index
    %c36_0 = arith.constant 36 : index
    %c0_1 = arith.constant 0 : index
    %0 = vector.load %arg1[%c0, %c36, %c36_0, %c0_1] : memref<1x88x88x8xbf16, #tpu.memory_space<vmem>>, vector<1x16x16x8xbf16>
    %1 = vector.shape_cast %0 : vector<1x16x16x8xbf16> to vector<16x16x8xbf16>
    %2 = vector.shape_cast %1 : vector<16x16x8xbf16> to vector<256x8xbf16>
    %c0_2 = arith.constant 0 : index
    %c0_3 = arith.constant 0 : index
    %3 = vector.load %arg2[%c0_2, %c0_3] : memref<8x4xbf16, #tpu.memory_space<vmem>>, vector<8x4xbf16>
    %cst = arith.constant dense<0.000000e+00> : vector<256x4xf32>
    %4 = tpu.matmul %2, %3, %cst {dimension_numbers = #tpu.dot_dimension_numbers<[1], [0], [0], [1], [0, 0, 1, 1], [], []>} : vector<256x8xbf16>, vector<8x4xbf16>, vector<256x4xf32> -> vector<256x4xf32>
    %c0_4 = arith.constant 0 : index
    %c0_5 = arith.constant 0 : index
    %c0_6 = arith.constant 0 : index
    %5 = vector.load %arg6[%c0_4, %c0_5, %c0_6] : memref<6x1x4xf32, #tpu.memory_space<vmem>>, vector<1x1x4xf32>
    %6 = vector.shape_cast %5 : vector<1x1x4xf32> to vector<1x4xf32>
    %7 = vector.broadcast %6 : vector<1x4xf32> to vector<256x4xf32>
    %8 = arith.addf %4, %7 : vector<256x4xf32>
    %cst_7 = arith.constant 0.000000e+00 : f32
    %9 = vector.broadcast %cst_7 : f32 to vector<256x4xf32>
    %10 = arith.maximumf %8, %9 : vector<256x4xf32>
    %11 = arith.truncf %10 : vector<256x4xf32> to vector<256x4xbf16>
    %c0_8 = arith.constant 0 : index
    %c0_9 = arith.constant 0 : index
    %c0_10 = arith.constant 0 : index
    %12 = vector.load %arg5[%c0_8, %c0_9, %c0_10] : memref<5x4x4xbf16, #tpu.memory_space<vmem>>, vector<1x4x4xbf16>
    %13 = vector.shape_cast %12 : vector<1x4x4xbf16> to vector<4x4xbf16>
    %cst_11 = arith.constant dense<0.000000e+00> : vector<256x4xf32>
    %14 = tpu.matmul %11, %13, %cst_11 {dimension_numbers = #tpu.dot_dimension_numbers<[1], [0], [0], [1], [0, 0, 1, 1], [], []>} : vector<256x4xbf16>, vector<4x4xbf16>, vector<256x4xf32> -> vector<256x4xf32>
    %cst_12 = arith.constant 0.000000e+00 : f32
    %15 = vector.broadcast %cst_12 : f32 to vector<256x4xf32>
    %c0_13 = arith.constant 0 : index
    %c24 = arith.constant 24 : index
    %c24_14 = arith.constant 24 : index
    %c0_15 = arith.constant 0 : index
    %16 = vector.load %arg1[%c0_13, %c24, %c24_14, %c0_15] : memref<1x88x88x8xbf16, #tpu.memory_space<vmem>>, vector<1x16x16x8xbf16>
    %17 = vector.shape_cast %16 : vector<1x16x16x8xbf16> to vector<16x16x8xbf16>
    %18 = vector.shape_cast %17 : vector<16x16x8xbf16> to vector<256x8xbf16>
    %c0_16 = arith.constant 0 : index
    %c0_17 = arith.constant 0 : index
    %c0_18 = arith.constant 0 : index
    %19 = vector.load %arg3[%c0_16, %c0_17, %c0_18] : memref<27x8x4xbf16, #tpu.memory_space<vmem>>, vector<1x8x4xbf16>
    %20 = vector.shape_cast %19 : vector<1x8x4xbf16> to vector<8x4xbf16>
    %cst_19 = arith.constant dense<0.000000e+00> : vector<256x4xf32>
    %21 = tpu.matmul %18, %20, %cst_19 {dimension_numbers = #tpu.dot_dimension_numbers<[1], [0], [0], [1], [0, 0, 1, 1], [], []>} : vector<256x8xbf16>, vector<8x4xbf16>, vector<256x4xf32> -> vector<256x4xf32>
    %22 = arith.addf %15, %21 : vector<256x4xf32>
    %c0_20 = arith.constant 0 : index
    %c24_21 = arith.constant 24 : index
    %c36_22 = arith.constant 36 : index
    %c0_23 = arith.constant 0 : index
    %23 = vector.load %arg1[%c0_20, %c24_21, %c36_22, %c0_23] : memref<1x88x88x8xbf16, #tpu.memory_space<vmem>>, vector<1x16x16x8xbf16>
    %24 = vector.shape_cast %23 : vector<1x16x16x8xbf16> to vector<16x16x8xbf16>
    %25 = vector.shape_cast %24 : vector<16x16x8xbf16> to vector<256x8xbf16>
    %c1 = arith.constant 1 : index
    %c0_24 = arith.constant 0 : index
    %c0_25 = arith.constant 0 : index
    %26 = vector.load %arg3[%c1, %c0_24, %c0_25] : memref<27x8x4xbf16, #tpu.memory_space<vmem>>, vector<1x8x4xbf16>
    %27 = vector.shape_cast %26 : vector<1x8x4xbf16> to vector<8x4xbf16>
    %cst_26 = arith.constant dense<0.000000e+00> : vector<256x4xf32>
    %28 = tpu.matmul %25, %27, %cst_26 {dimension_numbers = #tpu.dot_dimension_numbers<[1], [0], [0], [1], [0, 0, 1, 1], [], []>} : vector<256x8xbf16>, vector<8x4xbf16>, vector<256x4xf32> -> vector<256x4xf32>
    %29 = arith.addf %22, %28 : vector<256x4xf32>
    %c0_27 = arith.constant 0 : index
    %c24_28 = arith.constant 24 : index
    %c48 = arith.constant 48 : index
    %c0_29 = arith.constant 0 : index
    %30 = vector.load %arg1[%c0_27, %c24_28, %c48, %c0_29] : memref<1x88x88x8xbf16, #tpu.memory_space<vmem>>, vector<1x16x16x8xbf16>
    %31 = vector.shape_cast %30 : vector<1x16x16x8xbf16> to vector<16x16x8xbf16>
    %32 = vector.shape_cast %31 : vector<16x16x8xbf16> to vector<256x8xbf16>
    %c2 = arith.constant 2 : index
    %c0_30 = arith.constant 0 : index
    %c0_31 = arith.constant 0 : index
    %33 = vector.load %arg3[%c2, %c0_30, %c0_31] : memref<27x8x4xbf16, #tpu.memory_space<vmem>>, vector<1x8x4xbf16>
    %34 = vector.shape_cast %33 : vector<1x8x4xbf16> to vector<8x4xbf16>
    %cst_32 = arith.constant dense<0.000000e+00> : vector<256x4xf32>
    %35 = tpu.matmul %32, %34, %cst_32 {dimension_numbers = #tpu.dot_dimension_numbers<[1], [0], [0], [1], [0, 0, 1, 1], [], []>} : vector<256x8xbf16>, vector<8x4xbf16>, vector<256x4xf32> -> vector<256x4xf32>
    %36 = arith.addf %29, %35 : vector<256x4xf32>
    %c0_33 = arith.constant 0 : index
    %c36_34 = arith.constant 36 : index
    %c24_35 = arith.constant 24 : index
    %c0_36 = arith.constant 0 : index
    %37 = vector.load %arg1[%c0_33, %c36_34, %c24_35, %c0_36] : memref<1x88x88x8xbf16, #tpu.memory_space<vmem>>, vector<1x16x16x8xbf16>
    %38 = vector.shape_cast %37 : vector<1x16x16x8xbf16> to vector<16x16x8xbf16>
    %39 = vector.shape_cast %38 : vector<16x16x8xbf16> to vector<256x8xbf16>
    %c3 = arith.constant 3 : index
    %c0_37 = arith.constant 0 : index
    %c0_38 = arith.constant 0 : index
    %40 = vector.load %arg3[%c3, %c0_37, %c0_38] : memref<27x8x4xbf16, #tpu.memory_space<vmem>>, vector<1x8x4xbf16>
    %41 = vector.shape_cast %40 : vector<1x8x4xbf16> to vector<8x4xbf16>
    %cst_39 = arith.constant dense<0.000000e+00> : vector<256x4xf32>
    %42 = tpu.matmul %39, %41, %cst_39 {dimension_numbers = #tpu.dot_dimension_numbers<[1], [0], [0], [1], [0, 0, 1, 1], [], []>} : vector<256x8xbf16>, vector<8x4xbf16>, vector<256x4xf32> -> vector<256x4xf32>
    %43 = arith.addf %36, %42 : vector<256x4xf32>
    %c0_40 = arith.constant 0 : index
    %c36_41 = arith.constant 36 : index
    %c36_42 = arith.constant 36 : index
    %c0_43 = arith.constant 0 : index
    %44 = vector.load %arg1[%c0_40, %c36_41, %c36_42, %c0_43] : memref<1x88x88x8xbf16, #tpu.memory_space<vmem>>, vector<1x16x16x8xbf16>
    %45 = vector.shape_cast %44 : vector<1x16x16x8xbf16> to vector<16x16x8xbf16>
    %46 = vector.shape_cast %45 : vector<16x16x8xbf16> to vector<256x8xbf16>
    %c4 = arith.constant 4 : index
    %c0_44 = arith.constant 0 : index
    %c0_45 = arith.constant 0 : index
    %47 = vector.load %arg3[%c4, %c0_44, %c0_45] : memref<27x8x4xbf16, #tpu.memory_space<vmem>>, vector<1x8x4xbf16>
    %48 = vector.shape_cast %47 : vector<1x8x4xbf16> to vector<8x4xbf16>
    %cst_46 = arith.constant dense<0.000000e+00> : vector<256x4xf32>
    %49 = tpu.matmul %46, %48, %cst_46 {dimension_numbers = #tpu.dot_dimension_numbers<[1], [0], [0], [1], [0, 0, 1, 1], [], []>} : vector<256x8xbf16>, vector<8x4xbf16>, vector<256x4xf32> -> vector<256x4xf32>
    %50 = arith.addf %43, %49 : vector<256x4xf32>
    %c0_47 = arith.constant 0 : index
    %c36_48 = arith.constant 36 : index
    %c48_49 = arith.constant 48 : index
    %c0_50 = arith.constant 0 : index
    %51 = vector.load %arg1[%c0_47, %c36_48, %c48_49, %c0_50] : memref<1x88x88x8xbf16, #tpu.memory_space<vmem>>, vector<1x16x16x8xbf16>
    %52 = vector.shape_cast %51 : vector<1x16x16x8xbf16> to vector<16x16x8xbf16>
    %53 = vector.shape_cast %52 : vector<16x16x8xbf16> to vector<256x8xbf16>
    %c5 = arith.constant 5 : index
    %c0_51 = arith.constant 0 : index
    %c0_52 = arith.constant 0 : index
    %54 = vector.load %arg3[%c5, %c0_51, %c0_52] : memref<27x8x4xbf16, #tpu.memory_space<vmem>>, vector<1x8x4xbf16>
    %55 = vector.shape_cast %54 : vector<1x8x4xbf16> to vector<8x4xbf16>
    %cst_53 = arith.constant dense<0.000000e+00> : vector<256x4xf32>
    %56 = tpu.matmul %53, %55, %cst_53 {dimension_numbers = #tpu.dot_dimension_numbers<[1], [0], [0], [1], [0, 0, 1, 1], [], []>} : vector<256x8xbf16>, vector<8x4xbf16>, vector<256x4xf32> -> vector<256x4xf32>
    %57 = arith.addf %50, %56 : vector<256x4xf32>
    %c0_54 = arith.constant 0 : index
    %c48_55 = arith.constant 48 : index
    %c24_56 = arith.constant 24 : index
    %c0_57 = arith.constant 0 : index
    %58 = vector.load %arg1[%c0_54, %c48_55, %c24_56, %c0_57] : memref<1x88x88x8xbf16, #tpu.memory_space<vmem>>, vector<1x16x16x8xbf16>
    %59 = vector.shape_cast %58 : vector<1x16x16x8xbf16> to vector<16x16x8xbf16>
    %60 = vector.shape_cast %59 : vector<16x16x8xbf16> to vector<256x8xbf16>
    %c6 = arith.constant 6 : index
    %c0_58 = arith.constant 0 : index
    %c0_59 = arith.constant 0 : index
    %61 = vector.load %arg3[%c6, %c0_58, %c0_59] : memref<27x8x4xbf16, #tpu.memory_space<vmem>>, vector<1x8x4xbf16>
    %62 = vector.shape_cast %61 : vector<1x8x4xbf16> to vector<8x4xbf16>
    %cst_60 = arith.constant dense<0.000000e+00> : vector<256x4xf32>
    %63 = tpu.matmul %60, %62, %cst_60 {dimension_numbers = #tpu.dot_dimension_numbers<[1], [0], [0], [1], [0, 0, 1, 1], [], []>} : vector<256x8xbf16>, vector<8x4xbf16>, vector<256x4xf32> -> vector<256x4xf32>
    %64 = arith.addf %57, %63 : vector<256x4xf32>
    %c0_61 = arith.constant 0 : index
    %c48_62 = arith.constant 48 : index
    %c36_63 = arith.constant 36 : index
    %c0_64 = arith.constant 0 : index
    %65 = vector.load %arg1[%c0_61, %c48_62, %c36_63, %c0_64] : memref<1x88x88x8xbf16, #tpu.memory_space<vmem>>, vector<1x16x16x8xbf16>
    %66 = vector.shape_cast %65 : vector<1x16x16x8xbf16> to vector<16x16x8xbf16>
    %67 = vector.shape_cast %66 : vector<16x16x8xbf16> to vector<256x8xbf16>
    %c7 = arith.constant 7 : index
    %c0_65 = arith.constant 0 : index
    %c0_66 = arith.constant 0 : index
    %68 = vector.load %arg3[%c7, %c0_65, %c0_66] : memref<27x8x4xbf16, #tpu.memory_space<vmem>>, vector<1x8x4xbf16>
    %69 = vector.shape_cast %68 : vector<1x8x4xbf16> to vector<8x4xbf16>
    %cst_67 = arith.constant dense<0.000000e+00> : vector<256x4xf32>
    %70 = tpu.matmul %67, %69, %cst_67 {dimension_numbers = #tpu.dot_dimension_numbers<[1], [0], [0], [1], [0, 0, 1, 1], [], []>} : vector<256x8xbf16>, vector<8x4xbf16>, vector<256x4xf32> -> vector<256x4xf32>
    %71 = arith.addf %64, %70 : vector<256x4xf32>
    %c0_68 = arith.constant 0 : index
    %c48_69 = arith.constant 48 : index
    %c48_70 = arith.constant 48 : index
    %c0_71 = arith.constant 0 : index
    %72 = vector.load %arg1[%c0_68, %c48_69, %c48_70, %c0_71] : memref<1x88x88x8xbf16, #tpu.memory_space<vmem>>, vector<1x16x16x8xbf16>
    %73 = vector.shape_cast %72 : vector<1x16x16x8xbf16> to vector<16x16x8xbf16>
    %74 = vector.shape_cast %73 : vector<16x16x8xbf16> to vector<256x8xbf16>
    %c8 = arith.constant 8 : index
    %c0_72 = arith.constant 0 : index
    %c0_73 = arith.constant 0 : index
    %75 = vector.load %arg3[%c8, %c0_72, %c0_73] : memref<27x8x4xbf16, #tpu.memory_space<vmem>>, vector<1x8x4xbf16>
    %76 = vector.shape_cast %75 : vector<1x8x4xbf16> to vector<8x4xbf16>
    %cst_74 = arith.constant dense<0.000000e+00> : vector<256x4xf32>
    %77 = tpu.matmul %74, %76, %cst_74 {dimension_numbers = #tpu.dot_dimension_numbers<[1], [0], [0], [1], [0, 0, 1, 1], [], []>} : vector<256x8xbf16>, vector<8x4xbf16>, vector<256x4xf32> -> vector<256x4xf32>
    %78 = arith.addf %71, %77 : vector<256x4xf32>
    %c1_75 = arith.constant 1 : index
    %c0_76 = arith.constant 0 : index
    %c0_77 = arith.constant 0 : index
    %79 = vector.load %arg6[%c1_75, %c0_76, %c0_77] : memref<6x1x4xf32, #tpu.memory_space<vmem>>, vector<1x1x4xf32>
    %80 = vector.shape_cast %79 : vector<1x1x4xf32> to vector<1x4xf32>
    %81 = vector.broadcast %80 : vector<1x4xf32> to vector<256x4xf32>
    %82 = arith.addf %78, %81 : vector<256x4xf32>
    %cst_78 = arith.constant 0.000000e+00 : f32
    %83 = vector.broadcast %cst_78 : f32 to vector<256x4xf32>
    %84 = arith.maximumf %82, %83 : vector<256x4xf32>
    %85 = arith.truncf %84 : vector<256x4xf32> to vector<256x4xbf16>
    %c1_79 = arith.constant 1 : index
    %c0_80 = arith.constant 0 : index
    %c0_81 = arith.constant 0 : index
    %86 = vector.load %arg5[%c1_79, %c0_80, %c0_81] : memref<5x4x4xbf16, #tpu.memory_space<vmem>>, vector<1x4x4xbf16>
    %87 = vector.shape_cast %86 : vector<1x4x4xbf16> to vector<4x4xbf16>
    %cst_82 = arith.constant dense<0.000000e+00> : vector<256x4xf32>
    %88 = tpu.matmul %85, %87, %cst_82 {dimension_numbers = #tpu.dot_dimension_numbers<[1], [0], [0], [1], [0, 0, 1, 1], [], []>} : vector<256x4xbf16>, vector<4x4xbf16>, vector<256x4xf32> -> vector<256x4xf32>
    %89 = arith.addf %14, %88 : vector<256x4xf32>
    %cst_83 = arith.constant 0.000000e+00 : f32
    %90 = vector.broadcast %cst_83 : f32 to vector<256x4xf32>
    %c0_84 = arith.constant 0 : index
    %c36_85 = arith.constant 36 : index
    %c36_86 = arith.constant 36 : index
    %c0_87 = arith.constant 0 : index
    %91 = vector.load %arg1[%c0_84, %c36_85, %c36_86, %c0_87] : memref<1x88x88x8xbf16, #tpu.memory_space<vmem>>, vector<1x16x16x8xbf16>
    %92 = vector.shape_cast %91 : vector<1x16x16x8xbf16> to vector<16x16x8xbf16>
    %93 = vector.shape_cast %92 : vector<16x16x8xbf16> to vector<256x8xbf16>
    %c13 = arith.constant 13 : index
    %c0_88 = arith.constant 0 : index
    %c0_89 = arith.constant 0 : index
    %94 = vector.load %arg3[%c13, %c0_88, %c0_89] : memref<27x8x4xbf16, #tpu.memory_space<vmem>>, vector<1x8x4xbf16>
    %95 = vector.shape_cast %94 : vector<1x8x4xbf16> to vector<8x4xbf16>
    %cst_90 = arith.constant dense<0.000000e+00> : vector<256x4xf32>
    %96 = tpu.matmul %93, %95, %cst_90 {dimension_numbers = #tpu.dot_dimension_numbers<[1], [0], [0], [1], [0, 0, 1, 1], [], []>} : vector<256x8xbf16>, vector<8x4xbf16>, vector<256x4xf32> -> vector<256x4xf32>
    %97 = arith.addf %90, %96 : vector<256x4xf32>
    %c2_91 = arith.constant 2 : index
    %c0_92 = arith.constant 0 : index
    %c0_93 = arith.constant 0 : index
    %98 = vector.load %arg6[%c2_91, %c0_92, %c0_93] : memref<6x1x4xf32, #tpu.memory_space<vmem>>, vector<1x1x4xf32>
    %99 = vector.shape_cast %98 : vector<1x1x4xf32> to vector<1x4xf32>
    %100 = vector.broadcast %99 : vector<1x4xf32> to vector<256x4xf32>
    %101 = arith.addf %97, %100 : vector<256x4xf32>
    %cst_94 = arith.constant 0.000000e+00 : f32
    %102 = vector.broadcast %cst_94 : f32 to vector<256x4xf32>
    %103 = arith.maximumf %101, %102 : vector<256x4xf32>
    %104 = arith.truncf %103 : vector<256x4xf32> to vector<256x4xbf16>
    %c2_95 = arith.constant 2 : index
    %c0_96 = arith.constant 0 : index
    %c0_97 = arith.constant 0 : index
    %105 = vector.load %arg5[%c2_95, %c0_96, %c0_97] : memref<5x4x4xbf16, #tpu.memory_space<vmem>>, vector<1x4x4xbf16>
    %106 = vector.shape_cast %105 : vector<1x4x4xbf16> to vector<4x4xbf16>
    %cst_98 = arith.constant dense<0.000000e+00> : vector<256x4xf32>
    %107 = tpu.matmul %104, %106, %cst_98 {dimension_numbers = #tpu.dot_dimension_numbers<[1], [0], [0], [1], [0, 0, 1, 1], [], []>} : vector<256x4xbf16>, vector<4x4xbf16>, vector<256x4xf32> -> vector<256x4xf32>
    %108 = arith.addf %89, %107 : vector<256x4xf32>
    %cst_99 = arith.constant 0.000000e+00 : f32
    %109 = vector.broadcast %cst_99 : f32 to vector<256x4xf32>
    %c0_100 = arith.constant 0 : index
    %c36_101 = arith.constant 36 : index
    %c36_102 = arith.constant 36 : index
    %c0_103 = arith.constant 0 : index
    %110 = vector.load %arg1[%c0_100, %c36_101, %c36_102, %c0_103] : memref<1x88x88x8xbf16, #tpu.memory_space<vmem>>, vector<1x16x16x8xbf16>
    %111 = vector.shape_cast %110 : vector<1x16x16x8xbf16> to vector<16x16x8xbf16>
    %112 = vector.shape_cast %111 : vector<16x16x8xbf16> to vector<256x8xbf16>
    %c22 = arith.constant 22 : index
    %c0_104 = arith.constant 0 : index
    %c0_105 = arith.constant 0 : index
    %113 = vector.load %arg3[%c22, %c0_104, %c0_105] : memref<27x8x4xbf16, #tpu.memory_space<vmem>>, vector<1x8x4xbf16>
    %114 = vector.shape_cast %113 : vector<1x8x4xbf16> to vector<8x4xbf16>
    %cst_106 = arith.constant dense<0.000000e+00> : vector<256x4xf32>
    %115 = tpu.matmul %112, %114, %cst_106 {dimension_numbers = #tpu.dot_dimension_numbers<[1], [0], [0], [1], [0, 0, 1, 1], [], []>} : vector<256x8xbf16>, vector<8x4xbf16>, vector<256x4xf32> -> vector<256x4xf32>
    %116 = arith.addf %109, %115 : vector<256x4xf32>
    %c3_107 = arith.constant 3 : index
    %c0_108 = arith.constant 0 : index
    %c0_109 = arith.constant 0 : index
    %117 = vector.load %arg6[%c3_107, %c0_108, %c0_109] : memref<6x1x4xf32, #tpu.memory_space<vmem>>, vector<1x1x4xf32>
    %118 = vector.shape_cast %117 : vector<1x1x4xf32> to vector<1x4xf32>
    %119 = vector.broadcast %118 : vector<1x4xf32> to vector<256x4xf32>
    %120 = arith.addf %116, %119 : vector<256x4xf32>
    %cst_110 = arith.constant 0.000000e+00 : f32
    %121 = vector.broadcast %cst_110 : f32 to vector<256x4xf32>
    %122 = arith.maximumf %120, %121 : vector<256x4xf32>
    %123 = arith.truncf %122 : vector<256x4xf32> to vector<256x4xbf16>
    %c3_111 = arith.constant 3 : index
    %c0_112 = arith.constant 0 : index
    %c0_113 = arith.constant 0 : index
    %124 = vector.load %arg5[%c3_111, %c0_112, %c0_113] : memref<5x4x4xbf16, #tpu.memory_space<vmem>>, vector<1x4x4xbf16>
    %125 = vector.shape_cast %124 : vector<1x4x4xbf16> to vector<4x4xbf16>
    %cst_114 = arith.constant dense<0.000000e+00> : vector<256x4xf32>
    %126 = tpu.matmul %123, %125, %cst_114 {dimension_numbers = #tpu.dot_dimension_numbers<[1], [0], [0], [1], [0, 0, 1, 1], [], []>} : vector<256x4xbf16>, vector<4x4xbf16>, vector<256x4xf32> -> vector<256x4xf32>
    %127 = arith.addf %108, %126 : vector<256x4xf32>
    %128 = arith.extf %2 : vector<256x8xbf16> to vector<256x8xf32>
    %cst_115 = arith.constant dense<0.000000e+00> : vector<8xf32>
    %129 = vector.multi_reduction <add>, %128, %cst_115 [0] : vector<256x8xf32> to vector<8xf32>
    %130 = vector.shape_cast %129 : vector<8xf32> to vector<1x8xf32>
    %cst_116 = arith.constant 2.560000e+02 : f32
    %131 = vector.broadcast %cst_116 : f32 to vector<1x8xf32>
    %132 = arith.divf %130, %131 : vector<1x8xf32>
    %c0_117 = arith.constant 0 : index
    %c0_118 = arith.constant 0 : index
    %133 = vector.load %arg4[%c0_117, %c0_118] : memref<8x4xbf16, #tpu.memory_space<vmem>>, vector<8x4xbf16>
    %134 = arith.extf %133 : vector<8x4xbf16> to vector<8x4xf32>
    %cst_119 = arith.constant dense<0.000000e+00> : vector<1x4xf32>
    %135 = tpu.matmul %132, %134, %cst_119 {dimension_numbers = #tpu.dot_dimension_numbers<[1], [0], [0], [1], [0, 0, 1, 1], [], []>} : vector<1x8xf32>, vector<8x4xf32>, vector<1x4xf32> -> vector<1x4xf32>
    %c4_120 = arith.constant 4 : index
    %c0_121 = arith.constant 0 : index
    %c0_122 = arith.constant 0 : index
    %136 = vector.load %arg6[%c4_120, %c0_121, %c0_122] : memref<6x1x4xf32, #tpu.memory_space<vmem>>, vector<1x1x4xf32>
    %137 = vector.shape_cast %136 : vector<1x1x4xf32> to vector<1x4xf32>
    %138 = arith.addf %135, %137 : vector<1x4xf32>
    %cst_123 = arith.constant 0.000000e+00 : f32
    %139 = vector.broadcast %cst_123 : f32 to vector<1x4xf32>
    %140 = arith.maximumf %138, %139 : vector<1x4xf32>
    %c4_124 = arith.constant 4 : index
    %c0_125 = arith.constant 0 : index
    %c0_126 = arith.constant 0 : index
    %141 = vector.load %arg5[%c4_124, %c0_125, %c0_126] : memref<5x4x4xbf16, #tpu.memory_space<vmem>>, vector<1x4x4xbf16>
    %142 = vector.shape_cast %141 : vector<1x4x4xbf16> to vector<4x4xbf16>
    %143 = arith.extf %142 : vector<4x4xbf16> to vector<4x4xf32>
    %cst_127 = arith.constant dense<0.000000e+00> : vector<1x4xf32>
    %144 = tpu.matmul %140, %143, %cst_127 {dimension_numbers = #tpu.dot_dimension_numbers<[1], [0], [0], [1], [0, 0, 1, 1], [], []>} : vector<1x4xf32>, vector<4x4xf32>, vector<1x4xf32> -> vector<1x4xf32>
    %145 = vector.broadcast %144 : vector<1x4xf32> to vector<256x4xf32>
    %146 = arith.addf %127, %145 : vector<256x4xf32>
    %c5_128 = arith.constant 5 : index
    %c0_129 = arith.constant 0 : index
    %c0_130 = arith.constant 0 : index
    %147 = vector.load %arg6[%c5_128, %c0_129, %c0_130] : memref<6x1x4xf32, #tpu.memory_space<vmem>>, vector<1x1x4xf32>
    %148 = vector.shape_cast %147 : vector<1x1x4xf32> to vector<1x4xf32>
    %149 = vector.broadcast %148 : vector<1x4xf32> to vector<256x4xf32>
    %150 = arith.addf %146, %149 : vector<256x4xf32>
    %cst_131 = arith.constant 0.000000e+00 : f32
    %151 = vector.broadcast %cst_131 : f32 to vector<256x4xf32>
    %152 = arith.maximumf %150, %151 : vector<256x4xf32>
    %c0_132 = arith.constant 0 : index
    %c0_133 = arith.constant 0 : index
    %c0_134 = arith.constant 0 : index
    %153 = vector.load %arg7[%c0_132, %c0_133, %c0_134] : memref<1x256x4xf32, #tpu.memory_space<vmem>>, vector<1x256x4xf32>
    %154 = vector.shape_cast %153 : vector<1x256x4xf32> to vector<256x4xf32>
    %155 = vector.shape_cast %152 : vector<256x4xf32> to vector<1x256x4xf32>
    tpu.vector_store %arg7[%c0_132, %c0_133, %c0_134], %155 {strides = array<i32>} : memref<1x256x4xf32, #tpu.memory_space<vmem>>, vector<1x256x4xf32>,
    return
  }
  func.func @transform_0(%arg0: i32) -> (i32, i32, i32, i32) {
    %c0_i32 = arith.constant 0 : i32
    %c0_i32_0 = arith.constant 0 : i32
    %c0_i32_1 = arith.constant 0 : i32
    %c0_i32_2 = arith.constant 0 : i32
    return %arg0, %c0_i32, %c0_i32_0, %c0_i32_1 : i32, i32, i32, i32
  }
  func.func @transform_1(%arg0: i32) -> (i32, i32) {
    %c0_i32 = arith.constant 0 : i32
    %c0_i32_0 = arith.constant 0 : i32
    %c0_i32_1 = arith.constant 0 : i32
    return %c0_i32, %c0_i32_0 : i32, i32
  }
  func.func @transform_2(%arg0: i32) -> (i32, i32, i32) {
    %c0_i32 = arith.constant 0 : i32
    %c0_i32_0 = arith.constant 0 : i32
    %c0_i32_1 = arith.constant 0 : i32
    %c0_i32_2 = arith.constant 0 : i32
    return %c0_i32, %c0_i32_0, %c0_i32_1 : i32, i32, i32
  }
  func.func @transform_3(%arg0: i32) -> (i32, i32) {
    %c0_i32 = arith.constant 0 : i32
    %c0_i32_0 = arith.constant 0 : i32
    %c0_i32_1 = arith.constant 0 : i32
    return %c0_i32, %c0_i32_0 : i32, i32
  }
  func.func @transform_4(%arg0: i32) -> (i32, i32, i32) {
    %c0_i32 = arith.constant 0 : i32
    %c0_i32_0 = arith.constant 0 : i32
    %c0_i32_1 = arith.constant 0 : i32
    %c0_i32_2 = arith.constant 0 : i32
    return %c0_i32, %c0_i32_0, %c0_i32_1 : i32, i32, i32
  }
  func.func @transform_5(%arg0: i32) -> (i32, i32, i32) {
    %c0_i32 = arith.constant 0 : i32
    %c0_i32_0 = arith.constant 0 : i32
    %c0_i32_1 = arith.constant 0 : i32
    %c0_i32_2 = arith.constant 0 : i32
    return %c0_i32, %c0_i32_0, %c0_i32_1 : i32, i32, i32
  }
  func.func @transform_6(%arg0: i32) -> (i32, i32, i32) {
    %c0_i32 = arith.constant 0 : i32
    %c0_i32_0 = arith.constant 0 : i32
    %c0_i32_1 = arith.constant 0 : i32
    return %arg0, %c0_i32, %c0_i32_0 : i32, i32, i32
  }
}

</mosaic_0001>

<llo_original>
// kernel: spp_module_forward.1
$region0: #{spp_module_forward.1}
  #allocation0 [shape = 'u32[]', space=smem, size = 0x4, offset = 0x4, fixed_abs, tag = 'smem constant byte address 0x4 - core index']
  #allocation1 [shape = 'u32[144,128]{1,0:T(1,128)}', space=vmem, size = 0x12000, scoped, tag = 'internal scratch']
  %s0 = inlined_call_operand.vmem [shape: bf16[2,88,88,8], index: 0, kind: input, shape index: {}]
  %s1 = inlined_call_operand.vmem [shape: bf16[8,4], index: 1, kind: input, shape index: {}]
  %s2 = inlined_call_operand.vmem [shape: bf16[27,8,4], index: 2, kind: input, shape index: {}]
  %s3 = inlined_call_operand.vmem [shape: bf16[8,4], index: 3, kind: input, shape index: {}]
  %s4 = inlined_call_operand.vmem [shape: bf16[5,4,4], index: 4, kind: input, shape index: {}]
  %s5 = inlined_call_operand.vmem [shape: f32[6,1,4], index: 5, kind: input, shape index: {}]
  %s6 = inlined_call_operand.vmem [shape: f32[2,256,4], index: 6, kind: output, shape index: {}]
  %s7 = sld [smem:[#allocation0]]
  $region57: #{spp_module_forward.1} parent=0
    _
  %s9 = ssub.s32 1, %s7
  %s10 = scalar_select 0, %s9, %s7
  loop: start=0, step=1, limit=4
  $region2: #{spp_module_forward.1} parent=0 // loop_pre_header
    _
  $region3: #{spp_module_forward.1} parent=0 // loop_header
    %s12 = sphi 0, %s16
    %p13 = scmp.ge.s32.totalorder %s12, 4
    %s22 = sphi 0, %s24
    %s25 = sphi 0, %s22
    %s26 = sphi 0, %s25
    %s42 = sphi 0, %s26
    %s46 = sphi 0, %s46
    %s48 = sphi 0, %s46
    %s49 = sphi 0, %s48
    %s63 = sphi 0, %s49
    %s67 = sphi 0, %s67
    %s69 = sphi 0, %s67
    %s70 = sphi 0, %s69
    %s84 = sphi 0, %s70
    %s88 = sphi 0, %s88
    %s90 = sphi 0, %s88
    %s91 = sphi 0, %s90
    %s105 = sphi 0, %s91
    %s109 = sphi 0, %s109
    %s111 = sphi 0, %s109
    %s112 = sphi 0, %s111
    %s126 = sphi 0, %s112
    %s130 = sphi 0, %s130
    %s132 = sphi 0, %s130
    %s133 = sphi 0, %s132
    %s147 = sphi 0, %s133
    %s153 = sphi 0, %s155
    %s156 = sphi 0, %s153
    %s157 = sphi 0, %s156
    %s173 = sphi 0, %s157
  $region4: #{spp_module_forward.1} parent=0 // loop_header_branch
    %15 = sbr.rel (%p13) target = $region8
  $region5: #{spp_module_forward.1} parent=0 // loop_body
    %s17 = ssub.s32 %s12, 1
    %s18 = ssub.s32 %s12, 2
    %s19 = sadd.s32 %s12, 1
    %s20 = ssub.s32 %s12, %s19
    %p21 = scmp.eq.s32.totalorder %s20, 0
    %s23 = sadd.s32 %s22, 1
    %s24 = scalar_select %p21, %s22, %s23
    %p27 = pneg %p21
    %p28 = scmp.eq.s32.totalorder %s12, 1
    %p29 = por %p27, %p28
    %p30 = scmp.ne.s32.totalorder %s22, %s25
    %p31 = scmp.eq.s32.totalorder %s12, 0
    %p32 = por %p30, %p31
    %p33 = scmp.ne.s32.totalorder %s22, %s25
    %p34 = scmp.eq.s32.totalorder %s17, 1
    %p35 = por %p33, %p34
    %p36 = scmp.ne.s32.totalorder %s25, %s26
    %p37 = scmp.eq.s32.totalorder %s17, 0
    %p38 = por %p36, %p37
    %p39 = scmp.ne.s32.totalorder %s25, %s26
    %p40 = scmp.eq.s32.totalorder %s18, 1
    %p41 = por %p39, %p40
    %p43 = scmp.ne.s32.totalorder %s26, %s42
    %p44 = scmp.eq.s32.totalorder %s18, 0
    %p45 = por %p43, %p44
    %s47 = sadd.s32 %s46, 1
    %p50 = scmp.eq.s32.totalorder %s12, 1
    %p51 = scmp.ne.s32.totalorder %s46, %s48
    %p52 = scmp.eq.s32.totalorder %s12, 0
    %p53 = por %p51, %p52
    %p54 = scmp.ne.s32.totalorder %s46, %s48
    %p55 = scmp.eq.s32.totalorder %s17, 1
    %p56 = por %p54, %p55
    %p57 = scmp.ne.s32.totalorder %s48, %s49
    %p58 = scmp.eq.s32.totalorder %s17, 0
    %p59 = por %p57, %p58
    %p60 = scmp.ne.s32.totalorder %s48, %s49
    %p61 = scmp.eq.s32.totalorder %s18, 1
    %p62 = por %p60, %p61
    %p64 = scmp.ne.s32.totalorder %s49, %s63
    %p65 = scmp.eq.s32.totalorder %s18, 0
    %p66 = por %p64, %p65
    %s68 = sadd.s32 %s67, 1
    %p71 = scmp.eq.s32.totalorder %s12, 1
    %p72 = scmp.ne.s32.totalorder %s67, %s69
    %p73 = scmp.eq.s32.totalorder %s12, 0
    %p74 = por %p72, %p73
    %p75 = scmp.ne.s32.totalorder %s67, %s69
    %p76 = scmp.eq.s32.totalorder %s17, 1
    %p77 = por %p75, %p76
    %p78 = scmp.ne.s32.totalorder %s69, %s70
    %p79 = scmp.eq.s32.totalorder %s17, 0
    %p80 = por %p78, %p79
    %p81 = scmp.ne.s32.totalorder %s69, %s70
    %p82 = scmp.eq.s32.totalorder %s18, 1
    %p83 = por %p81, %p82
    %p85 = scmp.ne.s32.totalorder %s70, %s84
    %p86 = scmp.eq.s32.totalorder %s18, 0
    %p87 = por %p85, %p86
    %s89 = sadd.s32 %s88, 1
    %p92 = scmp.eq.s32.totalorder %s12, 1
    %p93 = scmp.ne.s32.totalorder %s88, %s90
    %p94 = scmp.eq.s32.totalorder %s12, 0
    %p95 = por %p93, %p94
    %p96 = scmp.ne.s32.totalorder %s88, %s90
    %p97 = scmp.eq.s32.totalorder %s17, 1
    %p98 = por %p96, %p97
    %p99 = scmp.ne.s32.totalorder %s90, %s91
    %p100 = scmp.eq.s32.totalorder %s17, 0
    %p101 = por %p99, %p100
    %p102 = scmp.ne.s32.totalorder %s90, %s91
    %p103 = scmp.eq.s32.totalorder %s18, 1
    %p104 = por %p102, %p103
    %p106 = scmp.ne.s32.totalorder %s91, %s105
    %p107 = scmp.eq.s32.totalorder %s18, 0
    %p108 = por %p106, %p107
    %s110 = sadd.s32 %s109, 1
    %p113 = scmp.eq.s32.totalorder %s12, 1
    %p114 = scmp.ne.s32.totalorder %s109, %s111
    %p115 = scmp.eq.s32.totalorder %s12, 0
    %p116 = por %p114, %p115
    %p117 = scmp.ne.s32.totalorder %s109, %s111
    %p118 = scmp.eq.s32.totalorder %s17, 1
    %p119 = por %p117, %p118
    %p120 = scmp.ne.s32.totalorder %s111, %s112
    %p121 = scmp.eq.s32.totalorder %s17, 0
    %p122 = por %p120, %p121
    %p123 = scmp.ne.s32.totalorder %s111, %s112
    %p124 = scmp.eq.s32.totalorder %s18, 1
    %p125 = por %p123, %p124
    %p127 = scmp.ne.s32.totalorder %s112, %s126
    %p128 = scmp.eq.s32.totalorder %s18, 0
    %p129 = por %p127, %p128
    %s131 = sadd.s32 %s130, 1
    %p134 = scmp.eq.s32.totalorder %s12, 1
    %p135 = scmp.ne.s32.totalorder %s130, %s132
    %p136 = scmp.eq.s32.totalorder %s12, 0
    %p137 = por %p135, %p136
    %p138 = scmp.ne.s32.totalorder %s130, %s132
    %p139 = scmp.eq.s32.totalorder %s17, 1
    %p140 = por %p138, %p139
    %p141 = scmp.ne.s32.totalorder %s132, %s133
    %p142 = scmp.eq.s32.totalorder %s17, 0
    %p143 = por %p141, %p142
    %p144 = scmp.ne.s32.totalorder %s132, %s133
    %p145 = scmp.eq.s32.totalorder %s18, 1
    %p146 = por %p144, %p145
    %p148 = scmp.ne.s32.totalorder %s133, %s147
    %p149 = scmp.eq.s32.totalorder %s18, 0
    %p150 = por %p148, %p149
    %s151 = ssub.s32 %s12, %s19
    %p152 = scmp.eq.s32.totalorder %s151, 0
    %s154 = sadd.s32 %s153, 1
    %s155 = scalar_select %p152, %s153, %s154
    %p158 = pneg %p152
    %p159 = scmp.eq.s32.totalorder %s12, 1
    %p160 = por %p158, %p159
    %p161 = scmp.ne.s32.totalorder %s153, %s156
    %p162 = scmp.eq.s32.totalorder %s12, 0
    %p163 = por %p161, %p162
    %p164 = scmp.ne.s32.totalorder %s153, %s156
    %p165 = scmp.eq.s32.totalorder %s17, 1
    %p166 = por %p164, %p165
    %p167 = scmp.ne.s32.totalorder %s156, %s157
    %p168 = scmp.eq.s32.totalorder %s17, 0
    %p169 = por %p167, %p168
    %p170 = scmp.ne.s32.totalorder %s156, %s157
    %p171 = scmp.eq.s32.totalorder %s18, 1
    %p172 = por %p170, %p171
    %p174 = scmp.ne.s32.totalorder %s157, %s173
    %p175 = scmp.eq.s32.totalorder %s18, 0
    %p176 = por %p174, %p175
    %p177 = scmp.le.s32.totalorder 1, %s12
    %p178 = scmp.lt.s32.totalorder %s12, 3
    %p179 = pnand %p177, %p178
    %p180 = pneg %p179
    // Predicated region
    $region9: #{spp_module_forward.1} parent=5 // pred_check
      _
    $region10: #{spp_module_forward.1} parent=5 // pred_check_branch
      %182 = sbr.rel (%p179) target = $region12
    $region11: #{spp_module_forward.1} parent=5 // pred_region
      %s183 = ssub.s32 %s12, 1
      // Predicated region
      $region13: #{spp_module_forward.1} parent=11 // pred_check
        %p184 = pneg %p59
      $region14: #{spp_module_forward.1} parent=11 // pred_check_branch
        %186 = sbr.rel (%p184) target = $region16
      $region15: #{spp_module_forward.1} parent=11 // pred_region
        _
      $region16: #{spp_module_forward.1} parent=11 // pred_fallthru
        _
      // Predicated region
      $region17: #{spp_module_forward.1} parent=11 // pred_check
        %p187 = pneg %p80
      $region18: #{spp_module_forward.1} parent=11 // pred_check_branch
        %189 = sbr.rel (%p187) target = $region20
      $region19: #{spp_module_forward.1} parent=11 // pred_region
        _
      $region20: #{spp_module_forward.1} parent=11 // pred_fallthru
        _
      // Predicated region
      $region21: #{spp_module_forward.1} parent=11 // pred_check
        %p190 = pneg %p101
      $region22: #{spp_module_forward.1} parent=11 // pred_check_branch
        %192 = sbr.rel (%p190) target = $region24
      $region23: #{spp_module_forward.1} parent=11 // pred_region
        _
      $region24: #{spp_module_forward.1} parent=11 // pred_fallthru
        _
      // Predicated region
      $region25: #{spp_module_forward.1} parent=11 // pred_check
        %p193 = pneg %p122
      $region26: #{spp_module_forward.1} parent=11 // pred_check_branch
        %195 = sbr.rel (%p193) target = $region28
      $region27: #{spp_module_forward.1} parent=11 // pred_region
        _
      $region28: #{spp_module_forward.1} parent=11 // pred_fallthru
        _
      // Predicated region
      $region29: #{spp_module_forward.1} parent=11 // pred_check
        %p196 = pneg %p143
      $region30: #{spp_module_forward.1} parent=11 // pred_check_branch
        %198 = sbr.rel (%p196) target = $region32
      $region31: #{spp_module_forward.1} parent=11 // pred_region
        _
      $region32: #{spp_module_forward.1} parent=11 // pred_fallthru
        _
    $region12: #{spp_module_forward.1} parent=5 // pred_fallthru
      _
    %p199 = scmp.lt.s32.totalorder %s12, 2
    // Predicated region
    $region33: #{spp_module_forward.1} parent=5 // pred_check
      %p200 = pneg %p199
    $region34: #{spp_module_forward.1} parent=5 // pred_check_branch
      %202 = sbr.rel (%p200) target = $region36
    $region35: #{spp_module_forward.1} parent=5 // pred_region
      // Predicated region
      $region37: #{spp_module_forward.1} parent=35 // pred_check
        %p203 = pneg %p32
      $region38: #{spp_module_forward.1} parent=35 // pred_check_branch
        %205 = sbr.rel (%p203) target = $region40
      $region39: #{spp_module_forward.1} parent=35 // pred_region
        %p206 = scmp.lt.s32.totalorder %s12, 1
        %s207 = scalar_select %p206, %s12, 1
        %s208 = smul.addr %s207, 968
        %s209 = smul.addr %s208, 4
        %s210 = scalar_lea.vmem %s0, %s209
      $region40: #{spp_module_forward.1} parent=35 // pred_fallthru
        _
    $region36: #{spp_module_forward.1} parent=5 // pred_fallthru
      _
    %p211 = scmp.le.s32.totalorder 1, %s12
    %p212 = scmp.lt.s32.totalorder %s12, 3
    %p213 = pnand %p211, %p212
    %p214 = pneg %p213
    // Predicated region
    $region41: #{spp_module_forward.1} parent=5 // pred_check
      _
    $region42: #{spp_module_forward.1} parent=5 // pred_check_branch
      %216 = sbr.rel (%p213) target = $region44
    $region43: #{spp_module_forward.1} parent=5 // pred_region
      %s217 = ssub.s32 %s12, 1
      %p218 = scmp.lt.s32.totalorder %s17, 1
      %s219 = scalar_select %p218, %s17, 1
      %s220 = smul.addr %s219, 968
      %s221 = smul.addr %s220, 4
      %s222 = scalar_lea.vmem %s0, %s221
      %p223 = pneg %p38
      %p224 = pneg %p35
      %p225 = pneg %p59
      %p226 = pneg %p56
      %p227 = pneg %p80
      %p228 = pneg %p77
      %p229 = pneg %p101
      %p230 = pneg %p98
      %p231 = pneg %p122
      %p232 = pneg %p119
      %p233 = pneg %p143
      %p234 = pneg %p140
      %p235 = pneg %p169
      %p236 = pneg %p166
      %p237 = scmp.lt.s32.totalorder %s17, 1
      %s238 = scalar_select %p237, %s17, 1
      %s239 = smul.addr %s238, 32
      %s240 = smul.addr %s239, 8
      %s241 = scalar_lea.vmem %s6, %s240
      %p242 = scmp.lt.s32.totalorder %s17, 1
      %s243 = scalar_select %p242, %s17, 1
      %s244 = smul.addr %s243, 968
      %s245 = smul.addr %s244, 4
      %s246 = scalar_lea.vmem %s0, %s245
      %p247 = scmp.lt.s32.totalorder %s17, 1
      %s248 = scalar_select %p247, %s17, 1
      %s249 = smul.addr %s248, 32
      %s250 = smul.addr %s249, 8
      %s251 = scalar_lea.vmem %s6, %s250
      %s253 = scalar_lea.vmem %s246, 1584
      %v254 = vld [vmem:[%s253 + $0x10] sm:$0xc]
      %v255 = vld [vmem:[%s253 + $0x14] sm:$0xf]
      %v256 = vld [vmem:[%s253 + $0x18] sm:$0x3]
      %v257 = vld [vmem:[%s253 + $0x3c] sm:$0xc]
      %v258 = vld [vmem:[%s253 + $0x40] sm:$0xf]
      %v259 = vld [vmem:[%s253 + $0x44] sm:$0x3]
      %v260 = vld [vmem:[%s253 + $0x68] sm:$0xc]
      %v261 = vld [vmem:[%s253 + $0x6c] sm:$0xf]
      %v262 = vld [vmem:[%s253 + $0x70] sm:$0x3]
      %v263 = vld [vmem:[%s253 + $0x94] sm:$0xc]
      %v264 = vld [vmem:[%s253 + $0x98] sm:$0xf]
      %v265 = vld [vmem:[%s253 + $0x9c] sm:$0x3]
      %v266 = vld [vmem:[%s253 + $0xc0] sm:$0xc]
      %v267 = vld [vmem:[%s253 + $0xc4] sm:$0xf]
      %v268 = vld [vmem:[%s253 + $0xc8] sm:$0x3]
      %v269 = vld [vmem:[%s253 + $0xec] sm:$0xc]
      %v270 = vld [vmem:[%s253 + $0xf0] sm:$0xf]
      %v271 = vld [vmem:[%s253 + $0xf4] sm:$0x3]
      %v272 = vld [vmem:[%s253 + $0x118] sm:$0xc]
      %v273 = vld [vmem:[%s253 + $0x11c] sm:$0xf]
      %v274 = vld [vmem:[%s253 + $0x120] sm:$0x3]
      %v275 = vld [vmem:[%s253 + $0x144] sm:$0xc]
      %v276 = vld [vmem:[%s253 + $0x148] sm:$0xf]
      %v277 = vld [vmem:[%s253 + $0x14c] sm:$0x3]
      %v278 = vld [vmem:[%s253 + $0x170] sm:$0xc]
      %v279 = vld [vmem:[%s253 + $0x174] sm:$0xf]
      %v280 = vld [vmem:[%s253 + $0x178] sm:$0x3]
      %v281 = vld [vmem:[%s253 + $0x19c] sm:$0xc]
      %v282 = vld [vmem:[%s253 + $0x1a0] sm:$0xf]
      %v283 = vld [vmem:[%s253 + $0x1a4] sm:$0x3]
      %v284 = vld [vmem:[%s253 + $0x1c8] sm:$0xc]
      %v285 = vld [vmem:[%s253 + $0x1cc] sm:$0xf]
      %v286 = vld [vmem:[%s253 + $0x1d0] sm:$0x3]
      %v287 = vld [vmem:[%s253 + $0x1f4] sm:$0xc]
      %v288 = vld [vmem:[%s253 + $0x1f8] sm:$0xf]
      %v289 = vld [vmem:[%s253 + $0x1fc] sm:$0x3]
      %v290 = vld [vmem:[%s253 + $0x220] sm:$0xc]
      %v291 = vld [vmem:[%s253 + $0x224] sm:$0xf]
      %v292 = vld [vmem:[%s253 + $0x228] sm:$0x3]
      %v293 = vld [vmem:[%s253 + $0x24c] sm:$0xc]
      %v294 = vld [vmem:[%s253 + $0x250] sm:$0xf]
      %v295 = vld [vmem:[%s253 + $0x254] sm:$0x3]
      %v296 = vld [vmem:[%s253 + $0x278] sm:$0xc]
      %v297 = vld [vmem:[%s253 + $0x27c] sm:$0xf]
      %v298 = vld [vmem:[%s253 + $0x280] sm:$0x3]
      %v299 = vld [vmem:[%s253 + $0x2a4] sm:$0xc]
      %v300 = vld [vmem:[%s253 + $0x2a8] sm:$0xf]
      %v301 = vld [vmem:[%s253 + $0x2ac] sm:$0x3]
      %vm350 = vcmask 1041408
      %vm351 = vcmask 1045508
      %vm352 = vmor %vm350, %vm351
      %v353 = vrot.slane %v254, 6
      %v354 = vrot.slane %v353, 4
      %v355 = vrot.slane %v255, 6
      %v356 = vsel %vm352, %v354, %v355
      %v357 = vrot.slane %v355, 4
      %v358 = vrot.slane %v256, 6
      %v359 = vsel %vm352, %v357, %v358
      %v360 = vrot.slane %v257, 6
      %v361 = vrot.slane %v360, 4
      %v362 = vrot.slane %v258, 6
      %v363 = vsel %vm352, %v361, %v362
      %v364 = vrot.slane %v362, 4
      %v365 = vrot.slane %v259, 6
      %v366 = vsel %vm352, %v364, %v365
      %v367 = vrot.slane %v260, 6
      %v368 = vrot.slane %v367, 4
      %v369 = vrot.slane %v261, 6
      %v370 = vsel %vm352, %v368, %v369
      %v371 = vrot.slane %v369, 4
      %v372 = vrot.slane %v262, 6
      %v373 = vsel %vm352, %v371, %v372
      %v374 = vrot.slane %v263, 6
      %v375 = vrot.slane %v374, 4
      %v376 = vrot.slane %v264, 6
      %v377 = vsel %vm352, %v375, %v376
      %v378 = vrot.slane %v376, 4
      %v379 = vrot.slane %v265, 6
      %v380 = vsel %vm352, %v378, %v379
      %v381 = vrot.slane %v266, 6
      %v382 = vrot.slane %v381, 4
      %v383 = vrot.slane %v267, 6
      %v384 = vsel %vm352, %v382, %v383
      %v385 = vrot.slane %v383, 4
      %v386 = vrot.slane %v268, 6
      %v387 = vsel %vm352, %v385, %v386
      %v388 = vrot.slane %v269, 6
      %v389 = vrot.slane %v388, 4
      %v390 = vrot.slane %v270, 6
      %v391 = vsel %vm352, %v389, %v390
      %v392 = vrot.slane %v390, 4
      %v393 = vrot.slane %v271, 6
      %v394 = vsel %vm352, %v392, %v393
      %v395 = vrot.slane %v272, 6
      %v396 = vrot.slane %v395, 4
      %v397 = vrot.slane %v273, 6
      %v398 = vsel %vm352, %v396, %v397
      %v399 = vrot.slane %v397, 4
      %v400 = vrot.slane %v274, 6
      %v401 = vsel %vm352, %v399, %v400
      %v402 = vrot.slane %v275, 6
      %v403 = vrot.slane %v402, 4
      %v404 = vrot.slane %v276, 6
      %v405 = vsel %vm352, %v403, %v404
      %v406 = vrot.slane %v404, 4
      %v407 = vrot.slane %v277, 6
      %v408 = vsel %vm352, %v406, %v407
      %v409 = vrot.slane %v278, 6
      %v410 = vrot.slane %v409, 4
      %v411 = vrot.slane %v279, 6
      %v412 = vsel %vm352, %v410, %v411
      %v413 = vrot.slane %v411, 4
      %v414 = vrot.slane %v280, 6
      %v415 = vsel %vm352, %v413, %v414
      %v416 = vrot.slane %v281, 6
      %v417 = vrot.slane %v416, 4
      %v418 = vrot.slane %v282, 6
      %v419 = vsel %vm352, %v417, %v418
      %v420 = vrot.slane %v418, 4
      %v421 = vrot.slane %v283, 6
      %v422 = vsel %vm352, %v420, %v421
      %v423 = vrot.slane %v284, 6
      %v424 = vrot.slane %v423, 4
      %v425 = vrot.slane %v285, 6
      %v426 = vsel %vm352, %v424, %v425
      %v427 = vrot.slane %v425, 4
      %v428 = vrot.slane %v286, 6
      %v429 = vsel %vm352, %v427, %v428
      %v430 = vrot.slane %v287, 6
      %v431 = vrot.slane %v430, 4
      %v432 = vrot.slane %v288, 6
      %v433 = vsel %vm352, %v431, %v432
      %v434 = vrot.slane %v432, 4
      %v435 = vrot.slane %v289, 6
      %v436 = vsel %vm352, %v434, %v435
      %v437 = vrot.slane %v290, 6
      %v438 = vrot.slane %v437, 4
      %v439 = vrot.slane %v291, 6
      %v440 = vsel %vm352, %v438, %v439
      %v441 = vrot.slane %v439, 4
      %v442 = vrot.slane %v292, 6
      %v443 = vsel %vm352, %v441, %v442
      %v444 = vrot.slane %v293, 6
      %v445 = vrot.slane %v444, 4
      %v446 = vrot.slane %v294, 6
      %v447 = vsel %vm352, %v445, %v446
      %v448 = vrot.slane %v446, 4
      %v449 = vrot.slane %v295, 6
      %v450 = vsel %vm352, %v448, %v449
      %v451 = vrot.slane %v296, 6
      %v452 = vrot.slane %v451, 4
      %v453 = vrot.slane %v297, 6
      %v454 = vsel %vm352, %v452, %v453
      %v455 = vrot.slane %v453, 4
      %v456 = vrot.slane %v298, 6
      %v457 = vsel %vm352, %v455, %v456
      %v458 = vrot.slane %v299, 6
      %v459 = vrot.slane %v458, 4
      %v460 = vrot.slane %v300, 6
      %v461 = vsel %vm352, %v459, %v460
      %v462 = vrot.slane %v460, 4
      %v463 = vrot.slane %v301, 6
      %v464 = vsel %vm352, %v462, %v463
      %v497 = vld [vmem:[%s1] sm:$0xf]
      %v498 = vld [vmem:[%s5] sm:$0x1]
      %v500 = vlaneseq
      %v501 = vshrl.u32 %v500, 7
      %v502 = vsub.s32 0, %v501
      %v503 = vrot.slane %v498, %v502
      %v505 = vunpack.c.l.b16 %v356
      %v506 = vunpack.c.l.b16 %v359
      %v507 = vunpack.c.l.b16 %v363
      %v508 = vunpack.c.l.b16 %v366
      %v509 = vunpack.c.l.b16 %v370
      %v510 = vunpack.c.l.b16 %v373
      %v511 = vunpack.c.l.b16 %v377
      %v512 = vunpack.c.l.b16 %v380
      %v513 = vunpack.c.l.b16 %v384
      %v514 = vunpack.c.l.b16 %v387
      %v515 = vunpack.c.l.b16 %v391
      %v516 = vunpack.c.l.b16 %v394
      %v517 = vunpack.c.l.b16 %v398
      %v518 = vunpack.c.l.b16 %v401
      %v519 = vunpack.c.l.b16 %v405
      %v520 = vunpack.c.l.b16 %v408
      %v521 = vunpack.c.l.b16 %v412
      %v522 = vunpack.c.l.b16 %v415
      %v523 = vunpack.c.l.b16 %v419
      %v524 = vunpack.c.l.b16 %v422
      %v525 = vunpack.c.l.b16 %v426
      %v526 = vunpack.c.l.b16 %v429
      %v527 = vunpack.c.l.b16 %v433
      %v528 = vunpack.c.l.b16 %v436
      %v529 = vunpack.c.l.b16 %v440
      %v530 = vunpack.c.l.b16 %v443
      %v531 = vunpack.c.l.b16 %v447
      %v532 = vunpack.c.l.b16 %v450
      %v533 = vunpack.c.l.b16 %v454
      %v534 = vunpack.c.l.b16 %v457
      %v535 = vunpack.c.l.b16 %v461
      %v536 = vunpack.c.l.b16 %v464
      %v537 = vpack.c.b16 %v506, %v505
      %v538 = vpack.c.b16 %v508, %v507
      %v539 = vpack.c.b16 %v510, %v509
      %v540 = vpack.c.b16 %v512, %v511
      %v541 = vpack.c.b16 %v514, %v513
      %v542 = vpack.c.b16 %v516, %v515
      %v543 = vpack.c.b16 %v518, %v517
      %v544 = vpack.c.b16 %v520, %v519
      %v545 = vpack.c.b16 %v522, %v521
      %v546 = vpack.c.b16 %v524, %v523
      %v547 = vpack.c.b16 %v526, %v525
      %v548 = vpack.c.b16 %v528, %v527
      %v549 = vpack.c.b16 %v530, %v529
      %v550 = vpack.c.b16 %v532, %v531
      %v551 = vpack.c.b16 %v534, %v533
      %v552 = vpack.c.b16 %v536, %v535
      %vm553 = vcmask 64512
      %v555 = vsel %vm553, %v537, 0
      %v558 = vsel %vm553, %v538, 0
      %v561 = vsel %vm553, %v539, 0
      %v564 = vsel %vm553, %v540, 0
      %v567 = vsel %vm553, %v541, 0
      %v570 = vsel %vm553, %v542, 0
      %v573 = vsel %vm553, %v543, 0
      %v576 = vsel %vm553, %v544, 0
      %v579 = vsel %vm553, %v545, 0
      %v582 = vsel %vm553, %v546, 0
      %v585 = vsel %vm553, %v547, 0
      %v588 = vsel %vm553, %v548, 0
      %v591 = vsel %vm553, %v549, 0
      %v594 = vsel %vm553, %v550, 0
      %v597 = vsel %vm553, %v551, 0
      %v600 = vsel %vm553, %v552, 0
      %vm602 = vcmask 1043456
      %v604 = vsel %vm602, %v497, 0
      %606 = vmatprep.subr.bf16.mxu0 0
      %607 = vmatpush1.bf16.msra.mxu0 0
      %608 = vmatprep.subr.bf16.mxu0 0
      %609 = vmatpush1.bf16.msra.mxu0 0
      %610 = vmatprep.subr.bf16.mxu0 0
      %611 = vmatpush1.bf16.msra.mxu0 0
      %612 = vmatprep.subr.bf16.mxu0 0
      %613 = vmatpush1.bf16.msra.mxu0 0
      %614 = vmatprep.subr.bf16.mxu0 0
      %615 = vmatpush1.bf16.msra.mxu0 0
      %616 = vmatprep.subr.bf16.mxu0 0
      %617 = vmatpush1.bf16.msra.mxu0 0
      %618 = vmatprep.subr.bf16.mxu0 0
      %619 = vmatpush1.bf16.msra.mxu0 0
      %620 = vmatprep.subr.bf16.mxu0 0
      %621 = vmatpush1.bf16.msra.mxu0 %v604
      %622 = vmatprep.subr.bf16.mxu0 0
      %623 = vmatpush2.bf16.msra.mxu0 0
      %624 = vmatprep.subr.bf16.mxu0 0
      %625 = vmatpush2.bf16.msra.mxu0 0
      %626 = vmatprep.subr.bf16.mxu0 0
      %627 = vmatpush2.bf16.msra.mxu0 0
      %628 = vmatprep.subr.bf16.mxu0 0
      %629 = vmatpush2.bf16.msra.mxu0 0
      %630 = vmatprep.subr.bf16.mxu0 0
      %631 = vmatpush2.bf16.msra.mxu0 0
      %632 = vmatprep.subr.bf16.mxu0 0
      %633 = vmatpush2.bf16.msra.mxu0 0
      %634 = vmatprep.subr.bf16.mxu0 0
      %635 = vmatpush2.bf16.msra.mxu0 0
      %636 = vmatprep.subr.bf16.mxu0 0
      %637 = vmatpush2.bf16.msra.mxu0 0
      %638 = vmatprep.mubr.bf16.mxu0 0
      %639 = vmatmul.mubr.bf16.gmra.mxu0 %v555
      %v640 = vpop.f32.mrf.mxu0
      %v641 = vadd.f32 %v503, %v640
      %v642 = vpop.f32.mrf.mxu0
      %v643 = vpop.f32.mrf.mxu0
      %v644 = vadd.f32 %v503, %v643
      %v645 = vpop.f32.mrf.mxu0
      %646 = vmatprep.mubr.bf16.mxu0 0
      %647 = vmatmul.mubr.bf16.gmra.mxu0 %v558
      %v648 = vpop.f32.mrf.mxu0
      %v649 = vadd.f32 %v503, %v648
      %v650 = vpop.f32.mrf.mxu0
      %v651 = vpop.f32.mrf.mxu0
      %v652 = vadd.f32 %v503, %v651
      %v653 = vpop.f32.mrf.mxu0
      %654 = vmatprep.mubr.bf16.mxu0 0
      %655 = vmatmul.mubr.bf16.gmra.mxu0 %v561
      %v656 = vpop.f32.mrf.mxu0
      %v657 = vadd.f32 %v503, %v656
      %v658 = vpop.f32.mrf.mxu0
      %v659 = vpop.f32.mrf.mxu0
      %v660 = vadd.f32 %v503, %v659
      %v661 = vpop.f32.mrf.mxu0
      %662 = vmatprep.mubr.bf16.mxu0 0
      %663 = vmatmul.mubr.bf16.gmra.mxu0 %v564
      %v664 = vpop.f32.mrf.mxu0
      %v665 = vadd.f32 %v503, %v664
      %v666 = vpop.f32.mrf.mxu0
      %v667 = vpop.f32.mrf.mxu0
      %v668 = vadd.f32 %v503, %v667
      %v669 = vpop.f32.mrf.mxu0
      %670 = vmatprep.mubr.bf16.mxu0 0
      %671 = vmatmul.mubr.bf16.gmra.mxu0 %v567
      %v672 = vpop.f32.mrf.mxu0
      %v673 = vadd.f32 %v503, %v672
      %v674 = vpop.f32.mrf.mxu0
      %v675 = vpop.f32.mrf.mxu0
      %v676 = vadd.f32 %v503, %v675
      %v677 = vpop.f32.mrf.mxu0
      %678 = vmatprep.mubr.bf16.mxu0 0
      %679 = vmatmul.mubr.bf16.gmra.mxu0 %v570
      %v680 = vpop.f32.mrf.mxu0
      %v681 = vadd.f32 %v503, %v680
      %v682 = vpop.f32.mrf.mxu0
      %v683 = vpop.f32.mrf.mxu0
      %v684 = vadd.f32 %v503, %v683
      %v685 = vpop.f32.mrf.mxu0
      %686 = vmatprep.mubr.bf16.mxu0 0
      %687 = vmatmul.mubr.bf16.gmra.mxu0 %v573
      %v688 = vpop.f32.mrf.mxu0
      %v689 = vadd.f32 %v503, %v688
      %v690 = vpop.f32.mrf.mxu0
      %v691 = vpop.f32.mrf.mxu0
      %v692 = vadd.f32 %v503, %v691
      %v693 = vpop.f32.mrf.mxu0
      %694 = vmatprep.mubr.bf16.mxu0 0
      %695 = vmatmul.mubr.bf16.gmra.mxu0 %v576
      %v696 = vpop.f32.mrf.mxu0
      %v697 = vadd.f32 %v503, %v696
      %v698 = vpop.f32.mrf.mxu0
      %v699 = vpop.f32.mrf.mxu0
      %v700 = vadd.f32 %v503, %v699
      %v701 = vpop.f32.mrf.mxu0
      %702 = vmatprep.mubr.bf16.mxu0 0
      %703 = vmatmul.mubr.bf16.gmra.mxu0 %v579
      %v704 = vpop.f32.mrf.mxu0
      %v705 = vadd.f32 %v503, %v704
      %v706 = vpop.f32.mrf.mxu0
      %v707 = vpop.f32.mrf.mxu0
      %v708 = vadd.f32 %v503, %v707
      %v709 = vpop.f32.mrf.mxu0
      %710 = vmatprep.mubr.bf16.mxu0 0
      %711 = vmatmul.mubr.bf16.gmra.mxu0 %v582
      %v712 = vpop.f32.mrf.mxu0
      %v713 = vadd.f32 %v503, %v712
      %v714 = vpop.f32.mrf.mxu0
      %v715 = vpop.f32.mrf.mxu0
      %v716 = vadd.f32 %v503, %v715
      %v717 = vpop.f32.mrf.mxu0
      %718 = vmatprep.mubr.bf16.mxu0 0
      %719 = vmatmul.mubr.bf16.gmra.mxu0 %v585
      %v720 = vpop.f32.mrf.mxu0
      %v721 = vadd.f32 %v503, %v720
      %v722 = vpop.f32.mrf.mxu0
      %v723 = vpop.f32.mrf.mxu0
      %v724 = vadd.f32 %v503, %v723
      %v725 = vpop.f32.mrf.mxu0
      %726 = vmatprep.mubr.bf16.mxu0 0
      %727 = vmatmul.mubr.bf16.gmra.mxu0 %v588
      %v728 = vpop.f32.mrf.mxu0
      %v729 = vadd.f32 %v503, %v728
      %v730 = vpop.f32.mrf.mxu0
      %v731 = vpop.f32.mrf.mxu0
      %v732 = vadd.f32 %v503, %v731
      %v733 = vpop.f32.mrf.mxu0
      %734 = vmatprep.mubr.bf16.mxu0 0
      %735 = vmatmul.mubr.bf16.gmra.mxu0 %v591
      %v736 = vpop.f32.mrf.mxu0
      %v737 = vadd.f32 %v503, %v736
      %v738 = vpop.f32.mrf.mxu0
      %v739 = vpop.f32.mrf.mxu0
      %v740 = vadd.f32 %v503, %v739
      %v741 = vpop.f32.mrf.mxu0
      %742 = vmatprep.mubr.bf16.mxu0 0
      %743 = vmatmul.mubr.bf16.gmra.mxu0 %v594
      %v744 = vpop.f32.mrf.mxu0
      %v745 = vadd.f32 %v503, %v744
      %v746 = vpop.f32.mrf.mxu0
      %v747 = vpop.f32.mrf.mxu0
      %v748 = vadd.f32 %v503, %v747
      %v749 = vpop.f32.mrf.mxu0
      %750 = vmatprep.mubr.bf16.mxu0 0
      %751 = vmatmul.mubr.bf16.gmra.mxu0 %v597
      %v752 = vpop.f32.mrf.mxu0
      %v753 = vadd.f32 %v503, %v752
      %v754 = vpop.f32.mrf.mxu0
      %v755 = vpop.f32.mrf.mxu0
      %v756 = vadd.f32 %v503, %v755
      %v757 = vpop.f32.mrf.mxu0
      %758 = vmatprep.mubr.bf16.mxu0 0
      %759 = vmatmul.mubr.bf16.gmra.mxu0 %v600
      %v760 = vpop.f32.mrf.mxu0
      %v761 = vadd.f32 %v503, %v760
      %v762 = vpop.f32.mrf.mxu0
      %v763 = vpop.f32.mrf.mxu0
      %v764 = vadd.f32 %v503, %v763
      %v765 = vpop.f32.mrf.mxu0
      %766 = vdwg.mxu0
      %v767 = vmax.f32 %v641, 0.0
      %v768 = vmax.f32 %v644, 0.0
      %v769 = vmax.f32 %v649, 0.0
      %v770 = vmax.f32 %v652, 0.0
      %v771 = vmax.f32 %v657, 0.0
      %v772 = vmax.f32 %v660, 0.0
      %v773 = vmax.f32 %v665, 0.0
      %v774 = vmax.f32 %v668, 0.0
      %v775 = vmax.f32 %v673, 0.0
      %v776 = vmax.f32 %v676, 0.0
      %v777 = vmax.f32 %v681, 0.0
      %v778 = vmax.f32 %v684, 0.0
      %v779 = vmax.f32 %v689, 0.0
      %v780 = vmax.f32 %v692, 0.0
      %v781 = vmax.f32 %v697, 0.0
      %v782 = vmax.f32 %v700, 0.0
      %v783 = vmax.f32 %v705, 0.0
      %v784 = vmax.f32 %v708, 0.0
      %v785 = vmax.f32 %v713, 0.0
      %v786 = vmax.f32 %v716, 0.0
      %v787 = vmax.f32 %v721, 0.0
      %v788 = vmax.f32 %v724, 0.0
      %v789 = vmax.f32 %v729, 0.0
      %v790 = vmax.f32 %v732, 0.0
      %v791 = vmax.f32 %v737, 0.0
      %v792 = vmax.f32 %v740, 0.0
      %v793 = vmax.f32 %v745, 0.0
      %v794 = vmax.f32 %v748, 0.0
      %v795 = vmax.f32 %v753, 0.0
      %v796 = vmax.f32 %v756, 0.0
      %v797 = vmax.f32 %v761, 0.0
      %v798 = vmax.f32 %v764, 0.0
      %v799 = vpack.c.bf16 %v768, %v767
      %v800 = vpack.c.bf16 %v770, %v769
      %v801 = vpack.c.bf16 %v772, %v771
      %v802 = vpack.c.bf16 %v774, %v773
      %v803 = vpack.c.bf16 %v776, %v775
      %v804 = vpack.c.bf16 %v778, %v777
      %v805 = vpack.c.bf16 %v780, %v779
      %v806 = vpack.c.bf16 %v782, %v781
      %v807 = vpack.c.bf16 %v784, %v783
      %v808 = vpack.c.bf16 %v786, %v785
      %v809 = vpack.c.bf16 %v788, %v787
      %v810 = vpack.c.bf16 %v790, %v789
      %v811 = vpack.c.bf16 %v792, %v791
      %v812 = vpack.c.bf16 %v794, %v793
      %v813 = vpack.c.bf16 %v796, %v795
      %v814 = vpack.c.bf16 %v798, %v797
      %v815 = vld [vmem:[%s4] sm:$0x3]
      %s816 = scalar_lea.vmem %s246, 1056
      %v817 = vld [vmem:[%s816 + $0xc] sm:$0xf]
      %v818 = vld [vmem:[%s816 + $0x10] sm:$0xf]
      %v819 = vld [vmem:[%s816 + $0x38] sm:$0xf]
      %v820 = vld [vmem:[%s816 + $0x3c] sm:$0xf]
      %v821 = vld [vmem:[%s816 + $0x64] sm:$0xf]
      %v822 = vld [vmem:[%s816 + $0x68] sm:$0xf]
      %v823 = vld [vmem:[%s816 + $0x90] sm:$0xf]
      %v824 = vld [vmem:[%s816 + $0x94] sm:$0xf]
      %v825 = vld [vmem:[%s816 + $0xbc] sm:$0xf]
      %v826 = vld [vmem:[%s816 + $0xc0] sm:$0xf]
      %v827 = vld [vmem:[%s816 + $0xe8] sm:$0xf]
      %v828 = vld [vmem:[%s816 + $0xec] sm:$0xf]
      %v829 = vld [vmem:[%s816 + $0x114] sm:$0xf]
      %v830 = vld [vmem:[%s816 + $0x118] sm:$0xf]
      %v831 = vld [vmem:[%s816 + $0x140] sm:$0xf]
      %v832 = vld [vmem:[%s816 + $0x144] sm:$0xf]
      %v833 = vld [vmem:[%s816 + $0x16c] sm:$0xf]
      %v834 = vld [vmem:[%s816 + $0x170] sm:$0xf]
      %v835 = vld [vmem:[%s816 + $0x198] sm:$0xf]
      %v836 = vld [vmem:[%s816 + $0x19c] sm:$0xf]
      %v837 = vld [vmem:[%s816 + $0x1c4] sm:$0xf]
      %v838 = vld [vmem:[%s816 + $0x1c8] sm:$0xf]
      %v839 = vld [vmem:[%s816 + $0x1f0] sm:$0xf]
      %v840 = vld [vmem:[%s816 + $0x1f4] sm:$0xf]
      %v841 = vld [vmem:[%s816 + $0x21c] sm:$0xf]
      %v842 = vld [vmem:[%s816 + $0x220] sm:$0xf]
      %v843 = vld [vmem:[%s816 + $0x248] sm:$0xf]
      %v844 = vld [vmem:[%s816 + $0x24c] sm:$0xf]
      %v845 = vld [vmem:[%s816 + $0x274] sm:$0xf]
      %v846 = vld [vmem:[%s816 + $0x278] sm:$0xf]
      %v847 = vld [vmem:[%s816 + $0x2a0] sm:$0xf]
      %v848 = vld [vmem:[%s816 + $0x2a4] sm:$0xf]
      %v849 = vld [vmem:[%s2] sm:$0xf]
      %v850 = vld [vmem:[%s816 + $0x10] sm:$0xc]
      %v851 = vld [vmem:[%s816 + $0x14] sm:$0xf]
      %v852 = vld [vmem:[%s816 + $0x18] sm:$0x3]
      %v853 = vld [vmem:[%s816 + $0x3c] sm:$0xc]
      %v854 = vld [vmem:[%s816 + $0x40] sm:$0xf]
      %v855 = vld [vmem:[%s816 + $0x44] sm:$0x3]
      %v856 = vld [vmem:[%s816 + $0x68] sm:$0xc]
      %v857 = vld [vmem:[%s816 + $0x6c] sm:$0xf]
      %v858 = vld [vmem:[%s816 + $0x70] sm:$0x3]
      %v859 = vld [vmem:[%s816 + $0x94] sm:$0xc]
      %v860 = vld [vmem:[%s816 + $0x98] sm:$0xf]
      %v861 = vld [vmem:[%s816 + $0x9c] sm:$0x3]
      %v862 = vld [vmem:[%s816 + $0xc0] sm:$0xc]
      %v863 = vld [vmem:[%s816 + $0xc4] sm:$0xf]
      %v864 = vld [vmem:[%s816 + $0xc8] sm:$0x3]
      %v865 = vld [vmem:[%s816 + $0xec] sm:$0xc]
      %v866 = vld [vmem:[%s816 + $0xf0] sm:$0xf]
      %v867 = vld [vmem:[%s816 + $0xf4] sm:$0x3]
      %v868 = vld [vmem:[%s816 + $0x118] sm:$0xc]
      %v869 = vld [vmem:[%s816 + $0x11c] sm:$0xf]
      %v870 = vld [vmem:[%s816 + $0x120] sm:$0x3]
      %v871 = vld [vmem:[%s816 + $0x144] sm:$0xc]
      %v872 = vld [vmem:[%s816 + $0x148] sm:$0xf]
      %v873 = vld [vmem:[%s816 + $0x14c] sm:$0x3]
      %v874 = vld [vmem:[%s816 + $0x170] sm:$0xc]
      %v875 = vld [vmem:[%s816 + $0x174] sm:$0xf]
      %v876 = vld [vmem:[%s816 + $0x178] sm:$0x3]
      %v877 = vld [vmem:[%s816 + $0x19c] sm:$0xc]
      %v878 = vld [vmem:[%s816 + $0x1a0] sm:$0xf]
      %v879 = vld [vmem:[%s816 + $0x1a4] sm:$0x3]
      %v880 = vld [vmem:[%s816 + $0x1c8] sm:$0xc]
      %v881 = vld [vmem:[%s816 + $0x1cc] sm:$0xf]
      %v882 = vld [vmem:[%s816 + $0x1d0] sm:$0x3]
      %v883 = vld [vmem:[%s816 + $0x1f4] sm:$0xc]
      %v884 = vld [vmem:[%s816 + $0x1f8] sm:$0xf]
      %v885 = vld [vmem:[%s816 + $0x1fc] sm:$0x3]
      %v886 = vld [vmem:[%s816 + $0x220] sm:$0xc]
      %v887 = vld [vmem:[%s816 + $0x224] sm:$0xf]
      %v888 = vld [vmem:[%s816 + $0x228] sm:$0x3]
      %v889 = vld [vmem:[%s816 + $0x24c] sm:$0xc]
      %v890 = vld [vmem:[%s816 + $0x250] sm:$0xf]
      %v891 = vld [vmem:[%s816 + $0x254] sm:$0x3]
      %v892 = vld [vmem:[%s816 + $0x278] sm:$0xc]
      %v893 = vld [vmem:[%s816 + $0x27c] sm:$0xf]
      %v894 = vld [vmem:[%s816 + $0x280] sm:$0x3]
      %v895 = vld [vmem:[%s816 + $0x2a4] sm:$0xc]
      %v896 = vld [vmem:[%s816 + $0x2a8] sm:$0xf]
      %v897 = vld [vmem:[%s816 + $0x2ac] sm:$0x3]
      %v946 = vrot.slane %v850, 6
      %v947 = vrot.slane %v946, 4
      %v948 = vrot.slane %v851, 6
      %v949 = vsel %vm352, %v947, %v948
      %v950 = vrot.slane %v948, 4
      %v951 = vrot.slane %v852, 6
      %v952 = vsel %vm352, %v950, %v951
      %v953 = vrot.slane %v853, 6
      %v954 = vrot.slane %v953, 4
      %v955 = vrot.slane %v854, 6
      %v956 = vsel %vm352, %v954, %v955
      %v957 = vrot.slane %v955, 4
      %v958 = vrot.slane %v855, 6
      %v959 = vsel %vm352, %v957, %v958
      %v960 = vrot.slane %v856, 6
      %v961 = vrot.slane %v960, 4
      %v962 = vrot.slane %v857, 6
      %v963 = vsel %vm352, %v961, %v962
      %v964 = vrot.slane %v962, 4
      %v965 = vrot.slane %v858, 6
      %v966 = vsel %vm352, %v964, %v965
      %v967 = vrot.slane %v859, 6
      %v968 = vrot.slane %v967, 4
      %v969 = vrot.slane %v860, 6
      %v970 = vsel %vm352, %v968, %v969
      %v971 = vrot.slane %v969, 4
      %v972 = vrot.slane %v861, 6
      %v973 = vsel %vm352, %v971, %v972
      %v974 = vrot.slane %v862, 6
      %v975 = vrot.slane %v974, 4
      %v976 = vrot.slane %v863, 6
      %v977 = vsel %vm352, %v975, %v976
      %v978 = vrot.slane %v976, 4
      %v979 = vrot.slane %v864, 6
      %v980 = vsel %vm352, %v978, %v979
      %v981 = vrot.slane %v865, 6
      %v982 = vrot.slane %v981, 4
      %v983 = vrot.slane %v866, 6
      %v984 = vsel %vm352, %v982, %v983
      %v985 = vrot.slane %v983, 4
      %v986 = vrot.slane %v867, 6
      %v987 = vsel %vm352, %v985, %v986
      %v988 = vrot.slane %v868, 6
      %v989 = vrot.slane %v988, 4
      %v990 = vrot.slane %v869, 6
      %v991 = vsel %vm352, %v989, %v990
      %v992 = vrot.slane %v990, 4
      %v993 = vrot.slane %v870, 6
      %v994 = vsel %vm352, %v992, %v993
      %v995 = vrot.slane %v871, 6
      %v996 = vrot.slane %v995, 4
      %v997 = vrot.slane %v872, 6
      %v998 = vsel %vm352, %v996, %v997
      %v999 = vrot.slane %v997, 4
      %v1000 = vrot.slane %v873, 6
      %v1001 = vsel %vm352, %v999, %v1000
      %v1002 = vrot.slane %v874, 6
      %v1003 = vrot.slane %v1002, 4
      %v1004 = vrot.slane %v875, 6
      %v1005 = vsel %vm352, %v1003, %v1004
      %v1006 = vrot.slane %v1004, 4
      %v1007 = vrot.slane %v876, 6
      %v1008 = vsel %vm352, %v1006, %v1007
      %v1009 = vrot.slane %v877, 6
      %v1010 = vrot.slane %v1009, 4
      %v1011 = vrot.slane %v878, 6
      %v1012 = vsel %vm352, %v1010, %v1011
      %v1013 = vrot.slane %v1011, 4
      %v1014 = vrot.slane %v879, 6
      %v1015 = vsel %vm352, %v1013, %v1014
      %v1016 = vrot.slane %v880, 6
      %v1017 = vrot.slane %v1016, 4
      %v1018 = vrot.slane %v881, 6
      %v1019 = vsel %vm352, %v1017, %v1018
      %v1020 = vrot.slane %v1018, 4
      %v1021 = vrot.slane %v882, 6
      %v1022 = vsel %vm352, %v1020, %v1021
      %v1023 = vrot.slane %v883, 6
      %v1024 = vrot.slane %v1023, 4
      %v1025 = vrot.slane %v884, 6
      %v1026 = vsel %vm352, %v1024, %v1025
      %v1027 = vrot.slane %v1025, 4
      %v1028 = vrot.slane %v885, 6
      %v1029 = vsel %vm352, %v1027, %v1028
      %v1030 = vrot.slane %v886, 6
      %v1031 = vrot.slane %v1030, 4
      %v1032 = vrot.slane %v887, 6
      %v1033 = vsel %vm352, %v1031, %v1032
      %v1034 = vrot.slane %v1032, 4
      %v1035 = vrot.slane %v888, 6
      %v1036 = vsel %vm352, %v1034, %v1035
      %v1037 = vrot.slane %v889, 6
      %v1038 = vrot.slane %v1037, 4
      %v1039 = vrot.slane %v890, 6
      %v1040 = vsel %vm352, %v1038, %v1039
      %v1041 = vrot.slane %v1039, 4
      %v1042 = vrot.slane %v891, 6
      %v1043 = vsel %vm352, %v1041, %v1042
      %v1044 = vrot.slane %v892, 6
      %v1045 = vrot.slane %v1044, 4
      %v1046 = vrot.slane %v893, 6
      %v1047 = vsel %vm352, %v1045, %v1046
      %v1048 = vrot.slane %v1046, 4
      %v1049 = vrot.slane %v894, 6
      %v1050 = vsel %vm352, %v1048, %v1049
      %v1051 = vrot.slane %v895, 6
      %v1052 = vrot.slane %v1051, 4
      %v1053 = vrot.slane %v896, 6
      %v1054 = vsel %vm352, %v1052, %v1053
      %v1055 = vrot.slane %v1053, 4
      %v1056 = vrot.slane %v897, 6
      %v1057 = vsel %vm352, %v1055, %v1056
      %s1058 = scalar_lea.vmem %s2, 4
      %v1059 = vld [vmem:[%s1058] sm:$0xf]
      %v1060 = vunpack.c.l.b16 %v949
      %v1061 = vunpack.c.l.b16 %v952
      %v1062 = vunpack.c.l.b16 %v956
      %v1063 = vunpack.c.l.b16 %v959
      %v1064 = vunpack.c.l.b16 %v963
      %v1065 = vunpack.c.l.b16 %v966
      %v1066 = vunpack.c.l.b16 %v970
      %v1067 = vunpack.c.l.b16 %v973
      %v1068 = vunpack.c.l.b16 %v977
      %v1069 = vunpack.c.l.b16 %v980
      %v1070 = vunpack.c.l.b16 %v984
      %v1071 = vunpack.c.l.b16 %v987
      %v1072 = vunpack.c.l.b16 %v991
      %v1073 = vunpack.c.l.b16 %v994
      %v1074 = vunpack.c.l.b16 %v998
      %v1075 = vunpack.c.l.b16 %v1001
      %v1076 = vunpack.c.l.b16 %v1005
      %v1077 = vunpack.c.l.b16 %v1008
      %v1078 = vunpack.c.l.b16 %v1012
      %v1079 = vunpack.c.l.b16 %v1015
      %v1080 = vunpack.c.l.b16 %v1019
      %v1081 = vunpack.c.l.b16 %v1022
      %v1082 = vunpack.c.l.b16 %v1026
      %v1083 = vunpack.c.l.b16 %v1029
      %v1084 = vunpack.c.l.b16 %v1033
      %v1085 = vunpack.c.l.b16 %v1036
      %v1086 = vunpack.c.l.b16 %v1040
      %v1087 = vunpack.c.l.b16 %v1043
      %v1088 = vunpack.c.l.b16 %v1047
      %v1089 = vunpack.c.l.b16 %v1050
      %v1090 = vunpack.c.l.b16 %v1054
      %v1091 = vunpack.c.l.b16 %v1057
      %v1092 = vpack.c.b16 %v1061, %v1060
      %v1093 = vpack.c.b16 %v1063, %v1062
      %v1094 = vpack.c.b16 %v1065, %v1064
      %v1095 = vpack.c.b16 %v1067, %v1066
      %v1096 = vpack.c.b16 %v1069, %v1068
      %v1097 = vpack.c.b16 %v1071, %v1070
      %v1098 = vpack.c.b16 %v1073, %v1072
      %v1099 = vpack.c.b16 %v1075, %v1074
      %v1100 = vpack.c.b16 %v1077, %v1076
      %v1101 = vpack.c.b16 %v1079, %v1078
      %v1102 = vpack.c.b16 %v1081, %v1080
      %v1103 = vpack.c.b16 %v1083, %v1082
      %v1104 = vpack.c.b16 %v1085, %v1084
      %v1105 = vpack.c.b16 %v1087, %v1086
      %v1106 = vpack.c.b16 %v1089, %v1088
      %v1107 = vpack.c.b16 %v1091, %v1090
      %v1109 = vsel %vm553, %v1092, 0
      %v1112 = vsel %vm553, %v1093, 0
      %v1115 = vsel %vm553, %v1094, 0
      %v1118 = vsel %vm553, %v1095, 0
      %v1121 = vsel %vm553, %v1096, 0
      %v1124 = vsel %vm553, %v1097, 0
      %v1127 = vsel %vm553, %v1098, 0
      %v1130 = vsel %vm553, %v1099, 0
      %v1133 = vsel %vm553, %v1100, 0
      %v1136 = vsel %vm553, %v1101, 0
      %v1139 = vsel %vm553, %v1102, 0
      %v1142 = vsel %vm553, %v1103, 0
      %v1145 = vsel %vm553, %v1104, 0
      %v1148 = vsel %vm553, %v1105, 0
      %v1151 = vsel %vm553, %v1106, 0
      %v1154 = vsel %vm553, %v1107, 0
      %v1157 = vsel %vm602, %v1059, 0
      %1159 = vmatprep.subr.bf16.mxu0 0
      %1160 = vmatpush1.bf16.msra.mxu0 0
      %1161 = vmatprep.subr.bf16.mxu0 0
      %1162 = vmatpush1.bf16.msra.mxu0 0
      %1163 = vmatprep.subr.bf16.mxu0 0
      %1164 = vmatpush1.bf16.msra.mxu0 0
      %1165 = vmatprep.subr.bf16.mxu0 0
      %1166 = vmatpush1.bf16.msra.mxu0 0
      %1167 = vmatprep.subr.bf16.mxu0 0
      %1168 = vmatpush1.bf16.msra.mxu0 0
      %1169 = vmatprep.subr.bf16.mxu0 0
      %1170 = vmatpush1.bf16.msra.mxu0 0
      %1171 = vmatprep.subr.bf16.mxu0 0
      %1172 = vmatpush1.bf16.msra.mxu0 0
      %1173 = vmatprep.subr.bf16.mxu0 0
      %1174 = vmatpush1.bf16.msra.mxu0 %v1157
      %1175 = vmatprep.subr.bf16.mxu0 0
      %1176 = vmatpush2.bf16.msra.mxu0 0
      %1177 = vmatprep.subr.bf16.mxu0 0
      %1178 = vmatpush2.bf16.msra.mxu0 0
      %1179 = vmatprep.subr.bf16.mxu0 0
      %1180 = vmatpush2.bf16.msra.mxu0 0
      %1181 = vmatprep.subr.bf16.mxu0 0
      %1182 = vmatpush2.bf16.msra.mxu0 0
      %1183 = vmatprep.subr.bf16.mxu0 0
      %1184 = vmatpush2.bf16.msra.mxu0 0
      %1185 = vmatprep.subr.bf16.mxu0 0
      %1186 = vmatpush2.bf16.msra.mxu0 0
      %1187 = vmatprep.subr.bf16.mxu0 0
      %1188 = vmatpush2.bf16.msra.mxu0 0
      %1189 = vmatprep.subr.bf16.mxu0 0
      %1190 = vmatpush2.bf16.msra.mxu0 0
      %1191 = vmatprep.mubr.bf16.mxu0 0
      %1192 = vmatmul.mubr.bf16.gmra.mxu0 %v1109
      %v1193 = vpop.f32.mrf.mxu0
      %v1194 = vadd.f32 0.0, %v1193
      %v1195 = vpop.f32.mrf.mxu0
      %v1196 = vpop.f32.mrf.mxu0
      %v1197 = vadd.f32 0.0, %v1196
      %v1198 = vpop.f32.mrf.mxu0
      %1199 = vmatprep.mubr.bf16.mxu0 0
      %1200 = vmatmul.mubr.bf16.gmra.mxu0 %v1112
      %v1201 = vpop.f32.mrf.mxu0
      %v1202 = vadd.f32 0.0, %v1201
      %v1203 = vpop.f32.mrf.mxu0
      %v1204 = vpop.f32.mrf.mxu0
      %v1205 = vadd.f32 0.0, %v1204
      %v1206 = vpop.f32.mrf.mxu0
      %1207 = vmatprep.mubr.bf16.mxu0 0
      %1208 = vmatmul.mubr.bf16.gmra.mxu0 %v1115
      %v1209 = vpop.f32.mrf.mxu0
      %v1210 = vadd.f32 0.0, %v1209
      %v1211 = vpop.f32.mrf.mxu0
      %v1212 = vpop.f32.mrf.mxu0
      %v1213 = vadd.f32 0.0, %v1212
      %v1214 = vpop.f32.mrf.mxu0
      %1215 = vmatprep.mubr.bf16.mxu0 0
      %1216 = vmatmul.mubr.bf16.gmra.mxu0 %v1118
      %v1217 = vpop.f32.mrf.mxu0
      %v1218 = vadd.f32 0.0, %v1217
      %v1219 = vpop.f32.mrf.mxu0
      %v1220 = vpop.f32.mrf.mxu0
      %v1221 = vadd.f32 0.0, %v1220
      %v1222 = vpop.f32.mrf.mxu0
      %1223 = vmatprep.mubr.bf16.mxu0 0
      %1224 = vmatmul.mubr.bf16.gmra.mxu0 %v1121
      %v1225 = vpop.f32.mrf.mxu0
      %v1226 = vadd.f32 0.0, %v1225
      %v1227 = vpop.f32.mrf.mxu0
      %v1228 = vpop.f32.mrf.mxu0
      %v1229 = vadd.f32 0.0, %v1228
      %v1230 = vpop.f32.mrf.mxu0
      %1231 = vmatprep.mubr.bf16.mxu0 0
      %1232 = vmatmul.mubr.bf16.gmra.mxu0 %v1124
      %v1233 = vpop.f32.mrf.mxu0
      %v1234 = vadd.f32 0.0, %v1233
      %v1235 = vpop.f32.mrf.mxu0
      %v1236 = vpop.f32.mrf.mxu0
      %v1237 = vadd.f32 0.0, %v1236
      %v1238 = vpop.f32.mrf.mxu0
      %1239 = vmatprep.mubr.bf16.mxu0 0
      %1240 = vmatmul.mubr.bf16.gmra.mxu0 %v1127
      %v1241 = vpop.f32.mrf.mxu0
      %v1242 = vadd.f32 0.0, %v1241
      %v1243 = vpop.f32.mrf.mxu0
      %v1244 = vpop.f32.mrf.mxu0
      %v1245 = vadd.f32 0.0, %v1244
      %v1246 = vpop.f32.mrf.mxu0
      %1247 = vmatprep.mubr.bf16.mxu0 0
      %1248 = vmatmul.mubr.bf16.gmra.mxu0 %v1130
      %v1249 = vpop.f32.mrf.mxu0
      %v1250 = vadd.f32 0.0, %v1249
      %v1251 = vpop.f32.mrf.mxu0
      %v1252 = vpop.f32.mrf.mxu0
      %v1253 = vadd.f32 0.0, %v1252
      %v1254 = vpop.f32.mrf.mxu0
      %1255 = vmatprep.mubr.bf16.mxu0 0
      %1256 = vmatmul.mubr.bf16.gmra.mxu0 %v1133
      %v1257 = vpop.f32.mrf.mxu0
      %v1258 = vadd.f32 0.0, %v1257
      %v1259 = vpop.f32.mrf.mxu0
      %v1260 = vpop.f32.mrf.mxu0
      %v1261 = vadd.f32 0.0, %v1260
      %v1262 = vpop.f32.mrf.mxu0
      %1263 = vmatprep.mubr.bf16.mxu0 0
      %1264 = vmatmul.mubr.bf16.gmra.mxu0 %v1136
      %v1265 = vpop.f32.mrf.mxu0
      %v1266 = vadd.f32 0.0, %v1265
      %v1267 = vpop.f32.mrf.mxu0
      %v1268 = vpop.f32.mrf.mxu0
      %v1269 = vadd.f32 0.0, %v1268
      %v1270 = vpop.f32.mrf.mxu0
      %1271 = vmatprep.mubr.bf16.mxu0 0
      %1272 = vmatmul.mubr.bf16.gmra.mxu0 %v1139
      %v1273 = vpop.f32.mrf.mxu0
      %v1274 = vadd.f32 0.0, %v1273
      %v1275 = vpop.f32.mrf.mxu0
      %v1276 = vpop.f32.mrf.mxu0
      %v1277 = vadd.f32 0.0, %v1276
      %v1278 = vpop.f32.mrf.mxu0
      %1279 = vmatprep.mubr.bf16.mxu0 0
      %1280 = vmatmul.mubr.bf16.gmra.mxu0 %v1142
      %v1281 = vpop.f32.mrf.mxu0
      %v1282 = vadd.f32 0.0, %v1281
      %v1283 = vpop.f32.mrf.mxu0
      %v1284 = vpop.f32.mrf.mxu0
      %v1285 = vadd.f32 0.0, %v1284
      %v1286 = vpop.f32.mrf.mxu0
      %1287 = vmatprep.mubr.bf16.mxu0 0
      %1288 = vmatmul.mubr.bf16.gmra.mxu0 %v1145
      %v1289 = vpop.f32.mrf.mxu0
      %v1290 = vadd.f32 0.0, %v1289
      %v1291 = vpop.f32.mrf.mxu0
      %v1292 = vpop.f32.mrf.mxu0
      %v1293 = vadd.f32 0.0, %v1292
      %v1294 = vpop.f32.mrf.mxu0
      %1295 = vmatprep.mubr.bf16.mxu0 0
      %1296 = vmatmul.mubr.bf16.gmra.mxu0 %v1148
      %v1297 = vpop.f32.mrf.mxu0
      %v1298 = vadd.f32 0.0, %v1297
      %v1299 = vpop.f32.mrf.mxu0
      %v1300 = vpop.f32.mrf.mxu0
      %v1301 = vadd.f32 0.0, %v1300
      %v1302 = vpop.f32.mrf.mxu0
      %1303 = vmatprep.mubr.bf16.mxu0 0
      %1304 = vmatmul.mubr.bf16.gmra.mxu0 %v1151
      %v1305 = vpop.f32.mrf.mxu0
      %v1306 = vadd.f32 0.0, %v1305
      %v1307 = vpop.f32.mrf.mxu0
      %v1308 = vpop.f32.mrf.mxu0
      %v1309 = vadd.f32 0.0, %v1308
      %v1310 = vpop.f32.mrf.mxu0
      %1311 = vmatprep.mubr.bf16.mxu0 0
      %1312 = vmatmul.mubr.bf16.gmra.mxu0 %v1154
      %v1313 = vpop.f32.mrf.mxu0
      %v1314 = vadd.f32 0.0, %v1313
      %v1315 = vpop.f32.mrf.mxu0
      %v1316 = vpop.f32.mrf.mxu0
      %v1317 = vadd.f32 0.0, %v1316
      %v1318 = vpop.f32.mrf.mxu0
      %1319 = vdwg.mxu0
      %v1352 = vunpack.c.l.b16 %v817
      %v1353 = vunpack.c.l.b16 %v818
      %v1354 = vunpack.c.l.b16 %v819
      %v1355 = vunpack.c.l.b16 %v820
      %v1356 = vunpack.c.l.b16 %v821
      %v1357 = vunpack.c.l.b16 %v822
      %v1358 = vunpack.c.l.b16 %v823
      %v1359 = vunpack.c.l.b16 %v824
      %v1360 = vunpack.c.l.b16 %v825
      %v1361 = vunpack.c.l.b16 %v826
      %v1362 = vunpack.c.l.b16 %v827
      %v1363 = vunpack.c.l.b16 %v828
      %v1364 = vunpack.c.l.b16 %v829
      %v1365 = vunpack.c.l.b16 %v830
      %v1366 = vunpack.c.l.b16 %v831
      %v1367 = vunpack.c.l.b16 %v832
      %v1368 = vunpack.c.l.b16 %v833
      %v1369 = vunpack.c.l.b16 %v834
      %v1370 = vunpack.c.l.b16 %v835
      %v1371 = vunpack.c.l.b16 %v836
      %v1372 = vunpack.c.l.b16 %v837
      %v1373 = vunpack.c.l.b16 %v838
      %v1374 = vunpack.c.l.b16 %v839
      %v1375 = vunpack.c.l.b16 %v840
      %v1376 = vunpack.c.l.b16 %v841
      %v1377 = vunpack.c.l.b16 %v842
      %v1378 = vunpack.c.l.b16 %v843
      %v1379 = vunpack.c.l.b16 %v844
      %v1380 = vunpack.c.l.b16 %v845
      %v1381 = vunpack.c.l.b16 %v846
      %v1382 = vunpack.c.l.b16 %v847
      %v1383 = vunpack.c.l.b16 %v848
      %v1384 = vpack.c.b16 %v1353, %v1352
      %v1385 = vpack.c.b16 %v1355, %v1354
      %v1386 = vpack.c.b16 %v1357, %v1356
      %v1387 = vpack.c.b16 %v1359, %v1358
      %v1388 = vpack.c.b16 %v1361, %v1360
      %v1389 = vpack.c.b16 %v1363, %v1362
      %v1390 = vpack.c.b16 %v1365, %v1364
      %v1391 = vpack.c.b16 %v1367, %v1366
      %v1392 = vpack.c.b16 %v1369, %v1368
      %v1393 = vpack.c.b16 %v1371, %v1370
      %v1394 = vpack.c.b16 %v1373, %v1372
      %v1395 = vpack.c.b16 %v1375, %v1374
      %v1396 = vpack.c.b16 %v1377, %v1376
      %v1397 = vpack.c.b16 %v1379, %v1378
      %v1398 = vpack.c.b16 %v1381, %v1380
      %v1399 = vpack.c.b16 %v1383, %v1382
      %v1401 = vsel %vm553, %v1384, 0
      %v1404 = vsel %vm553, %v1385, 0
      %v1407 = vsel %vm553, %v1386, 0
      %v1410 = vsel %vm553, %v1387, 0
      %v1413 = vsel %vm553, %v1388, 0
      %v1416 = vsel %vm553, %v1389, 0
      %v1419 = vsel %vm553, %v1390, 0
      %v1422 = vsel %vm553, %v1391, 0
      %v1425 = vsel %vm553, %v1392, 0
      %v1428 = vsel %vm553, %v1393, 0
      %v1431 = vsel %vm553, %v1394, 0
      %v1434 = vsel %vm553, %v1395, 0
      %v1437 = vsel %vm553, %v1396, 0
      %v1440 = vsel %vm553, %v1397, 0
      %v1443 = vsel %vm553, %v1398, 0
      %v1446 = vsel %vm553, %v1399, 0
      %v1449 = vsel %vm602, %v849, 0
      %1451 = vmatprep.subr.bf16.mxu0 0
      %1452 = vmatpush1.bf16.msra.mxu0 0
      %1453 = vmatprep.subr.bf16.mxu0 0
      %1454 = vmatpush1.bf16.msra.mxu0 0
      %1455 = vmatprep.subr.bf16.mxu0 0
      %1456 = vmatpush1.bf16.msra.mxu0 0
      %1457 = vmatprep.subr.bf16.mxu0 0
      %1458 = vmatpush1.bf16.msra.mxu0 0
      %1459 = vmatprep.subr.bf16.mxu0 0
      %1460 = vmatpush1.bf16.msra.mxu0 0
      %1461 = vmatprep.subr.bf16.mxu0 0
      %1462 = vmatpush1.bf16.msra.mxu0 0
      %1463 = vmatprep.subr.bf16.mxu0 0
      %1464 = vmatpush1.bf16.msra.mxu0 0
      %1465 = vmatprep.subr.bf16.mxu0 0
      %1466 = vmatpush1.bf16.msra.mxu0 %v1449
      %1467 = vmatprep.subr.bf16.mxu0 0
      %1468 = vmatpush2.bf16.msra.mxu0 0
      %1469 = vmatprep.subr.bf16.mxu0 0
      %1470 = vmatpush2.bf16.msra.mxu0 0
      %1471 = vmatprep.subr.bf16.mxu0 0
      %1472 = vmatpush2.bf16.msra.mxu0 0
      %1473 = vmatprep.subr.bf16.mxu0 0
      %1474 = vmatpush2.bf16.msra.mxu0 0
      %1475 = vmatprep.subr.bf16.mxu0 0
      %1476 = vmatpush2.bf16.msra.mxu0 0
      %1477 = vmatprep.subr.bf16.mxu0 0
      %1478 = vmatpush2.bf16.msra.mxu0 0
      %1479 = vmatprep.subr.bf16.mxu0 0
      %1480 = vmatpush2.bf16.msra.mxu0 0
      %1481 = vmatprep.subr.bf16.mxu0 0
      %1482 = vmatpush2.bf16.msra.mxu0 0
      %1483 = vmatprep.mubr.bf16.mxu0 0
      %1484 = vmatmul.mubr.bf16.gmra.mxu0 %v1401
      %v1485 = vpop.f32.mrf.mxu0
      %v1486 = vadd.f32 %v1194, %v1485
      %v1487 = vpop.f32.mrf.mxu0
      %v1488 = vpop.f32.mrf.mxu0
      %v1489 = vadd.f32 %v1197, %v1488
      %v1490 = vpop.f32.mrf.mxu0
      %1491 = vmatprep.mubr.bf16.mxu0 0
      %1492 = vmatmul.mubr.bf16.gmra.mxu0 %v1404
      %v1493 = vpop.f32.mrf.mxu0
      %v1494 = vadd.f32 %v1202, %v1493
      %v1495 = vpop.f32.mrf.mxu0
      %v1496 = vpop.f32.mrf.mxu0
      %v1497 = vadd.f32 %v1205, %v1496
      %v1498 = vpop.f32.mrf.mxu0
      %1499 = vmatprep.mubr.bf16.mxu0 0
      %1500 = vmatmul.mubr.bf16.gmra.mxu0 %v1407
      %v1501 = vpop.f32.mrf.mxu0
      %v1502 = vadd.f32 %v1210, %v1501
      %v1503 = vpop.f32.mrf.mxu0
      %v1504 = vpop.f32.mrf.mxu0
      %v1505 = vadd.f32 %v1213, %v1504
      %v1506 = vpop.f32.mrf.mxu0
      %1507 = vmatprep.mubr.bf16.mxu0 0
      %1508 = vmatmul.mubr.bf16.gmra.mxu0 %v1410
      %v1509 = vpop.f32.mrf.mxu0
      %v1510 = vadd.f32 %v1218, %v1509
      %v1511 = vpop.f32.mrf.mxu0
      %v1512 = vpop.f32.mrf.mxu0
      %v1513 = vadd.f32 %v1221, %v1512
      %v1514 = vpop.f32.mrf.mxu0
      %1515 = vmatprep.mubr.bf16.mxu0 0
      %1516 = vmatmul.mubr.bf16.gmra.mxu0 %v1413
      %v1517 = vpop.f32.mrf.mxu0
      %v1518 = vadd.f32 %v1226, %v1517
      %v1519 = vpop.f32.mrf.mxu0
      %v1520 = vpop.f32.mrf.mxu0
      %v1521 = vadd.f32 %v1229, %v1520
      %v1522 = vpop.f32.mrf.mxu0
      %1523 = vmatprep.mubr.bf16.mxu0 0
      %1524 = vmatmul.mubr.bf16.gmra.mxu0 %v1416
      %v1525 = vpop.f32.mrf.mxu0
      %v1526 = vadd.f32 %v1234, %v1525
      %v1527 = vpop.f32.mrf.mxu0
      %v1528 = vpop.f32.mrf.mxu0
      %v1529 = vadd.f32 %v1237, %v1528
      %v1530 = vpop.f32.mrf.mxu0
      %1531 = vmatprep.mubr.bf16.mxu0 0
      %1532 = vmatmul.mubr.bf16.gmra.mxu0 %v1419
      %v1533 = vpop.f32.mrf.mxu0
      %v1534 = vadd.f32 %v1242, %v1533
      %v1535 = vpop.f32.mrf.mxu0
      %v1536 = vpop.f32.mrf.mxu0
      %v1537 = vadd.f32 %v1245, %v1536
      %v1538 = vpop.f32.mrf.mxu0
      %1539 = vmatprep.mubr.bf16.mxu0 0
      %1540 = vmatmul.mubr.bf16.gmra.mxu0 %v1422
      %v1541 = vpop.f32.mrf.mxu0
      %v1542 = vadd.f32 %v1250, %v1541
      %v1543 = vpop.f32.mrf.mxu0
      %v1544 = vpop.f32.mrf.mxu0
      %v1545 = vadd.f32 %v1253, %v1544
      %v1546 = vpop.f32.mrf.mxu0
      %1547 = vmatprep.mubr.bf16.mxu0 0
      %1548 = vmatmul.mubr.bf16.gmra.mxu0 %v1425
      %v1549 = vpop.f32.mrf.mxu0
      %v1550 = vadd.f32 %v1258, %v1549
      %v1551 = vpop.f32.mrf.mxu0
      %v1552 = vpop.f32.mrf.mxu0
      %v1553 = vadd.f32 %v1261, %v1552
      %v1554 = vpop.f32.mrf.mxu0
      %1555 = vmatprep.mubr.bf16.mxu0 0
      %1556 = vmatmul.mubr.bf16.gmra.mxu0 %v1428
      %v1557 = vpop.f32.mrf.mxu0
      %v1558 = vadd.f32 %v1266, %v1557
      %v1559 = vpop.f32.mrf.mxu0
      %v1560 = vpop.f32.mrf.mxu0
      %v1561 = vadd.f32 %v1269, %v1560
      %v1562 = vpop.f32.mrf.mxu0
      %1563 = vmatprep.mubr.bf16.mxu0 0
      %1564 = vmatmul.mubr.bf16.gmra.mxu0 %v1431
      %v1565 = vpop.f32.mrf.mxu0
      %v1566 = vadd.f32 %v1274, %v1565
      %v1567 = vpop.f32.mrf.mxu0
      %v1568 = vpop.f32.mrf.mxu0
      %v1569 = vadd.f32 %v1277, %v1568
      %v1570 = vpop.f32.mrf.mxu0
      %1571 = vmatprep.mubr.bf16.mxu0 0
      %1572 = vmatmul.mubr.bf16.gmra.mxu0 %v1434
      %v1573 = vpop.f32.mrf.mxu0
      %v1574 = vadd.f32 %v1282, %v1573
      %v1575 = vpop.f32.mrf.mxu0
      %v1576 = vpop.f32.mrf.mxu0
      %v1577 = vadd.f32 %v1285, %v1576
      %v1578 = vpop.f32.mrf.mxu0
      %1579 = vmatprep.mubr.bf16.mxu0 0
      %1580 = vmatmul.mubr.bf16.gmra.mxu0 %v1437
      %v1581 = vpop.f32.mrf.mxu0
      %v1582 = vadd.f32 %v1290, %v1581
      %v1583 = vpop.f32.mrf.mxu0
      %v1584 = vpop.f32.mrf.mxu0
      %v1585 = vadd.f32 %v1293, %v1584
      %v1586 = vpop.f32.mrf.mxu0
      %1587 = vmatprep.mubr.bf16.mxu0 0
      %1588 = vmatmul.mubr.bf16.gmra.mxu0 %v1440
      %v1589 = vpop.f32.mrf.mxu0
      %v1590 = vadd.f32 %v1298, %v1589
      %v1591 = vpop.f32.mrf.mxu0
      %v1592 = vpop.f32.mrf.mxu0
      %v1593 = vadd.f32 %v1301, %v1592
      %v1594 = vpop.f32.mrf.mxu0
      %1595 = vmatprep.mubr.bf16.mxu0 0
      %1596 = vmatmul.mubr.bf16.gmra.mxu0 %v1443
      %v1597 = vpop.f32.mrf.mxu0
      %v1598 = vadd.f32 %v1306, %v1597
      %v1599 = vpop.f32.mrf.mxu0
      %v1600 = vpop.f32.mrf.mxu0
      %v1601 = vadd.f32 %v1309, %v1600
      %v1602 = vpop.f32.mrf.mxu0
      %1603 = vmatprep.mubr.bf16.mxu0 0
      %1604 = vmatmul.mubr.bf16.gmra.mxu0 %v1446
      %v1605 = vpop.f32.mrf.mxu0
      %v1606 = vadd.f32 %v1314, %v1605
      %v1607 = vpop.f32.mrf.mxu0
      %v1608 = vpop.f32.mrf.mxu0
      %v1609 = vadd.f32 %v1317, %v1608
      %v1610 = vpop.f32.mrf.mxu0
      %1611 = vdwg.mxu0
      %v1612 = vld [vmem:[%s816 + $0x18] sm:$0xf]
      %v1613 = vld [vmem:[%s816 + $0x1c] sm:$0xf]
      %v1614 = vld [vmem:[%s816 + $0x44] sm:$0xf]
      %v1615 = vld [vmem:[%s816 + $0x48] sm:$0xf]
      %v1616 = vld [vmem:[%s816 + $0x70] sm:$0xf]
      %v1617 = vld [vmem:[%s816 + $0x74] sm:$0xf]
      %v1618 = vld [vmem:[%s816 + $0x9c] sm:$0xf]
      %v1619 = vld [vmem:[%s816 + $0xa0] sm:$0xf]
      %v1620 = vld [vmem:[%s816 + $0xc8] sm:$0xf]
      %v1621 = vld [vmem:[%s816 + $0xcc] sm:$0xf]
      %v1622 = vld [vmem:[%s816 + $0xf4] sm:$0xf]
      %v1623 = vld [vmem:[%s816 + $0xf8] sm:$0xf]
      %v1624 = vld [vmem:[%s816 + $0x120] sm:$0xf]
      %v1625 = vld [vmem:[%s816 + $0x124] sm:$0xf]
      %v1626 = vld [vmem:[%s816 + $0x14c] sm:$0xf]
      %v1627 = vld [vmem:[%s816 + $0x150] sm:$0xf]
      %v1628 = vld [vmem:[%s816 + $0x178] sm:$0xf]
      %v1629 = vld [vmem:[%s816 + $0x17c] sm:$0xf]
      %v1630 = vld [vmem:[%s816 + $0x1a4] sm:$0xf]
      %v1631 = vld [vmem:[%s816 + $0x1a8] sm:$0xf]
      %v1632 = vld [vmem:[%s816 + $0x1d0] sm:$0xf]
      %v1633 = vld [vmem:[%s816 + $0x1d4] sm:$0xf]
      %v1634 = vld [vmem:[%s816 + $0x1fc] sm:$0xf]
      %v1635 = vld [vmem:[%s816 + $0x200] sm:$0xf]
      %v1636 = vld [vmem:[%s816 + $0x228] sm:$0xf]
      %v1637 = vld [vmem:[%s816 + $0x22c] sm:$0xf]
      %v1638 = vld [vmem:[%s816 + $0x254] sm:$0xf]
      %v1639 = vld [vmem:[%s816 + $0x258] sm:$0xf]
      %v1640 = vld [vmem:[%s816 + $0x280] sm:$0xf]
      %v1641 = vld [vmem:[%s816 + $0x284] sm:$0xf]
      %v1642 = vld [vmem:[%s816 + $0x2ac] sm:$0xf]
      %v1643 = vld [vmem:[%s816 + $0x2b0] sm:$0xf]
      %s1644 = scalar_lea.vmem %s2, 8
      %v1645 = vld [vmem:[%s1644] sm:$0xf]
      %v1678 = vunpack.c.l.b16 %v1612
      %v1679 = vunpack.c.l.b16 %v1613
      %v1680 = vunpack.c.l.b16 %v1614
      %v1681 = vunpack.c.l.b16 %v1615
      %v1682 = vunpack.c.l.b16 %v1616
      %v1683 = vunpack.c.l.b16 %v1617
      %v1684 = vunpack.c.l.b16 %v1618
      %v1685 = vunpack.c.l.b16 %v1619
      %v1686 = vunpack.c.l.b16 %v1620
      %v1687 = vunpack.c.l.b16 %v1621
      %v1688 = vunpack.c.l.b16 %v1622
      %v1689 = vunpack.c.l.b16 %v1623
      %v1690 = vunpack.c.l.b16 %v1624
      %v1691 = vunpack.c.l.b16 %v1625
      %v1692 = vunpack.c.l.b16 %v1626
      %v1693 = vunpack.c.l.b16 %v1627
      %v1694 = vunpack.c.l.b16 %v1628
      %v1695 = vunpack.c.l.b16 %v1629
      %v1696 = vunpack.c.l.b16 %v1630
      %v1697 = vunpack.c.l.b16 %v1631
      %v1698 = vunpack.c.l.b16 %v1632
      %v1699 = vunpack.c.l.b16 %v1633
      %v1700 = vunpack.c.l.b16 %v1634
      %v1701 = vunpack.c.l.b16 %v1635
      %v1702 = vunpack.c.l.b16 %v1636
      %v1703 = vunpack.c.l.b16 %v1637
      %v1704 = vunpack.c.l.b16 %v1638
      %v1705 = vunpack.c.l.b16 %v1639
      %v1706 = vunpack.c.l.b16 %v1640
      %v1707 = vunpack.c.l.b16 %v1641
      %v1708 = vunpack.c.l.b16 %v1642
      %v1709 = vunpack.c.l.b16 %v1643
      %v1710 = vpack.c.b16 %v1679, %v1678
      %v1711 = vpack.c.b16 %v1681, %v1680
      %v1712 = vpack.c.b16 %v1683, %v1682
      %v1713 = vpack.c.b16 %v1685, %v1684
      %v1714 = vpack.c.b16 %v1687, %v1686
      %v1715 = vpack.c.b16 %v1689, %v1688
      %v1716 = vpack.c.b16 %v1691, %v1690
      %v1717 = vpack.c.b16 %v1693, %v1692
      %v1718 = vpack.c.b16 %v1695, %v1694
      %v1719 = vpack.c.b16 %v1697, %v1696
      %v1720 = vpack.c.b16 %v1699, %v1698
      %v1721 = vpack.c.b16 %v1701, %v1700
      %v1722 = vpack.c.b16 %v1703, %v1702
      %v1723 = vpack.c.b16 %v1705, %v1704
      %v1724 = vpack.c.b16 %v1707, %v1706
      %v1725 = vpack.c.b16 %v1709, %v1708
      %v1727 = vsel %vm553, %v1710, 0
      %v1730 = vsel %vm553, %v1711, 0
      %v1733 = vsel %vm553, %v1712, 0
      %v1736 = vsel %vm553, %v1713, 0
      %v1739 = vsel %vm553, %v1714, 0
      %v1742 = vsel %vm553, %v1715, 0
      %v1745 = vsel %vm553, %v1716, 0
      %v1748 = vsel %vm553, %v1717, 0
      %v1751 = vsel %vm553, %v1718, 0
      %v1754 = vsel %vm553, %v1719, 0
      %v1757 = vsel %vm553, %v1720, 0
      %v1760 = vsel %vm553, %v1721, 0
      %v1763 = vsel %vm553, %v1722, 0
      %v1766 = vsel %vm553, %v1723, 0
      %v1769 = vsel %vm553, %v1724, 0
      %v1772 = vsel %vm553, %v1725, 0
      %v1775 = vsel %vm602, %v1645, 0
      %1777 = vmatprep.subr.bf16.mxu0 0
      %1778 = vmatpush1.bf16.msra.mxu0 0
      %1779 = vmatprep.subr.bf16.mxu0 0
      %1780 = vmatpush1.bf16.msra.mxu0 0
      %1781 = vmatprep.subr.bf16.mxu0 0
      %1782 = vmatpush1.bf16.msra.mxu0 0
      %1783 = vmatprep.subr.bf16.mxu0 0
      %1784 = vmatpush1.bf16.msra.mxu0 0
      %1785 = vmatprep.subr.bf16.mxu0 0
      %1786 = vmatpush1.bf16.msra.mxu0 0
      %1787 = vmatprep.subr.bf16.mxu0 0
      %1788 = vmatpush1.bf16.msra.mxu0 0
      %1789 = vmatprep.subr.bf16.mxu0 0
      %1790 = vmatpush1.bf16.msra.mxu0 0
      %1791 = vmatprep.subr.bf16.mxu0 0
      %1792 = vmatpush1.bf16.msra.mxu0 %v1775
      %1793 = vmatprep.subr.bf16.mxu0 0
      %1794 = vmatpush2.bf16.msra.mxu0 0
      %1795 = vmatprep.subr.bf16.mxu0 0
      %1796 = vmatpush2.bf16.msra.mxu0 0
      %1797 = vmatprep.subr.bf16.mxu0 0
      %1798 = vmatpush2.bf16.msra.mxu0 0
      %1799 = vmatprep.subr.bf16.mxu0 0
      %1800 = vmatpush2.bf16.msra.mxu0 0
      %1801 = vmatprep.subr.bf16.mxu0 0
      %1802 = vmatpush2.bf16.msra.mxu0 0
      %1803 = vmatprep.subr.bf16.mxu0 0
      %1804 = vmatpush2.bf16.msra.mxu0 0
      %1805 = vmatprep.subr.bf16.mxu0 0
      %1806 = vmatpush2.bf16.msra.mxu0 0
      %1807 = vmatprep.subr.bf16.mxu0 0
      %1808 = vmatpush2.bf16.msra.mxu0 0
      %1809 = vmatprep.mubr.bf16.mxu0 0
      %1810 = vmatmul.mubr.bf16.gmra.mxu0 %v1727
      %v1811 = vpop.f32.mrf.mxu0
      %v1812 = vadd.f32 0.0, %v1811
      %v1813 = vpop.f32.mrf.mxu0
      %v1814 = vpop.f32.mrf.mxu0
      %v1815 = vadd.f32 0.0, %v1814
      %v1816 = vpop.f32.mrf.mxu0
      %1817 = vmatprep.mubr.bf16.mxu0 0
      %1818 = vmatmul.mubr.bf16.gmra.mxu0 %v1730
      %v1819 = vpop.f32.mrf.mxu0
      %v1820 = vadd.f32 0.0, %v1819
      %v1821 = vpop.f32.mrf.mxu0
      %v1822 = vpop.f32.mrf.mxu0
      %v1823 = vadd.f32 0.0, %v1822
      %v1824 = vpop.f32.mrf.mxu0
      %1825 = vmatprep.mubr.bf16.mxu0 0
      %1826 = vmatmul.mubr.bf16.gmra.mxu0 %v1733
      %v1827 = vpop.f32.mrf.mxu0
      %v1828 = vadd.f32 0.0, %v1827
      %v1829 = vpop.f32.mrf.mxu0
      %v1830 = vpop.f32.mrf.mxu0
      %v1831 = vadd.f32 0.0, %v1830
      %v1832 = vpop.f32.mrf.mxu0
      %1833 = vmatprep.mubr.bf16.mxu0 0
      %1834 = vmatmul.mubr.bf16.gmra.mxu0 %v1736
      %v1835 = vpop.f32.mrf.mxu0
      %v1836 = vadd.f32 0.0, %v1835
      %v1837 = vpop.f32.mrf.mxu0
      %v1838 = vpop.f32.mrf.mxu0
      %v1839 = vadd.f32 0.0, %v1838
      %v1840 = vpop.f32.mrf.mxu0
      %1841 = vmatprep.mubr.bf16.mxu0 0
      %1842 = vmatmul.mubr.bf16.gmra.mxu0 %v1739
      %v1843 = vpop.f32.mrf.mxu0
      %v1844 = vadd.f32 0.0, %v1843
      %v1845 = vpop.f32.mrf.mxu0
      %v1846 = vpop.f32.mrf.mxu0
      %v1847 = vadd.f32 0.0, %v1846
      %v1848 = vpop.f32.mrf.mxu0
      %1849 = vmatprep.mubr.bf16.mxu0 0
      %1850 = vmatmul.mubr.bf16.gmra.mxu0 %v1742
      %v1851 = vpop.f32.mrf.mxu0
      %v1852 = vadd.f32 0.0, %v1851
      %v1853 = vpop.f32.mrf.mxu0
      %v1854 = vpop.f32.mrf.mxu0
      %v1855 = vadd.f32 0.0, %v1854
      %v1856 = vpop.f32.mrf.mxu0
      %1857 = vmatprep.mubr.bf16.mxu0 0
      %1858 = vmatmul.mubr.bf16.gmra.mxu0 %v1745
      %v1859 = vpop.f32.mrf.mxu0
      %v1860 = vadd.f32 0.0, %v1859
      %v1861 = vpop.f32.mrf.mxu0
      %v1862 = vpop.f32.mrf.mxu0
      %v1863 = vadd.f32 0.0, %v1862
      %v1864 = vpop.f32.mrf.mxu0
      %1865 = vmatprep.mubr.bf16.mxu0 0
      %1866 = vmatmul.mubr.bf16.gmra.mxu0 %v1748
      %v1867 = vpop.f32.mrf.mxu0
      %v1868 = vadd.f32 0.0, %v1867
      %v1869 = vpop.f32.mrf.mxu0
      %v1870 = vpop.f32.mrf.mxu0
      %v1871 = vadd.f32 0.0, %v1870
      %v1872 = vpop.f32.mrf.mxu0
      %1873 = vmatprep.mubr.bf16.mxu0 0
      %1874 = vmatmul.mubr.bf16.gmra.mxu0 %v1751
      %v1875 = vpop.f32.mrf.mxu0
      %v1876 = vadd.f32 0.0, %v1875
      %v1877 = vpop.f32.mrf.mxu0
      %v1878 = vpop.f32.mrf.mxu0
      %v1879 = vadd.f32 0.0, %v1878
      %v1880 = vpop.f32.mrf.mxu0
      %1881 = vmatprep.mubr.bf16.mxu0 0
      %1882 = vmatmul.mubr.bf16.gmra.mxu0 %v1754
      %v1883 = vpop.f32.mrf.mxu0
      %v1884 = vadd.f32 0.0, %v1883
      %v1885 = vpop.f32.mrf.mxu0
      %v1886 = vpop.f32.mrf.mxu0
      %v1887 = vadd.f32 0.0, %v1886
      %v1888 = vpop.f32.mrf.mxu0
      %1889 = vmatprep.mubr.bf16.mxu0 0
      %1890 = vmatmul.mubr.bf16.gmra.mxu0 %v1757
      %v1891 = vpop.f32.mrf.mxu0
      %v1892 = vadd.f32 0.0, %v1891
      %v1893 = vpop.f32.mrf.mxu0
      %v1894 = vpop.f32.mrf.mxu0
      %v1895 = vadd.f32 0.0, %v1894
      %v1896 = vpop.f32.mrf.mxu0
      %1897 = vmatprep.mubr.bf16.mxu0 0
      %1898 = vmatmul.mubr.bf16.gmra.mxu0 %v1760
      %v1899 = vpop.f32.mrf.mxu0
      %v1900 = vadd.f32 0.0, %v1899
      %v1901 = vpop.f32.mrf.mxu0
      %v1902 = vpop.f32.mrf.mxu0
      %v1903 = vadd.f32 0.0, %v1902
      %v1904 = vpop.f32.mrf.mxu0
      %1905 = vmatprep.mubr.bf16.mxu0 0
      %1906 = vmatmul.mubr.bf16.gmra.mxu0 %v1763
      %v1907 = vpop.f32.mrf.mxu0
      %v1908 = vadd.f32 0.0, %v1907
      %v1909 = vpop.f32.mrf.mxu0
      %v1910 = vpop.f32.mrf.mxu0
      %v1911 = vadd.f32 0.0, %v1910
      %v1912 = vpop.f32.mrf.mxu0
      %1913 = vmatprep.mubr.bf16.mxu0 0
      %1914 = vmatmul.mubr.bf16.gmra.mxu0 %v1766
      %v1915 = vpop.f32.mrf.mxu0
      %v1916 = vadd.f32 0.0, %v1915
      %v1917 = vpop.f32.mrf.mxu0
      %v1918 = vpop.f32.mrf.mxu0
      %v1919 = vadd.f32 0.0, %v1918
      %v1920 = vpop.f32.mrf.mxu0
      %1921 = vmatprep.mubr.bf16.mxu0 0
      %1922 = vmatmul.mubr.bf16.gmra.mxu0 %v1769
      %v1923 = vpop.f32.mrf.mxu0
      %v1924 = vadd.f32 0.0, %v1923
      %v1925 = vpop.f32.mrf.mxu0
      %v1926 = vpop.f32.mrf.mxu0
      %v1927 = vadd.f32 0.0, %v1926
      %v1928 = vpop.f32.mrf.mxu0
      %1929 = vmatprep.mubr.bf16.mxu0 0
      %1930 = vmatmul.mubr.bf16.gmra.mxu0 %v1772
      %v1931 = vpop.f32.mrf.mxu0
      %v1932 = vadd.f32 0.0, %v1931
      %v1933 = vpop.f32.mrf.mxu0
      %v1934 = vpop.f32.mrf.mxu0
      %v1935 = vadd.f32 0.0, %v1934
      %v1936 = vpop.f32.mrf.mxu0
      %1937 = vdwg.mxu0
      %v1938 = vadd.f32 %v1486, %v1812
      %v1939 = vadd.f32 %v1489, %v1815
      %v1940 = vadd.f32 %v1494, %v1820
      %v1941 = vadd.f32 %v1497, %v1823
      %v1942 = vadd.f32 %v1502, %v1828
      %v1943 = vadd.f32 %v1505, %v1831
      %v1944 = vadd.f32 %v1510, %v1836
      %v1945 = vadd.f32 %v1513, %v1839
      %v1946 = vadd.f32 %v1518, %v1844
      %v1947 = vadd.f32 %v1521, %v1847
      %v1948 = vadd.f32 %v1526, %v1852
      %v1949 = vadd.f32 %v1529, %v1855
      %v1950 = vadd.f32 %v1534, %v1860
      %v1951 = vadd.f32 %v1537, %v1863
      %v1952 = vadd.f32 %v1542, %v1868
      %v1953 = vadd.f32 %v1545, %v1871
      %v1954 = vadd.f32 %v1550, %v1876
      %v1955 = vadd.f32 %v1553, %v1879
      %v1956 = vadd.f32 %v1558, %v1884
      %v1957 = vadd.f32 %v1561, %v1887
      %v1958 = vadd.f32 %v1566, %v1892
      %v1959 = vadd.f32 %v1569, %v1895
      %v1960 = vadd.f32 %v1574, %v1900
      %v1961 = vadd.f32 %v1577, %v1903
      %v1962 = vadd.f32 %v1582, %v1908
      %v1963 = vadd.f32 %v1585, %v1911
      %v1964 = vadd.f32 %v1590, %v1916
      %v1965 = vadd.f32 %v1593, %v1919
      %v1966 = vadd.f32 %v1598, %v1924
      %v1967 = vadd.f32 %v1601, %v1927
      %v1968 = vadd.f32 %v1606, %v1932
      %v1969 = vadd.f32 %v1609, %v1935
      %v1970 = vld [vmem:[%s253 + $0xc] sm:$0xf]
      %v1971 = vld [vmem:[%s253 + $0x10] sm:$0xf]
      %v1972 = vld [vmem:[%s253 + $0x38] sm:$0xf]
      %v1973 = vld [vmem:[%s253 + $0x3c] sm:$0xf]
      %v1974 = vld [vmem:[%s253 + $0x64] sm:$0xf]
      %v1975 = vld [vmem:[%s253 + $0x68] sm:$0xf]
      %v1976 = vld [vmem:[%s253 + $0x90] sm:$0xf]
      %v1977 = vld [vmem:[%s253 + $0x94] sm:$0xf]
      %v1978 = vld [vmem:[%s253 + $0xbc] sm:$0xf]
      %v1979 = vld [vmem:[%s253 + $0xc0] sm:$0xf]
      %v1980 = vld [vmem:[%s253 + $0xe8] sm:$0xf]
      %v1981 = vld [vmem:[%s253 + $0xec] sm:$0xf]
      %v1982 = vld [vmem:[%s253 + $0x114] sm:$0xf]
      %v1983 = vld [vmem:[%s253 + $0x118] sm:$0xf]
      %v1984 = vld [vmem:[%s253 + $0x140] sm:$0xf]
      %v1985 = vld [vmem:[%s253 + $0x144] sm:$0xf]
      %v1986 = vld [vmem:[%s253 + $0x16c] sm:$0xf]
      %v1987 = vld [vmem:[%s253 + $0x170] sm:$0xf]
      %v1988 = vld [vmem:[%s253 + $0x198] sm:$0xf]
      %v1989 = vld [vmem:[%s253 + $0x19c] sm:$0xf]
      %v1990 = vld [vmem:[%s253 + $0x1c4] sm:$0xf]
      %v1991 = vld [vmem:[%s253 + $0x1c8] sm:$0xf]
      %v1992 = vld [vmem:[%s253 + $0x1f0] sm:$0xf]
      %v1993 = vld [vmem:[%s253 + $0x1f4] sm:$0xf]
      %v1994 = vld [vmem:[%s253 + $0x21c] sm:$0xf]
      %v1995 = vld [vmem:[%s253 + $0x220] sm:$0xf]
      %v1996 = vld [vmem:[%s253 + $0x248] sm:$0xf]
      %v1997 = vld [vmem:[%s253 + $0x24c] sm:$0xf]
      %v1998 = vld [vmem:[%s253 + $0x274] sm:$0xf]
      %v1999 = vld [vmem:[%s253 + $0x278] sm:$0xf]
      %v2000 = vld [vmem:[%s253 + $0x2a0] sm:$0xf]
      %v2001 = vld [vmem:[%s253 + $0x2a4] sm:$0xf]
      %s2002 = scalar_lea.vmem %s2, 12
      %v2003 = vld [vmem:[%s2002] sm:$0xf]
      %v2036 = vunpack.c.l.b16 %v1970
      %v2037 = vunpack.c.l.b16 %v1971
      %v2038 = vunpack.c.l.b16 %v1972
      %v2039 = vunpack.c.l.b16 %v1973
      %v2040 = vunpack.c.l.b16 %v1974
      %v2041 = vunpack.c.l.b16 %v1975
      %v2042 = vunpack.c.l.b16 %v1976
      %v2043 = vunpack.c.l.b16 %v1977
      %v2044 = vunpack.c.l.b16 %v1978
      %v2045 = vunpack.c.l.b16 %v1979
      %v2046 = vunpack.c.l.b16 %v1980
      %v2047 = vunpack.c.l.b16 %v1981
      %v2048 = vunpack.c.l.b16 %v1982
      %v2049 = vunpack.c.l.b16 %v1983
      %v2050 = vunpack.c.l.b16 %v1984
      %v2051 = vunpack.c.l.b16 %v1985
      %v2052 = vunpack.c.l.b16 %v1986
      %v2053 = vunpack.c.l.b16 %v1987
      %v2054 = vunpack.c.l.b16 %v1988
      %v2055 = vunpack.c.l.b16 %v1989
      %v2056 = vunpack.c.l.b16 %v1990
      %v2057 = vunpack.c.l.b16 %v1991
      %v2058 = vunpack.c.l.b16 %v1992
      %v2059 = vunpack.c.l.b16 %v1993
      %v2060 = vunpack.c.l.b16 %v1994
      %v2061 = vunpack.c.l.b16 %v1995
      %v2062 = vunpack.c.l.b16 %v1996
      %v2063 = vunpack.c.l.b16 %v1997
      %v2064 = vunpack.c.l.b16 %v1998
      %v2065 = vunpack.c.l.b16 %v1999
      %v2066 = vunpack.c.l.b16 %v2000
      %v2067 = vunpack.c.l.b16 %v2001
      %v2068 = vpack.c.b16 %v2037, %v2036
      %v2069 = vpack.c.b16 %v2039, %v2038
      %v2070 = vpack.c.b16 %v2041, %v2040
      %v2071 = vpack.c.b16 %v2043, %v2042
      %v2072 = vpack.c.b16 %v2045, %v2044
      %v2073 = vpack.c.b16 %v2047, %v2046
      %v2074 = vpack.c.b16 %v2049, %v2048
      %v2075 = vpack.c.b16 %v2051, %v2050
      %v2076 = vpack.c.b16 %v2053, %v2052
      %v2077 = vpack.c.b16 %v2055, %v2054
      %v2078 = vpack.c.b16 %v2057, %v2056
      %v2079 = vpack.c.b16 %v2059, %v2058
      %v2080 = vpack.c.b16 %v2061, %v2060
      %v2081 = vpack.c.b16 %v2063, %v2062
      %v2082 = vpack.c.b16 %v2065, %v2064
      %v2083 = vpack.c.b16 %v2067, %v2066
      %v2085 = vsel %vm553, %v2068, 0
      %v2088 = vsel %vm553, %v2069, 0
      %v2091 = vsel %vm553, %v2070, 0
      %v2094 = vsel %vm553, %v2071, 0
      %v2097 = vsel %vm553, %v2072, 0
      %v2100 = vsel %vm553, %v2073, 0
      %v2103 = vsel %vm553, %v2074, 0
      %v2106 = vsel %vm553, %v2075, 0
      %v2109 = vsel %vm553, %v2076, 0
      %v2112 = vsel %vm553, %v2077, 0
      %v2115 = vsel %vm553, %v2078, 0
      %v2118 = vsel %vm553, %v2079, 0
      %v2121 = vsel %vm553, %v2080, 0
      %v2124 = vsel %vm553, %v2081, 0
      %v2127 = vsel %vm553, %v2082, 0
      %v2130 = vsel %vm553, %v2083, 0
      %v2133 = vsel %vm602, %v2003, 0
      %2135 = vmatprep.subr.bf16.mxu0 0
      %2136 = vmatpush1.bf16.msra.mxu0 0
      %2137 = vmatprep.subr.bf16.mxu0 0
      %2138 = vmatpush1.bf16.msra.mxu0 0
      %2139 = vmatprep.subr.bf16.mxu0 0
      %2140 = vmatpush1.bf16.msra.mxu0 0
      %2141 = vmatprep.subr.bf16.mxu0 0
      %2142 = vmatpush1.bf16.msra.mxu0 0
      %2143 = vmatprep.subr.bf16.mxu0 0
      %2144 = vmatpush1.bf16.msra.mxu0 0
      %2145 = vmatprep.subr.bf16.mxu0 0
      %2146 = vmatpush1.bf16.msra.mxu0 0
      %2147 = vmatprep.subr.bf16.mxu0 0
      %2148 = vmatpush1.bf16.msra.mxu0 0
      %2149 = vmatprep.subr.bf16.mxu0 0
      %2150 = vmatpush1.bf16.msra.mxu0 %v2133
      %2151 = vmatprep.subr.bf16.mxu0 0
      %2152 = vmatpush2.bf16.msra.mxu0 0
      %2153 = vmatprep.subr.bf16.mxu0 0
      %2154 = vmatpush2.bf16.msra.mxu0 0
      %2155 = vmatprep.subr.bf16.mxu0 0
      %2156 = vmatpush2.bf16.msra.mxu0 0
      %2157 = vmatprep.subr.bf16.mxu0 0
      %2158 = vmatpush2.bf16.msra.mxu0 0
      %2159 = vmatprep.subr.bf16.mxu0 0
      %2160 = vmatpush2.bf16.msra.mxu0 0
      %2161 = vmatprep.subr.bf16.mxu0 0
      %2162 = vmatpush2.bf16.msra.mxu0 0
      %2163 = vmatprep.subr.bf16.mxu0 0
      %2164 = vmatpush2.bf16.msra.mxu0 0
      %2165 = vmatprep.subr.bf16.mxu0 0
      %2166 = vmatpush2.bf16.msra.mxu0 0
      %2167 = vmatprep.mubr.bf16.mxu0 0
      %2168 = vmatmul.mubr.bf16.gmra.mxu0 %v2085
      %v2169 = vpop.f32.mrf.mxu0
      %v2170 = vadd.f32 0.0, %v2169
      %v2171 = vpop.f32.mrf.mxu0
      %v2172 = vpop.f32.mrf.mxu0
      %v2173 = vadd.f32 0.0, %v2172
      %v2174 = vpop.f32.mrf.mxu0
      %2175 = vmatprep.mubr.bf16.mxu0 0
      %2176 = vmatmul.mubr.bf16.gmra.mxu0 %v2088
      %v2177 = vpop.f32.mrf.mxu0
      %v2178 = vadd.f32 0.0, %v2177
      %v2179 = vpop.f32.mrf.mxu0
      %v2180 = vpop.f32.mrf.mxu0
      %v2181 = vadd.f32 0.0, %v2180
      %v2182 = vpop.f32.mrf.mxu0
      %2183 = vmatprep.mubr.bf16.mxu0 0
      %2184 = vmatmul.mubr.bf16.gmra.mxu0 %v2091
      %v2185 = vpop.f32.mrf.mxu0
      %v2186 = vadd.f32 0.0, %v2185
      %v2187 = vpop.f32.mrf.mxu0
      %v2188 = vpop.f32.mrf.mxu0
      %v2189 = vadd.f32 0.0, %v2188
      %v2190 = vpop.f32.mrf.mxu0
      %2191 = vmatprep.mubr.bf16.mxu0 0
      %2192 = vmatmul.mubr.bf16.gmra.mxu0 %v2094
      %v2193 = vpop.f32.mrf.mxu0
      %v2194 = vadd.f32 0.0, %v2193
      %v2195 = vpop.f32.mrf.mxu0
      %v2196 = vpop.f32.mrf.mxu0
      %v2197 = vadd.f32 0.0, %v2196
      %v2198 = vpop.f32.mrf.mxu0
      %2199 = vmatprep.mubr.bf16.mxu0 0
      %2200 = vmatmul.mubr.bf16.gmra.mxu0 %v2097
      %v2201 = vpop.f32.mrf.mxu0
      %v2202 = vadd.f32 0.0, %v2201
      %v2203 = vpop.f32.mrf.mxu0
      %v2204 = vpop.f32.mrf.mxu0
      %v2205 = vadd.f32 0.0, %v2204
      %v2206 = vpop.f32.mrf.mxu0
      %2207 = vmatprep.mubr.bf16.mxu0 0
      %2208 = vmatmul.mubr.bf16.gmra.mxu0 %v2100
      %v2209 = vpop.f32.mrf.mxu0
      %v2210 = vadd.f32 0.0, %v2209
      %v2211 = vpop.f32.mrf.mxu0
      %v2212 = vpop.f32.mrf.mxu0
      %v2213 = vadd.f32 0.0, %v2212
      %v2214 = vpop.f32.mrf.mxu0
      %2215 = vmatprep.mubr.bf16.mxu0 0
      %2216 = vmatmul.mubr.bf16.gmra.mxu0 %v2103
      %v2217 = vpop.f32.mrf.mxu0
      %v2218 = vadd.f32 0.0, %v2217
      %v2219 = vpop.f32.mrf.mxu0
      %v2220 = vpop.f32.mrf.mxu0
      %v2221 = vadd.f32 0.0, %v2220
      %v2222 = vpop.f32.mrf.mxu0
      %2223 = vmatprep.mubr.bf16.mxu0 0
      %2224 = vmatmul.mubr.bf16.gmra.mxu0 %v2106
      %v2225 = vpop.f32.mrf.mxu0
      %v2226 = vadd.f32 0.0, %v2225
      %v2227 = vpop.f32.mrf.mxu0
      %v2228 = vpop.f32.mrf.mxu0
      %v2229 = vadd.f32 0.0, %v2228
      %v2230 = vpop.f32.mrf.mxu0
      %2231 = vmatprep.mubr.bf16.mxu0 0
      %2232 = vmatmul.mubr.bf16.gmra.mxu0 %v2109
      %v2233 = vpop.f32.mrf.mxu0
      %v2234 = vadd.f32 0.0, %v2233
      %v2235 = vpop.f32.mrf.mxu0
      %v2236 = vpop.f32.mrf.mxu0
      %v2237 = vadd.f32 0.0, %v2236
      %v2238 = vpop.f32.mrf.mxu0
      %2239 = vmatprep.mubr.bf16.mxu0 0
      %2240 = vmatmul.mubr.bf16.gmra.mxu0 %v2112
      %v2241 = vpop.f32.mrf.mxu0
      %v2242 = vadd.f32 0.0, %v2241
      %v2243 = vpop.f32.mrf.mxu0
      %v2244 = vpop.f32.mrf.mxu0
      %v2245 = vadd.f32 0.0, %v2244
      %v2246 = vpop.f32.mrf.mxu0
      %2247 = vmatprep.mubr.bf16.mxu0 0
      %2248 = vmatmul.mubr.bf16.gmra.mxu0 %v2115
      %v2249 = vpop.f32.mrf.mxu0
      %v2250 = vadd.f32 0.0, %v2249
      %v2251 = vpop.f32.mrf.mxu0
      %v2252 = vpop.f32.mrf.mxu0
      %v2253 = vadd.f32 0.0, %v2252
      %v2254 = vpop.f32.mrf.mxu0
      %2255 = vmatprep.mubr.bf16.mxu0 0
      %2256 = vmatmul.mubr.bf16.gmra.mxu0 %v2118
      %v2257 = vpop.f32.mrf.mxu0
      %v2258 = vadd.f32 0.0, %v2257
      %v2259 = vpop.f32.mrf.mxu0
      %v2260 = vpop.f32.mrf.mxu0
      %v2261 = vadd.f32 0.0, %v2260
      %v2262 = vpop.f32.mrf.mxu0
      %2263 = vmatprep.mubr.bf16.mxu0 0
      %2264 = vmatmul.mubr.bf16.gmra.mxu0 %v2121
      %v2265 = vpop.f32.mrf.mxu0
      %v2266 = vadd.f32 0.0, %v2265
      %v2267 = vpop.f32.mrf.mxu0
      %v2268 = vpop.f32.mrf.mxu0
      %v2269 = vadd.f32 0.0, %v2268
      %v2270 = vpop.f32.mrf.mxu0
      %2271 = vmatprep.mubr.bf16.mxu0 0
      %2272 = vmatmul.mubr.bf16.gmra.mxu0 %v2124
      %v2273 = vpop.f32.mrf.mxu0
      %v2274 = vadd.f32 0.0, %v2273
      %v2275 = vpop.f32.mrf.mxu0
      %v2276 = vpop.f32.mrf.mxu0
      %v2277 = vadd.f32 0.0, %v2276
      %v2278 = vpop.f32.mrf.mxu0
      %2279 = vmatprep.mubr.bf16.mxu0 0
      %2280 = vmatmul.mubr.bf16.gmra.mxu0 %v2127
      %v2281 = vpop.f32.mrf.mxu0
      %v2282 = vadd.f32 0.0, %v2281
      %v2283 = vpop.f32.mrf.mxu0
      %v2284 = vpop.f32.mrf.mxu0
      %v2285 = vadd.f32 0.0, %v2284
      %v2286 = vpop.f32.mrf.mxu0
      %2287 = vmatprep.mubr.bf16.mxu0 0
      %2288 = vmatmul.mubr.bf16.gmra.mxu0 %v2130
      %v2289 = vpop.f32.mrf.mxu0
      %v2290 = vadd.f32 0.0, %v2289
      %v2291 = vpop.f32.mrf.mxu0
      %v2292 = vpop.f32.mrf.mxu0
      %v2293 = vadd.f32 0.0, %v2292
      %v2294 = vpop.f32.mrf.mxu0
      %2295 = vdwg.mxu0
      %v2296 = vadd.f32 %v1938, %v2170
      %v2297 = vadd.f32 %v1939, %v2173
      %v2298 = vadd.f32 %v1940, %v2178
      %v2299 = vadd.f32 %v1941, %v2181
      %v2300 = vadd.f32 %v1942, %v2186
      %v2301 = vadd.f32 %v1943, %v2189
      %v2302 = vadd.f32 %v1944, %v2194
      %v2303 = vadd.f32 %v1945, %v2197
      %v2304 = vadd.f32 %v1946, %v2202
      %v2305 = vadd.f32 %v1947, %v2205
      %v2306 = vadd.f32 %v1948, %v2210
      %v2307 = vadd.f32 %v1949, %v2213
      %v2308 = vadd.f32 %v1950, %v2218
      %v2309 = vadd.f32 %v1951, %v2221
      %v2310 = vadd.f32 %v1952, %v2226
      %v2311 = vadd.f32 %v1953, %v2229
      %v2312 = vadd.f32 %v1954, %v2234
      %v2313 = vadd.f32 %v1955, %v2237
      %v2314 = vadd.f32 %v1956, %v2242
      %v2315 = vadd.f32 %v1957, %v2245
      %v2316 = vadd.f32 %v1958, %v2250
      %v2317 = vadd.f32 %v1959, %v2253
      %v2318 = vadd.f32 %v1960, %v2258
      %v2319 = vadd.f32 %v1961, %v2261
      %v2320 = vadd.f32 %v1962, %v2266
      %v2321 = vadd.f32 %v1963, %v2269
      %v2322 = vadd.f32 %v1964, %v2274
      %v2323 = vadd.f32 %v1965, %v2277
      %v2324 = vadd.f32 %v1966, %v2282
      %v2325 = vadd.f32 %v1967, %v2285
      %v2326 = vadd.f32 %v1968, %v2290
      %v2327 = vadd.f32 %v1969, %v2293
      %s2328 = scalar_lea.vmem %s2, 16
      %v2329 = vld [vmem:[%s2328] sm:$0xf]
      %v2331 = vsel %vm602, %v2329, 0
      %2333 = vmatprep.subr.bf16.mxu0 0
      %2334 = vmatpush1.bf16.msra.mxu0 0
      %2335 = vmatprep.subr.bf16.mxu0 0
      %2336 = vmatpush1.bf16.msra.mxu0 0
      %2337 = vmatprep.subr.bf16.mxu0 0
      %2338 = vmatpush1.bf16.msra.mxu0 0
      %2339 = vmatprep.subr.bf16.mxu0 0
      %2340 = vmatpush1.bf16.msra.mxu0 0
      %2341 = vmatprep.subr.bf16.mxu0 0
      %2342 = vmatpush1.bf16.msra.mxu0 0
      %2343 = vmatprep.subr.bf16.mxu0 0
      %2344 = vmatpush1.bf16.msra.mxu0 0
      %2345 = vmatprep.subr.bf16.mxu0 0
      %2346 = vmatpush1.bf16.msra.mxu0 0
      %2347 = vmatprep.subr.bf16.mxu0 0
      %2348 = vmatpush1.bf16.msra.mxu0 %v2331
      %2349 = vmatprep.subr.bf16.mxu0 0
      %2350 = vmatpush2.bf16.msra.mxu0 0
      %2351 = vmatprep.subr.bf16.mxu0 0
      %2352 = vmatpush2.bf16.msra.mxu0 0
      %2353 = vmatprep.subr.bf16.mxu0 0
      %2354 = vmatpush2.bf16.msra.mxu0 0
      %2355 = vmatprep.subr.bf16.mxu0 0
      %2356 = vmatpush2.bf16.msra.mxu0 0
      %2357 = vmatprep.subr.bf16.mxu0 0
      %2358 = vmatpush2.bf16.msra.mxu0 0
      %2359 = vmatprep.subr.bf16.mxu0 0
      %2360 = vmatpush2.bf16.msra.mxu0 0
      %2361 = vmatprep.subr.bf16.mxu0 0
      %2362 = vmatpush2.bf16.msra.mxu0 0
      %2363 = vmatprep.subr.bf16.mxu0 0
      %2364 = vmatpush2.bf16.msra.mxu0 0
      %2365 = vmatprep.mubr.bf16.mxu0 0
      %2366 = vmatmul.mubr.bf16.gmra.mxu0 %v555
      %v2367 = vpop.f32.mrf.mxu0
      %v2368 = vadd.f32 0.0, %v2367
      %v2369 = vpop.f32.mrf.mxu0
      %v2370 = vpop.f32.mrf.mxu0
      %v2371 = vadd.f32 0.0, %v2370
      %v2372 = vpop.f32.mrf.mxu0
      %2373 = vmatprep.mubr.bf16.mxu0 0
      %2374 = vmatmul.mubr.bf16.gmra.mxu0 %v558
      %v2375 = vpop.f32.mrf.mxu0
      %v2376 = vadd.f32 0.0, %v2375
      %v2377 = vpop.f32.mrf.mxu0
      %v2378 = vpop.f32.mrf.mxu0
      %v2379 = vadd.f32 0.0, %v2378
      %v2380 = vpop.f32.mrf.mxu0
      %2381 = vmatprep.mubr.bf16.mxu0 0
      %2382 = vmatmul.mubr.bf16.gmra.mxu0 %v561
      %v2383 = vpop.f32.mrf.mxu0
      %v2384 = vadd.f32 0.0, %v2383
      %v2385 = vpop.f32.mrf.mxu0
      %v2386 = vpop.f32.mrf.mxu0
      %v2387 = vadd.f32 0.0, %v2386
      %v2388 = vpop.f32.mrf.mxu0
      %2389 = vmatprep.mubr.bf16.mxu0 0
      %2390 = vmatmul.mubr.bf16.gmra.mxu0 %v564
      %v2391 = vpop.f32.mrf.mxu0
      %v2392 = vadd.f32 0.0, %v2391
      %v2393 = vpop.f32.mrf.mxu0
      %v2394 = vpop.f32.mrf.mxu0
      %v2395 = vadd.f32 0.0, %v2394
      %v2396 = vpop.f32.mrf.mxu0
      %2397 = vmatprep.mubr.bf16.mxu0 0
      %2398 = vmatmul.mubr.bf16.gmra.mxu0 %v567
      %v2399 = vpop.f32.mrf.mxu0
      %v2400 = vadd.f32 0.0, %v2399
      %v2401 = vpop.f32.mrf.mxu0
      %v2402 = vpop.f32.mrf.mxu0
      %v2403 = vadd.f32 0.0, %v2402
      %v2404 = vpop.f32.mrf.mxu0
      %2405 = vmatprep.mubr.bf16.mxu0 0
      %2406 = vmatmul.mubr.bf16.gmra.mxu0 %v570
      %v2407 = vpop.f32.mrf.mxu0
      %v2408 = vadd.f32 0.0, %v2407
      %v2409 = vpop.f32.mrf.mxu0
      %v2410 = vpop.f32.mrf.mxu0
      %v2411 = vadd.f32 0.0, %v2410
      %v2412 = vpop.f32.mrf.mxu0
      %2413 = vmatprep.mubr.bf16.mxu0 0
      %2414 = vmatmul.mubr.bf16.gmra.mxu0 %v573
      %v2415 = vpop.f32.mrf.mxu0
      %v2416 = vadd.f32 0.0, %v2415
      %v2417 = vpop.f32.mrf.mxu0
      %v2418 = vpop.f32.mrf.mxu0
      %v2419 = vadd.f32 0.0, %v2418
      %v2420 = vpop.f32.mrf.mxu0
      %2421 = vmatprep.mubr.bf16.mxu0 0
      %2422 = vmatmul.mubr.bf16.gmra.mxu0 %v576
      %v2423 = vpop.f32.mrf.mxu0
      %v2424 = vadd.f32 0.0, %v2423
      %v2425 = vpop.f32.mrf.mxu0
      %v2426 = vpop.f32.mrf.mxu0
      %v2427 = vadd.f32 0.0, %v2426
      %v2428 = vpop.f32.mrf.mxu0
      %2429 = vmatprep.mubr.bf16.mxu0 0
      %2430 = vmatmul.mubr.bf16.gmra.mxu0 %v579
      %v2431 = vpop.f32.mrf.mxu0
      %v2432 = vadd.f32 0.0, %v2431
      %v2433 = vpop.f32.mrf.mxu0
      %v2434 = vpop.f32.mrf.mxu0
      %v2435 = vadd.f32 0.0, %v2434
      %v2436 = vpop.f32.mrf.mxu0
      %2437 = vmatprep.mubr.bf16.mxu0 0
      %2438 = vmatmul.mubr.bf16.gmra.mxu0 %v582
      %v2439 = vpop.f32.mrf.mxu0
      %v2440 = vadd.f32 0.0, %v2439
      %v2441 = vpop.f32.mrf.mxu0
      %v2442 = vpop.f32.mrf.mxu0
      %v2443 = vadd.f32 0.0, %v2442
      %v2444 = vpop.f32.mrf.mxu0
      %2445 = vmatprep.mubr.bf16.mxu0 0
      %2446 = vmatmul.mubr.bf16.gmra.mxu0 %v585
      %v2447 = vpop.f32.mrf.mxu0
      %v2448 = vadd.f32 0.0, %v2447
      %v2449 = vpop.f32.mrf.mxu0
      %v2450 = vpop.f32.mrf.mxu0
      %v2451 = vadd.f32 0.0, %v2450
      %v2452 = vpop.f32.mrf.mxu0
      %2453 = vmatprep.mubr.bf16.mxu0 0
      %2454 = vmatmul.mubr.bf16.gmra.mxu0 %v588
      %v2455 = vpop.f32.mrf.mxu0
      %v2456 = vadd.f32 0.0, %v2455
      %v2457 = vpop.f32.mrf.mxu0
      %v2458 = vpop.f32.mrf.mxu0
      %v2459 = vadd.f32 0.0, %v2458
      %v2460 = vpop.f32.mrf.mxu0
      %2461 = vmatprep.mubr.bf16.mxu0 0
      %2462 = vmatmul.mubr.bf16.gmra.mxu0 %v591
      %v2463 = vpop.f32.mrf.mxu0
      %v2464 = vadd.f32 0.0, %v2463
      %v2465 = vpop.f32.mrf.mxu0
      %v2466 = vpop.f32.mrf.mxu0
      %v2467 = vadd.f32 0.0, %v2466
      %v2468 = vpop.f32.mrf.mxu0
      %2469 = vmatprep.mubr.bf16.mxu0 0
      %2470 = vmatmul.mubr.bf16.gmra.mxu0 %v594
      %v2471 = vpop.f32.mrf.mxu0
      %v2472 = vadd.f32 0.0, %v2471
      %v2473 = vpop.f32.mrf.mxu0
      %v2474 = vpop.f32.mrf.mxu0
      %v2475 = vadd.f32 0.0, %v2474
      %v2476 = vpop.f32.mrf.mxu0
      %2477 = vmatprep.mubr.bf16.mxu0 0
      %2478 = vmatmul.mubr.bf16.gmra.mxu0 %v597
      %v2479 = vpop.f32.mrf.mxu0
      %v2480 = vadd.f32 0.0, %v2479
      %v2481 = vpop.f32.mrf.mxu0
      %v2482 = vpop.f32.mrf.mxu0
      %v2483 = vadd.f32 0.0, %v2482
      %v2484 = vpop.f32.mrf.mxu0
      %2485 = vmatprep.mubr.bf16.mxu0 0
      %2486 = vmatmul.mubr.bf16.gmra.mxu0 %v600
      %v2487 = vpop.f32.mrf.mxu0
      %v2488 = vadd.f32 0.0, %v2487
      %v2489 = vpop.f32.mrf.mxu0
      %v2490 = vpop.f32.mrf.mxu0
      %v2491 = vadd.f32 0.0, %v2490
      %v2492 = vpop.f32.mrf.mxu0
      %2493 = vdwg.mxu0
      %v2494 = vadd.f32 %v2296, %v2368
      %v2495 = vadd.f32 %v2297, %v2371
      %v2496 = vadd.f32 %v2298, %v2376
      %v2497 = vadd.f32 %v2299, %v2379
      %v2498 = vadd.f32 %v2300, %v2384
      %v2499 = vadd.f32 %v2301, %v2387
      %v2500 = vadd.f32 %v2302, %v2392
      %v2501 = vadd.f32 %v2303, %v2395
      %v2502 = vadd.f32 %v2304, %v2400
      %v2503 = vadd.f32 %v2305, %v2403
      %v2504 = vadd.f32 %v2306, %v2408
      %v2505 = vadd.f32 %v2307, %v2411
      %v2506 = vadd.f32 %v2308, %v2416
      %v2507 = vadd.f32 %v2309, %v2419
      %v2508 = vadd.f32 %v2310, %v2424
      %v2509 = vadd.f32 %v2311, %v2427
      %v2510 = vadd.f32 %v2312, %v2432
      %v2511 = vadd.f32 %v2313, %v2435
      %v2512 = vadd.f32 %v2314, %v2440
      %v2513 = vadd.f32 %v2315, %v2443
      %v2514 = vadd.f32 %v2316, %v2448
      %v2515 = vadd.f32 %v2317, %v2451
      %v2516 = vadd.f32 %v2318, %v2456
      %v2517 = vadd.f32 %v2319, %v2459
      %v2518 = vadd.f32 %v2320, %v2464
      %v2519 = vadd.f32 %v2321, %v2467
      %v2520 = vadd.f32 %v2322, %v2472
      %v2521 = vadd.f32 %v2323, %v2475
      %v2522 = vadd.f32 %v2324, %v2480
      %v2523 = vadd.f32 %v2325, %v2483
      %v2524 = vadd.f32 %v2326, %v2488
      %v2525 = vadd.f32 %v2327, %v2491
      %v2526 = vld [vmem:[%s253 + $0x18] sm:$0xf]
      %v2527 = vld [vmem:[%s253 + $0x1c] sm:$0xf]
      %v2528 = vld [vmem:[%s253 + $0x44] sm:$0xf]
      %v2529 = vld [vmem:[%s253 + $0x48] sm:$0xf]
      %v2530 = vld [vmem:[%s253 + $0x70] sm:$0xf]
      %v2531 = vld [vmem:[%s253 + $0x74] sm:$0xf]
      %v2532 = vld [vmem:[%s253 + $0x9c] sm:$0xf]
      %v2533 = vld [vmem:[%s253 + $0xa0] sm:$0xf]
      %v2534 = vld [vmem:[%s253 + $0xc8] sm:$0xf]
      %v2535 = vld [vmem:[%s253 + $0xcc] sm:$0xf]
      %v2536 = vld [vmem:[%s253 + $0xf4] sm:$0xf]
      %v2537 = vld [vmem:[%s253 + $0xf8] sm:$0xf]
      %v2538 = vld [vmem:[%s253 + $0x120] sm:$0xf]
      %v2539 = vld [vmem:[%s253 + $0x124] sm:$0xf]
      %v2540 = vld [vmem:[%s253 + $0x14c] sm:$0xf]
      %v2541 = vld [vmem:[%s253 + $0x150] sm:$0xf]
      %v2542 = vld [vmem:[%s253 + $0x178] sm:$0xf]
      %v2543 = vld [vmem:[%s253 + $0x17c] sm:$0xf]
      %v2544 = vld [vmem:[%s253 + $0x1a4] sm:$0xf]
      %v2545 = vld [vmem:[%s253 + $0x1a8] sm:$0xf]
      %v2546 = vld [vmem:[%s253 + $0x1d0] sm:$0xf]
      %v2547 = vld [vmem:[%s253 + $0x1d4] sm:$0xf]
      %v2548 = vld [vmem:[%s253 + $0x1fc] sm:$0xf]
      %v2549 = vld [vmem:[%s253 + $0x200] sm:$0xf]
      %v2550 = vld [vmem:[%s253 + $0x228] sm:$0xf]
      %v2551 = vld [vmem:[%s253 + $0x22c] sm:$0xf]
      %v2552 = vld [vmem:[%s253 + $0x254] sm:$0xf]
      %v2553 = vld [vmem:[%s253 + $0x258] sm:$0xf]
      %v2554 = vld [vmem:[%s253 + $0x280] sm:$0xf]
      %v2555 = vld [vmem:[%s253 + $0x284] sm:$0xf]
      %v2556 = vld [vmem:[%s253 + $0x2ac] sm:$0xf]
      %v2557 = vld [vmem:[%s253 + $0x2b0] sm:$0xf]
      %s2558 = scalar_lea.vmem %s2, 20
      %v2559 = vld [vmem:[%s2558] sm:$0xf]
      %v2592 = vunpack.c.l.b16 %v2526
      %v2593 = vunpack.c.l.b16 %v2527
      %v2594 = vunpack.c.l.b16 %v2528
      %v2595 = vunpack.c.l.b16 %v2529
      %v2596 = vunpack.c.l.b16 %v2530
      %v2597 = vunpack.c.l.b16 %v2531
      %v2598 = vunpack.c.l.b16 %v2532
      %v2599 = vunpack.c.l.b16 %v2533
      %v2600 = vunpack.c.l.b16 %v2534
      %v2601 = vunpack.c.l.b16 %v2535
      %v2602 = vunpack.c.l.b16 %v2536
      %v2603 = vunpack.c.l.b16 %v2537
      %v2604 = vunpack.c.l.b16 %v2538
      %v2605 = vunpack.c.l.b16 %v2539
      %v2606 = vunpack.c.l.b16 %v2540
      %v2607 = vunpack.c.l.b16 %v2541
      %v2608 = vunpack.c.l.b16 %v2542
      %v2609 = vunpack.c.l.b16 %v2543
      %v2610 = vunpack.c.l.b16 %v2544
      %v2611 = vunpack.c.l.b16 %v2545
      %v2612 = vunpack.c.l.b16 %v2546
      %v2613 = vunpack.c.l.b16 %v2547
      %v2614 = vunpack.c.l.b16 %v2548
      %v2615 = vunpack.c.l.b16 %v2549
      %v2616 = vunpack.c.l.b16 %v2550
      %v2617 = vunpack.c.l.b16 %v2551
      %v2618 = vunpack.c.l.b16 %v2552
      %v2619 = vunpack.c.l.b16 %v2553
      %v2620 = vunpack.c.l.b16 %v2554
      %v2621 = vunpack.c.l.b16 %v2555
      %v2622 = vunpack.c.l.b16 %v2556
      %v2623 = vunpack.c.l.b16 %v2557
      %v2624 = vpack.c.b16 %v2593, %v2592
      %v2625 = vpack.c.b16 %v2595, %v2594
      %v2626 = vpack.c.b16 %v2597, %v2596
      %v2627 = vpack.c.b16 %v2599, %v2598
      %v2628 = vpack.c.b16 %v2601, %v2600
      %v2629 = vpack.c.b16 %v2603, %v2602
      %v2630 = vpack.c.b16 %v2605, %v2604
      %v2631 = vpack.c.b16 %v2607, %v2606
      %v2632 = vpack.c.b16 %v2609, %v2608
      %v2633 = vpack.c.b16 %v2611, %v2610
      %v2634 = vpack.c.b16 %v2613, %v2612
      %v2635 = vpack.c.b16 %v2615, %v2614
      %v2636 = vpack.c.b16 %v2617, %v2616
      %v2637 = vpack.c.b16 %v2619, %v2618
      %v2638 = vpack.c.b16 %v2621, %v2620
      %v2639 = vpack.c.b16 %v2623, %v2622
      %v2641 = vsel %vm553, %v2624, 0
      %v2644 = vsel %vm553, %v2625, 0
      %v2647 = vsel %vm553, %v2626, 0
      %v2650 = vsel %vm553, %v2627, 0
      %v2653 = vsel %vm553, %v2628, 0
      %v2656 = vsel %vm553, %v2629, 0
      %v2659 = vsel %vm553, %v2630, 0
      %v2662 = vsel %vm553, %v2631, 0
      %v2665 = vsel %vm553, %v2632, 0
      %v2668 = vsel %vm553, %v2633, 0
      %v2671 = vsel %vm553, %v2634, 0
      %v2674 = vsel %vm553, %v2635, 0
      %v2677 = vsel %vm553, %v2636, 0
      %v2680 = vsel %vm553, %v2637, 0
      %v2683 = vsel %vm553, %v2638, 0
      %v2686 = vsel %vm553, %v2639, 0
      %v2689 = vsel %vm602, %v2559, 0
      %2691 = vmatprep.subr.bf16.mxu0 0
      %2692 = vmatpush1.bf16.msra.mxu0 0
      %2693 = vmatprep.subr.bf16.mxu0 0
      %2694 = vmatpush1.bf16.msra.mxu0 0
      %2695 = vmatprep.subr.bf16.mxu0 0
      %2696 = vmatpush1.bf16.msra.mxu0 0
      %2697 = vmatprep.subr.bf16.mxu0 0
      %2698 = vmatpush1.bf16.msra.mxu0 0
      %2699 = vmatprep.subr.bf16.mxu0 0
      %2700 = vmatpush1.bf16.msra.mxu0 0
      %2701 = vmatprep.subr.bf16.mxu0 0
      %2702 = vmatpush1.bf16.msra.mxu0 0
      %2703 = vmatprep.subr.bf16.mxu0 0
      %2704 = vmatpush1.bf16.msra.mxu0 0
      %2705 = vmatprep.subr.bf16.mxu0 0
      %2706 = vmatpush1.bf16.msra.mxu0 %v2689
      %2707 = vmatprep.subr.bf16.mxu0 0
      %2708 = vmatpush2.bf16.msra.mxu0 0
      %2709 = vmatprep.subr.bf16.mxu0 0
      %2710 = vmatpush2.bf16.msra.mxu0 0
      %2711 = vmatprep.subr.bf16.mxu0 0
      %2712 = vmatpush2.bf16.msra.mxu0 0
      %2713 = vmatprep.subr.bf16.mxu0 0
      %2714 = vmatpush2.bf16.msra.mxu0 0
      %2715 = vmatprep.subr.bf16.mxu0 0
      %2716 = vmatpush2.bf16.msra.mxu0 0
      %2717 = vmatprep.subr.bf16.mxu0 0
      %2718 = vmatpush2.bf16.msra.mxu0 0
      %2719 = vmatprep.subr.bf16.mxu0 0
      %2720 = vmatpush2.bf16.msra.mxu0 0
      %2721 = vmatprep.subr.bf16.mxu0 0
      %2722 = vmatpush2.bf16.msra.mxu0 0
      %2723 = vmatprep.mubr.bf16.mxu0 0
      %2724 = vmatmul.mubr.bf16.gmra.mxu0 %v2641
      %v2725 = vpop.f32.mrf.mxu0
      %v2726 = vadd.f32 0.0, %v2725
      %v2727 = vpop.f32.mrf.mxu0
      %v2728 = vpop.f32.mrf.mxu0
      %v2729 = vadd.f32 0.0, %v2728
      %v2730 = vpop.f32.mrf.mxu0
      %2731 = vmatprep.mubr.bf16.mxu0 0
      %2732 = vmatmul.mubr.bf16.gmra.mxu0 %v2644
      %v2733 = vpop.f32.mrf.mxu0
      %v2734 = vadd.f32 0.0, %v2733
      %v2735 = vpop.f32.mrf.mxu0
      %v2736 = vpop.f32.mrf.mxu0
      %v2737 = vadd.f32 0.0, %v2736
      %v2738 = vpop.f32.mrf.mxu0
      %2739 = vmatprep.mubr.bf16.mxu0 0
      %2740 = vmatmul.mubr.bf16.gmra.mxu0 %v2647
      %v2741 = vpop.f32.mrf.mxu0
      %v2742 = vadd.f32 0.0, %v2741
      %v2743 = vpop.f32.mrf.mxu0
      %v2744 = vpop.f32.mrf.mxu0
      %v2745 = vadd.f32 0.0, %v2744
      %v2746 = vpop.f32.mrf.mxu0
      %2747 = vmatprep.mubr.bf16.mxu0 0
      %2748 = vmatmul.mubr.bf16.gmra.mxu0 %v2650
      %v2749 = vpop.f32.mrf.mxu0
      %v2750 = vadd.f32 0.0, %v2749
      %v2751 = vpop.f32.mrf.mxu0
      %v2752 = vpop.f32.mrf.mxu0
      %v2753 = vadd.f32 0.0, %v2752
      %v2754 = vpop.f32.mrf.mxu0
      %2755 = vmatprep.mubr.bf16.mxu0 0
      %2756 = vmatmul.mubr.bf16.gmra.mxu0 %v2653
      %v2757 = vpop.f32.mrf.mxu0
      %v2758 = vadd.f32 0.0, %v2757
      %v2759 = vpop.f32.mrf.mxu0
      %v2760 = vpop.f32.mrf.mxu0
      %v2761 = vadd.f32 0.0, %v2760
      %v2762 = vpop.f32.mrf.mxu0
      %2763 = vmatprep.mubr.bf16.mxu0 0
      %2764 = vmatmul.mubr.bf16.gmra.mxu0 %v2656
      %v2765 = vpop.f32.mrf.mxu0
      %v2766 = vadd.f32 0.0, %v2765
      %v2767 = vpop.f32.mrf.mxu0
      %v2768 = vpop.f32.mrf.mxu0
      %v2769 = vadd.f32 0.0, %v2768
      %v2770 = vpop.f32.mrf.mxu0
      %2771 = vmatprep.mubr.bf16.mxu0 0
      %2772 = vmatmul.mubr.bf16.gmra.mxu0 %v2659
      %v2773 = vpop.f32.mrf.mxu0
      %v2774 = vadd.f32 0.0, %v2773
      %v2775 = vpop.f32.mrf.mxu0
      %v2776 = vpop.f32.mrf.mxu0
      %v2777 = vadd.f32 0.0, %v2776
      %v2778 = vpop.f32.mrf.mxu0
      %2779 = vmatprep.mubr.bf16.mxu0 0
      %2780 = vmatmul.mubr.bf16.gmra.mxu0 %v2662
      %v2781 = vpop.f32.mrf.mxu0
      %v2782 = vadd.f32 0.0, %v2781
      %v2783 = vpop.f32.mrf.mxu0
      %v2784 = vpop.f32.mrf.mxu0
      %v2785 = vadd.f32 0.0, %v2784
      %v2786 = vpop.f32.mrf.mxu0
      %2787 = vmatprep.mubr.bf16.mxu0 0
      %2788 = vmatmul.mubr.bf16.gmra.mxu0 %v2665
      %v2789 = vpop.f32.mrf.mxu0
      %v2790 = vadd.f32 0.0, %v2789
      %v2791 = vpop.f32.mrf.mxu0
      %v2792 = vpop.f32.mrf.mxu0
      %v2793 = vadd.f32 0.0, %v2792
      %v2794 = vpop.f32.mrf.mxu0
      %2795 = vmatprep.mubr.bf16.mxu0 0
      %2796 = vmatmul.mubr.bf16.gmra.mxu0 %v2668
      %v2797 = vpop.f32.mrf.mxu0
      %v2798 = vadd.f32 0.0, %v2797
      %v2799 = vpop.f32.mrf.mxu0
      %v2800 = vpop.f32.mrf.mxu0
      %v2801 = vadd.f32 0.0, %v2800
      %v2802 = vpop.f32.mrf.mxu0
      %2803 = vmatprep.mubr.bf16.mxu0 0
      %2804 = vmatmul.mubr.bf16.gmra.mxu0 %v2671
      %v2805 = vpop.f32.mrf.mxu0
      %v2806 = vadd.f32 0.0, %v2805
      %v2807 = vpop.f32.mrf.mxu0
      %v2808 = vpop.f32.mrf.mxu0
      %v2809 = vadd.f32 0.0, %v2808
      %v2810 = vpop.f32.mrf.mxu0
      %2811 = vmatprep.mubr.bf16.mxu0 0
      %2812 = vmatmul.mubr.bf16.gmra.mxu0 %v2674
      %v2813 = vpop.f32.mrf.mxu0
      %v2814 = vadd.f32 0.0, %v2813
      %v2815 = vpop.f32.mrf.mxu0
      %v2816 = vpop.f32.mrf.mxu0
      %v2817 = vadd.f32 0.0, %v2816
      %v2818 = vpop.f32.mrf.mxu0
      %2819 = vmatprep.mubr.bf16.mxu0 0
      %2820 = vmatmul.mubr.bf16.gmra.mxu0 %v2677
      %v2821 = vpop.f32.mrf.mxu0
      %v2822 = vadd.f32 0.0, %v2821
      %v2823 = vpop.f32.mrf.mxu0
      %v2824 = vpop.f32.mrf.mxu0
      %v2825 = vadd.f32 0.0, %v2824
      %v2826 = vpop.f32.mrf.mxu0
      %2827 = vmatprep.mubr.bf16.mxu0 0
      %2828 = vmatmul.mubr.bf16.gmra.mxu0 %v2680
      %v2829 = vpop.f32.mrf.mxu0
      %v2830 = vadd.f32 0.0, %v2829
      %v2831 = vpop.f32.mrf.mxu0
      %v2832 = vpop.f32.mrf.mxu0
      %v2833 = vadd.f32 0.0, %v2832
      %v2834 = vpop.f32.mrf.mxu0
      %2835 = vmatprep.mubr.bf16.mxu0 0
      %2836 = vmatmul.mubr.bf16.gmra.mxu0 %v2683
      %v2837 = vpop.f32.mrf.mxu0
      %v2838 = vadd.f32 0.0, %v2837
      %v2839 = vpop.f32.mrf.mxu0
      %v2840 = vpop.f32.mrf.mxu0
      %v2841 = vadd.f32 0.0, %v2840
      %v2842 = vpop.f32.mrf.mxu0
      %2843 = vmatprep.mubr.bf16.mxu0 0
      %2844 = vmatmul.mubr.bf16.gmra.mxu0 %v2686
      %v2845 = vpop.f32.mrf.mxu0
      %v2846 = vadd.f32 0.0, %v2845
      %v2847 = vpop.f32.mrf.mxu0
      %v2848 = vpop.f32.mrf.mxu0
      %v2849 = vadd.f32 0.0, %v2848
      %v2850 = vpop.f32.mrf.mxu0
      %2851 = vdwg.mxu0
      %v2852 = vadd.f32 %v2494, %v2726
      %v2853 = vadd.f32 %v2495, %v2729
      %v2854 = vadd.f32 %v2496, %v2734
      %v2855 = vadd.f32 %v2497, %v2737
      %v2856 = vadd.f32 %v2498, %v2742
      %v2857 = vadd.f32 %v2499, %v2745
      %v2858 = vadd.f32 %v2500, %v2750
      %v2859 = vadd.f32 %v2501, %v2753
      %v2860 = vadd.f32 %v2502, %v2758
      %v2861 = vadd.f32 %v2503, %v2761
      %v2862 = vadd.f32 %v2504, %v2766
      %v2863 = vadd.f32 %v2505, %v2769
      %v2864 = vadd.f32 %v2506, %v2774
      %v2865 = vadd.f32 %v2507, %v2777
      %v2866 = vadd.f32 %v2508, %v2782
      %v2867 = vadd.f32 %v2509, %v2785
      %v2868 = vadd.f32 %v2510, %v2790
      %v2869 = vadd.f32 %v2511, %v2793
      %v2870 = vadd.f32 %v2512, %v2798
      %v2871 = vadd.f32 %v2513, %v2801
      %v2872 = vadd.f32 %v2514, %v2806
      %v2873 = vadd.f32 %v2515, %v2809
      %v2874 = vadd.f32 %v2516, %v2814
      %v2875 = vadd.f32 %v2517, %v2817
      %v2876 = vadd.f32 %v2518, %v2822
      %v2877 = vadd.f32 %v2519, %v2825
      %v2878 = vadd.f32 %v2520, %v2830
      %v2879 = vadd.f32 %v2521, %v2833
      %v2880 = vadd.f32 %v2522, %v2838
      %v2881 = vadd.f32 %v2523, %v2841
      %v2882 = vadd.f32 %v2524, %v2846
      %v2883 = vadd.f32 %v2525, %v2849
      %s2884 = scalar_lea.vmem %s246, 2112
      %v2885 = vld [vmem:[%s2884 + $0xc] sm:$0xf]
      %v2886 = vld [vmem:[%s2884 + $0x10] sm:$0xf]
      %v2887 = vld [vmem:[%s2884 + $0x38] sm:$0xf]
      %v2888 = vld [vmem:[%s2884 + $0x3c] sm:$0xf]
      %v2889 = vld [vmem:[%s2884 + $0x64] sm:$0xf]
      %v2890 = vld [vmem:[%s2884 + $0x68] sm:$0xf]
      %v2891 = vld [vmem:[%s2884 + $0x90] sm:$0xf]
      %v2892 = vld [vmem:[%s2884 + $0x94] sm:$0xf]
      %v2893 = vld [vmem:[%s2884 + $0xbc] sm:$0xf]
      %v2894 = vld [vmem:[%s2884 + $0xc0] sm:$0xf]
      %v2895 = vld [vmem:[%s2884 + $0xe8] sm:$0xf]
      %v2896 = vld [vmem:[%s2884 + $0xec] sm:$0xf]
      %v2897 = vld [vmem:[%s2884 + $0x114] sm:$0xf]
      %v2898 = vld [vmem:[%s2884 + $0x118] sm:$0xf]
      %v2899 = vld [vmem:[%s2884 + $0x140] sm:$0xf]
      %v2900 = vld [vmem:[%s2884 + $0x144] sm:$0xf]
      %v2901 = vld [vmem:[%s2884 + $0x16c] sm:$0xf]
      %v2902 = vld [vmem:[%s2884 + $0x170] sm:$0xf]
      %v2903 = vld [vmem:[%s2884 + $0x198] sm:$0xf]
      %v2904 = vld [vmem:[%s2884 + $0x19c] sm:$0xf]
      %v2905 = vld [vmem:[%s2884 + $0x1c4] sm:$0xf]
      %v2906 = vld [vmem:[%s2884 + $0x1c8] sm:$0xf]
      %v2907 = vld [vmem:[%s2884 + $0x1f0] sm:$0xf]
      %v2908 = vld [vmem:[%s2884 + $0x1f4] sm:$0xf]
      %v2909 = vld [vmem:[%s2884 + $0x21c] sm:$0xf]
      %v2910 = vld [vmem:[%s2884 + $0x220] sm:$0xf]
      %v2911 = vld [vmem:[%s2884 + $0x248] sm:$0xf]
      %v2912 = vld [vmem:[%s2884 + $0x24c] sm:$0xf]
      %v2913 = vld [vmem:[%s2884 + $0x274] sm:$0xf]
      %v2914 = vld [vmem:[%s2884 + $0x278] sm:$0xf]
      %v2915 = vld [vmem:[%s2884 + $0x2a0] sm:$0xf]
      %v2916 = vld [vmem:[%s2884 + $0x2a4] sm:$0xf]
      %s2917 = scalar_lea.vmem %s2, 24
      %v2918 = vld [vmem:[%s2917] sm:$0xf]
      %v2951 = vunpack.c.l.b16 %v2885
      %v2952 = vunpack.c.l.b16 %v2886
      %v2953 = vunpack.c.l.b16 %v2887
      %v2954 = vunpack.c.l.b16 %v2888
      %v2955 = vunpack.c.l.b16 %v2889
      %v2956 = vunpack.c.l.b16 %v2890
      %v2957 = vunpack.c.l.b16 %v2891
      %v2958 = vunpack.c.l.b16 %v2892
      %v2959 = vunpack.c.l.b16 %v2893
      %v2960 = vunpack.c.l.b16 %v2894
      %v2961 = vunpack.c.l.b16 %v2895
      %v2962 = vunpack.c.l.b16 %v2896
      %v2963 = vunpack.c.l.b16 %v2897
      %v2964 = vunpack.c.l.b16 %v2898
      %v2965 = vunpack.c.l.b16 %v2899
      %v2966 = vunpack.c.l.b16 %v2900
      %v2967 = vunpack.c.l.b16 %v2901
      %v2968 = vunpack.c.l.b16 %v2902
      %v2969 = vunpack.c.l.b16 %v2903
      %v2970 = vunpack.c.l.b16 %v2904
      %v2971 = vunpack.c.l.b16 %v2905
      %v2972 = vunpack.c.l.b16 %v2906
      %v2973 = vunpack.c.l.b16 %v2907
      %v2974 = vunpack.c.l.b16 %v2908
      %v2975 = vunpack.c.l.b16 %v2909
      %v2976 = vunpack.c.l.b16 %v2910
      %v2977 = vunpack.c.l.b16 %v2911
      %v2978 = vunpack.c.l.b16 %v2912
      %v2979 = vunpack.c.l.b16 %v2913
      %v2980 = vunpack.c.l.b16 %v2914
      %v2981 = vunpack.c.l.b16 %v2915
      %v2982 = vunpack.c.l.b16 %v2916
      %v2983 = vpack.c.b16 %v2952, %v2951
      %v2984 = vpack.c.b16 %v2954, %v2953
      %v2985 = vpack.c.b16 %v2956, %v2955
      %v2986 = vpack.c.b16 %v2958, %v2957
      %v2987 = vpack.c.b16 %v2960, %v2959
      %v2988 = vpack.c.b16 %v2962, %v2961
      %v2989 = vpack.c.b16 %v2964, %v2963
      %v2990 = vpack.c.b16 %v2966, %v2965
      %v2991 = vpack.c.b16 %v2968, %v2967
      %v2992 = vpack.c.b16 %v2970, %v2969
      %v2993 = vpack.c.b16 %v2972, %v2971
      %v2994 = vpack.c.b16 %v2974, %v2973
      %v2995 = vpack.c.b16 %v2976, %v2975
      %v2996 = vpack.c.b16 %v2978, %v2977
      %v2997 = vpack.c.b16 %v2980, %v2979
      %v2998 = vpack.c.b16 %v2982, %v2981
      %v3000 = vsel %vm553, %v2983, 0
      %v3003 = vsel %vm553, %v2984, 0
      %v3006 = vsel %vm553, %v2985, 0
      %v3009 = vsel %vm553, %v2986, 0
      %v3012 = vsel %vm553, %v2987, 0
      %v3015 = vsel %vm553, %v2988, 0
      %v3018 = vsel %vm553, %v2989, 0
      %v3021 = vsel %vm553, %v2990, 0
      %v3024 = vsel %vm553, %v2991, 0
      %v3027 = vsel %vm553, %v2992, 0
      %v3030 = vsel %vm553, %v2993, 0
      %v3033 = vsel %vm553, %v2994, 0
      %v3036 = vsel %vm553, %v2995, 0
      %v3039 = vsel %vm553, %v2996, 0
      %v3042 = vsel %vm553, %v2997, 0
      %v3045 = vsel %vm553, %v2998, 0
      %v3048 = vsel %vm602, %v2918, 0
      %3050 = vmatprep.subr.bf16.mxu0 0
      %3051 = vmatpush1.bf16.msra.mxu0 0
      %3052 = vmatprep.subr.bf16.mxu0 0
      %3053 = vmatpush1.bf16.msra.mxu0 0
      %3054 = vmatprep.subr.bf16.mxu0 0
      %3055 = vmatpush1.bf16.msra.mxu0 0
      %3056 = vmatprep.subr.bf16.mxu0 0
      %3057 = vmatpush1.bf16.msra.mxu0 0
      %3058 = vmatprep.subr.bf16.mxu0 0
      %3059 = vmatpush1.bf16.msra.mxu0 0
      %3060 = vmatprep.subr.bf16.mxu0 0
      %3061 = vmatpush1.bf16.msra.mxu0 0
      %3062 = vmatprep.subr.bf16.mxu0 0
      %3063 = vmatpush1.bf16.msra.mxu0 0
      %3064 = vmatprep.subr.bf16.mxu0 0
      %3065 = vmatpush1.bf16.msra.mxu0 %v3048
      %3066 = vmatprep.subr.bf16.mxu0 0
      %3067 = vmatpush2.bf16.msra.mxu0 0
      %3068 = vmatprep.subr.bf16.mxu0 0
      %3069 = vmatpush2.bf16.msra.mxu0 0
      %3070 = vmatprep.subr.bf16.mxu0 0
      %3071 = vmatpush2.bf16.msra.mxu0 0
      %3072 = vmatprep.subr.bf16.mxu0 0
      %3073 = vmatpush2.bf16.msra.mxu0 0
      %3074 = vmatprep.subr.bf16.mxu0 0
      %3075 = vmatpush2.bf16.msra.mxu0 0
      %3076 = vmatprep.subr.bf16.mxu0 0
      %3077 = vmatpush2.bf16.msra.mxu0 0
      %3078 = vmatprep.subr.bf16.mxu0 0
      %3079 = vmatpush2.bf16.msra.mxu0 0
      %3080 = vmatprep.subr.bf16.mxu0 0
      %3081 = vmatpush2.bf16.msra.mxu0 0
      %3082 = vmatprep.mubr.bf16.mxu0 0
      %3083 = vmatmul.mubr.bf16.gmra.mxu0 %v3000
      %v3084 = vpop.f32.mrf.mxu0
      %v3085 = vadd.f32 0.0, %v3084
      %v3086 = vpop.f32.mrf.mxu0
      %v3087 = vpop.f32.mrf.mxu0
      %v3088 = vadd.f32 0.0, %v3087
      %v3089 = vpop.f32.mrf.mxu0
      %3090 = vmatprep.mubr.bf16.mxu0 0
      %3091 = vmatmul.mubr.bf16.gmra.mxu0 %v3003
      %v3092 = vpop.f32.mrf.mxu0
      %v3093 = vadd.f32 0.0, %v3092
      %v3094 = vpop.f32.mrf.mxu0
      %v3095 = vpop.f32.mrf.mxu0
      %v3096 = vadd.f32 0.0, %v3095
      %v3097 = vpop.f32.mrf.mxu0
      %3098 = vmatprep.mubr.bf16.mxu0 0
      %3099 = vmatmul.mubr.bf16.gmra.mxu0 %v3006
      %v3100 = vpop.f32.mrf.mxu0
      %v3101 = vadd.f32 0.0, %v3100
      %v3102 = vpop.f32.mrf.mxu0
      %v3103 = vpop.f32.mrf.mxu0
      %v3104 = vadd.f32 0.0, %v3103
      %v3105 = vpop.f32.mrf.mxu0
      %3106 = vmatprep.mubr.bf16.mxu0 0
      %3107 = vmatmul.mubr.bf16.gmra.mxu0 %v3009
      %v3108 = vpop.f32.mrf.mxu0
      %v3109 = vadd.f32 0.0, %v3108
      %v3110 = vpop.f32.mrf.mxu0
      %v3111 = vpop.f32.mrf.mxu0
      %v3112 = vadd.f32 0.0, %v3111
      %v3113 = vpop.f32.mrf.mxu0
      %3114 = vmatprep.mubr.bf16.mxu0 0
      %3115 = vmatmul.mubr.bf16.gmra.mxu0 %v3012
      %v3116 = vpop.f32.mrf.mxu0
      %v3117 = vadd.f32 0.0, %v3116
      %v3118 = vpop.f32.mrf.mxu0
      %v3119 = vpop.f32.mrf.mxu0
      %v3120 = vadd.f32 0.0, %v3119
      %v3121 = vpop.f32.mrf.mxu0
      %3122 = vmatprep.mubr.bf16.mxu0 0
      %3123 = vmatmul.mubr.bf16.gmra.mxu0 %v3015
      %v3124 = vpop.f32.mrf.mxu0
      %v3125 = vadd.f32 0.0, %v3124
      %v3126 = vpop.f32.mrf.mxu0
      %v3127 = vpop.f32.mrf.mxu0
      %v3128 = vadd.f32 0.0, %v3127
      %v3129 = vpop.f32.mrf.mxu0
      %3130 = vmatprep.mubr.bf16.mxu0 0
      %3131 = vmatmul.mubr.bf16.gmra.mxu0 %v3018
      %v3132 = vpop.f32.mrf.mxu0
      %v3133 = vadd.f32 0.0, %v3132
      %v3134 = vpop.f32.mrf.mxu0
      %v3135 = vpop.f32.mrf.mxu0
      %v3136 = vadd.f32 0.0, %v3135
      %v3137 = vpop.f32.mrf.mxu0
      %3138 = vmatprep.mubr.bf16.mxu0 0
      %3139 = vmatmul.mubr.bf16.gmra.mxu0 %v3021
      %v3140 = vpop.f32.mrf.mxu0
      %v3141 = vadd.f32 0.0, %v3140
      %v3142 = vpop.f32.mrf.mxu0
      %v3143 = vpop.f32.mrf.mxu0
      %v3144 = vadd.f32 0.0, %v3143
      %v3145 = vpop.f32.mrf.mxu0
      %3146 = vmatprep.mubr.bf16.mxu0 0
      %3147 = vmatmul.mubr.bf16.gmra.mxu0 %v3024
      %v3148 = vpop.f32.mrf.mxu0
      %v3149 = vadd.f32 0.0, %v3148
      %v3150 = vpop.f32.mrf.mxu0
      %v3151 = vpop.f32.mrf.mxu0
      %v3152 = vadd.f32 0.0, %v3151
      %v3153 = vpop.f32.mrf.mxu0
      %3154 = vmatprep.mubr.bf16.mxu0 0
      %3155 = vmatmul.mubr.bf16.gmra.mxu0 %v3027
      %v3156 = vpop.f32.mrf.mxu0
      %v3157 = vadd.f32 0.0, %v3156
      %v3158 = vpop.f32.mrf.mxu0
      %v3159 = vpop.f32.mrf.mxu0
      %v3160 = vadd.f32 0.0, %v3159
      %v3161 = vpop.f32.mrf.mxu0
      %3162 = vmatprep.mubr.bf16.mxu0 0
      %3163 = vmatmul.mubr.bf16.gmra.mxu0 %v3030
      %v3164 = vpop.f32.mrf.mxu0
      %v3165 = vadd.f32 0.0, %v3164
      %v3166 = vpop.f32.mrf.mxu0
      %v3167 = vpop.f32.mrf.mxu0
      %v3168 = vadd.f32 0.0, %v3167
      %v3169 = vpop.f32.mrf.mxu0
      %3170 = vmatprep.mubr.bf16.mxu0 0
      %3171 = vmatmul.mubr.bf16.gmra.mxu0 %v3033
      %v3172 = vpop.f32.mrf.mxu0
      %v3173 = vadd.f32 0.0, %v3172
      %v3174 = vpop.f32.mrf.mxu0
      %v3175 = vpop.f32.mrf.mxu0
      %v3176 = vadd.f32 0.0, %v3175
      %v3177 = vpop.f32.mrf.mxu0
      %3178 = vmatprep.mubr.bf16.mxu0 0
      %3179 = vmatmul.mubr.bf16.gmra.mxu0 %v3036
      %v3180 = vpop.f32.mrf.mxu0
      %v3181 = vadd.f32 0.0, %v3180
      %v3182 = vpop.f32.mrf.mxu0
      %v3183 = vpop.f32.mrf.mxu0
      %v3184 = vadd.f32 0.0, %v3183
      %v3185 = vpop.f32.mrf.mxu0
      %3186 = vmatprep.mubr.bf16.mxu0 0
      %3187 = vmatmul.mubr.bf16.gmra.mxu0 %v3039
      %v3188 = vpop.f32.mrf.mxu0
      %v3189 = vadd.f32 0.0, %v3188
      %v3190 = vpop.f32.mrf.mxu0
      %v3191 = vpop.f32.mrf.mxu0
      %v3192 = vadd.f32 0.0, %v3191
      %v3193 = vpop.f32.mrf.mxu0
      %3194 = vmatprep.mubr.bf16.mxu0 0
      %3195 = vmatmul.mubr.bf16.gmra.mxu0 %v3042
      %v3196 = vpop.f32.mrf.mxu0
      %v3197 = vadd.f32 0.0, %v3196
      %v3198 = vpop.f32.mrf.mxu0
      %v3199 = vpop.f32.mrf.mxu0
      %v3200 = vadd.f32 0.0, %v3199
      %v3201 = vpop.f32.mrf.mxu0
      %3202 = vmatprep.mubr.bf16.mxu0 0
      %3203 = vmatmul.mubr.bf16.gmra.mxu0 %v3045
      %v3204 = vpop.f32.mrf.mxu0
      %v3205 = vadd.f32 0.0, %v3204
      %v3206 = vpop.f32.mrf.mxu0
      %v3207 = vpop.f32.mrf.mxu0
      %v3208 = vadd.f32 0.0, %v3207
      %v3209 = vpop.f32.mrf.mxu0
      %3210 = vdwg.mxu0
      %v3211 = vadd.f32 %v2852, %v3085
      %v3212 = vadd.f32 %v2853, %v3088
      %v3213 = vadd.f32 %v2854, %v3093
      %v3214 = vadd.f32 %v2855, %v3096
      %v3215 = vadd.f32 %v2856, %v3101
      %v3216 = vadd.f32 %v2857, %v3104
      %v3217 = vadd.f32 %v2858, %v3109
      %v3218 = vadd.f32 %v2859, %v3112
      %v3219 = vadd.f32 %v2860, %v3117
      %v3220 = vadd.f32 %v2861, %v3120
      %v3221 = vadd.f32 %v2862, %v3125
      %v3222 = vadd.f32 %v2863, %v3128
      %v3223 = vadd.f32 %v2864, %v3133
      %v3224 = vadd.f32 %v2865, %v3136
      %v3225 = vadd.f32 %v2866, %v3141
      %v3226 = vadd.f32 %v2867, %v3144
      %v3227 = vadd.f32 %v2868, %v3149
      %v3228 = vadd.f32 %v2869, %v3152
      %v3229 = vadd.f32 %v2870, %v3157
      %v3230 = vadd.f32 %v2871, %v3160
      %v3231 = vadd.f32 %v2872, %v3165
      %v3232 = vadd.f32 %v2873, %v3168
      %v3233 = vadd.f32 %v2874, %v3173
      %v3234 = vadd.f32 %v2875, %v3176
      %v3235 = vadd.f32 %v2876, %v3181
      %v3236 = vadd.f32 %v2877, %v3184
      %v3237 = vadd.f32 %v2878, %v3189
      %v3238 = vadd.f32 %v2879, %v3192
      %v3239 = vadd.f32 %v2880, %v3197
      %v3240 = vadd.f32 %v2881, %v3200
      %v3241 = vadd.f32 %v2882, %v3205
      %v3242 = vadd.f32 %v2883, %v3208
      %v3243 = vld [vmem:[%s2884 + $0x10] sm:$0xc]
      %v3244 = vld [vmem:[%s2884 + $0x14] sm:$0xf]
      %v3245 = vld [vmem:[%s2884 + $0x18] sm:$0x3]
      %v3246 = vld [vmem:[%s2884 + $0x3c] sm:$0xc]
      %v3247 = vld [vmem:[%s2884 + $0x40] sm:$0xf]
      %v3248 = vld [vmem:[%s2884 + $0x44] sm:$0x3]
      %v3249 = vld [vmem:[%s2884 + $0x68] sm:$0xc]
      %v3250 = vld [vmem:[%s2884 + $0x6c] sm:$0xf]
      %v3251 = vld [vmem:[%s2884 + $0x70] sm:$0x3]
      %v3252 = vld [vmem:[%s2884 + $0x94] sm:$0xc]
      %v3253 = vld [vmem:[%s2884 + $0x98] sm:$0xf]
      %v3254 = vld [vmem:[%s2884 + $0x9c] sm:$0x3]
      %v3255 = vld [vmem:[%s2884 + $0xc0] sm:$0xc]
      %v3256 = vld [vmem:[%s2884 + $0xc4] sm:$0xf]
      %v3257 = vld [vmem:[%s2884 + $0xc8] sm:$0x3]
      %v3258 = vld [vmem:[%s2884 + $0xec] sm:$0xc]
      %v3259 = vld [vmem:[%s2884 + $0xf0] sm:$0xf]
      %v3260 = vld [vmem:[%s2884 + $0xf4] sm:$0x3]
      %v3261 = vld [vmem:[%s2884 + $0x118] sm:$0xc]
      %v3262 = vld [vmem:[%s2884 + $0x11c] sm:$0xf]
      %v3263 = vld [vmem:[%s2884 + $0x120] sm:$0x3]
      %v3264 = vld [vmem:[%s2884 + $0x144] sm:$0xc]
      %v3265 = vld [vmem:[%s2884 + $0x148] sm:$0xf]
      %v3266 = vld [vmem:[%s2884 + $0x14c] sm:$0x3]
      %v3267 = vld [vmem:[%s2884 + $0x170] sm:$0xc]
      %v3268 = vld [vmem:[%s2884 + $0x174] sm:$0xf]
      %v3269 = vld [vmem:[%s2884 + $0x178] sm:$0x3]
      %v3270 = vld [vmem:[%s2884 + $0x19c] sm:$0xc]
      %v3271 = vld [vmem:[%s2884 + $0x1a0] sm:$0xf]
      %v3272 = vld [vmem:[%s2884 + $0x1a4] sm:$0x3]
      %v3273 = vld [vmem:[%s2884 + $0x1c8] sm:$0xc]
      %v3274 = vld [vmem:[%s2884 + $0x1cc] sm:$0xf]
      %v3275 = vld [vmem:[%s2884 + $0x1d0] sm:$0x3]
      %v3276 = vld [vmem:[%s2884 + $0x1f4] sm:$0xc]
      %v3277 = vld [vmem:[%s2884 + $0x1f8] sm:$0xf]
      %v3278 = vld [vmem:[%s2884 + $0x1fc] sm:$0x3]
      %v3279 = vld [vmem:[%s2884 + $0x220] sm:$0xc]
      %v3280 = vld [vmem:[%s2884 + $0x224] sm:$0xf]
      %v3281 = vld [vmem:[%s2884 + $0x228] sm:$0x3]
      %v3282 = vld [vmem:[%s2884 + $0x24c] sm:$0xc]
      %v3283 = vld [vmem:[%s2884 + $0x250] sm:$0xf]
      %v3284 = vld [vmem:[%s2884 + $0x254] sm:$0x3]
      %v3285 = vld [vmem:[%s2884 + $0x278] sm:$0xc]
      %v3286 = vld [vmem:[%s2884 + $0x27c] sm:$0xf]
      %v3287 = vld [vmem:[%s2884 + $0x280] sm:$0x3]
      %v3288 = vld [vmem:[%s2884 + $0x2a4] sm:$0xc]
      %v3289 = vld [vmem:[%s2884 + $0x2a8] sm:$0xf]
      %v3290 = vld [vmem:[%s2884 + $0x2ac] sm:$0x3]
      %v3339 = vrot.slane %v3243, 6
      %v3340 = vrot.slane %v3339, 4
      %v3341 = vrot.slane %v3244, 6
      %v3342 = vsel %vm352, %v3340, %v3341
      %v3343 = vrot.slane %v3341, 4
      %v3344 = vrot.slane %v3245, 6
      %v3345 = vsel %vm352, %v3343, %v3344
      %v3346 = vrot.slane %v3246, 6
      %v3347 = vrot.slane %v3346, 4
      %v3348 = vrot.slane %v3247, 6
      %v3349 = vsel %vm352, %v3347, %v3348
      %v3350 = vrot.slane %v3348, 4
      %v3351 = vrot.slane %v3248, 6
      %v3352 = vsel %vm352, %v3350, %v3351
      %v3353 = vrot.slane %v3249, 6
      %v3354 = vrot.slane %v3353, 4
      %v3355 = vrot.slane %v3250, 6
      %v3356 = vsel %vm352, %v3354, %v3355
      %v3357 = vrot.slane %v3355, 4
      %v3358 = vrot.slane %v3251, 6
      %v3359 = vsel %vm352, %v3357, %v3358
      %v3360 = vrot.slane %v3252, 6
      %v3361 = vrot.slane %v3360, 4
      %v3362 = vrot.slane %v3253, 6
      %v3363 = vsel %vm352, %v3361, %v3362
      %v3364 = vrot.slane %v3362, 4
      %v3365 = vrot.slane %v3254, 6
      %v3366 = vsel %vm352, %v3364, %v3365
      %v3367 = vrot.slane %v3255, 6
      %v3368 = vrot.slane %v3367, 4
      %v3369 = vrot.slane %v3256, 6
      %v3370 = vsel %vm352, %v3368, %v3369
      %v3371 = vrot.slane %v3369, 4
      %v3372 = vrot.slane %v3257, 6
      %v3373 = vsel %vm352, %v3371, %v3372
      %v3374 = vrot.slane %v3258, 6
      %v3375 = vrot.slane %v3374, 4
      %v3376 = vrot.slane %v3259, 6
      %v3377 = vsel %vm352, %v3375, %v3376
      %v3378 = vrot.slane %v3376, 4
      %v3379 = vrot.slane %v3260, 6
      %v3380 = vsel %vm352, %v3378, %v3379
      %v3381 = vrot.slane %v3261, 6
      %v3382 = vrot.slane %v3381, 4
      %v3383 = vrot.slane %v3262, 6
      %v3384 = vsel %vm352, %v3382, %v3383
      %v3385 = vrot.slane %v3383, 4
      %v3386 = vrot.slane %v3263, 6
      %v3387 = vsel %vm352, %v3385, %v3386
      %v3388 = vrot.slane %v3264, 6
      %v3389 = vrot.slane %v3388, 4
      %v3390 = vrot.slane %v3265, 6
      %v3391 = vsel %vm352, %v3389, %v3390
      %v3392 = vrot.slane %v3390, 4
      %v3393 = vrot.slane %v3266, 6
      %v3394 = vsel %vm352, %v3392, %v3393
      %v3395 = vrot.slane %v3267, 6
      %v3396 = vrot.slane %v3395, 4
      %v3397 = vrot.slane %v3268, 6
      %v3398 = vsel %vm352, %v3396, %v3397
      %v3399 = vrot.slane %v3397, 4
      %v3400 = vrot.slane %v3269, 6
      %v3401 = vsel %vm352, %v3399, %v3400
      %v3402 = vrot.slane %v3270, 6
      %v3403 = vrot.slane %v3402, 4
      %v3404 = vrot.slane %v3271, 6
      %v3405 = vsel %vm352, %v3403, %v3404
      %v3406 = vrot.slane %v3404, 4
      %v3407 = vrot.slane %v3272, 6
      %v3408 = vsel %vm352, %v3406, %v3407
      %v3409 = vrot.slane %v3273, 6
      %v3410 = vrot.slane %v3409, 4
      %v3411 = vrot.slane %v3274, 6
      %v3412 = vsel %vm352, %v3410, %v3411
      %v3413 = vrot.slane %v3411, 4
      %v3414 = vrot.slane %v3275, 6
      %v3415 = vsel %vm352, %v3413, %v3414
      %v3416 = vrot.slane %v3276, 6
      %v3417 = vrot.slane %v3416, 4
      %v3418 = vrot.slane %v3277, 6
      %v3419 = vsel %vm352, %v3417, %v3418
      %v3420 = vrot.slane %v3418, 4
      %v3421 = vrot.slane %v3278, 6
      %v3422 = vsel %vm352, %v3420, %v3421
      %v3423 = vrot.slane %v3279, 6
      %v3424 = vrot.slane %v3423, 4
      %v3425 = vrot.slane %v3280, 6
      %v3426 = vsel %vm352, %v3424, %v3425
      %v3427 = vrot.slane %v3425, 4
      %v3428 = vrot.slane %v3281, 6
      %v3429 = vsel %vm352, %v3427, %v3428
      %v3430 = vrot.slane %v3282, 6
      %v3431 = vrot.slane %v3430, 4
      %v3432 = vrot.slane %v3283, 6
      %v3433 = vsel %vm352, %v3431, %v3432
      %v3434 = vrot.slane %v3432, 4
      %v3435 = vrot.slane %v3284, 6
      %v3436 = vsel %vm352, %v3434, %v3435
      %v3437 = vrot.slane %v3285, 6
      %v3438 = vrot.slane %v3437, 4
      %v3439 = vrot.slane %v3286, 6
      %v3440 = vsel %vm352, %v3438, %v3439
      %v3441 = vrot.slane %v3439, 4
      %v3442 = vrot.slane %v3287, 6
      %v3443 = vsel %vm352, %v3441, %v3442
      %v3444 = vrot.slane %v3288, 6
      %v3445 = vrot.slane %v3444, 4
      %v3446 = vrot.slane %v3289, 6
      %v3447 = vsel %vm352, %v3445, %v3446
      %v3448 = vrot.slane %v3446, 4
      %v3449 = vrot.slane %v3290, 6
      %v3450 = vsel %vm352, %v3448, %v3449
      %s3451 = scalar_lea.vmem %s2, 28
      %v3452 = vld [vmem:[%s3451] sm:$0xf]
      %v3453 = vunpack.c.l.b16 %v3342
      %v3454 = vunpack.c.l.b16 %v3345
      %v3455 = vunpack.c.l.b16 %v3349
      %v3456 = vunpack.c.l.b16 %v3352
      %v3457 = vunpack.c.l.b16 %v3356
      %v3458 = vunpack.c.l.b16 %v3359
      %v3459 = vunpack.c.l.b16 %v3363
      %v3460 = vunpack.c.l.b16 %v3366
      %v3461 = vunpack.c.l.b16 %v3370
      %v3462 = vunpack.c.l.b16 %v3373
      %v3463 = vunpack.c.l.b16 %v3377
      %v3464 = vunpack.c.l.b16 %v3380
      %v3465 = vunpack.c.l.b16 %v3384
      %v3466 = vunpack.c.l.b16 %v3387
      %v3467 = vunpack.c.l.b16 %v3391
      %v3468 = vunpack.c.l.b16 %v3394
      %v3469 = vunpack.c.l.b16 %v3398
      %v3470 = vunpack.c.l.b16 %v3401
      %v3471 = vunpack.c.l.b16 %v3405
      %v3472 = vunpack.c.l.b16 %v3408
      %v3473 = vunpack.c.l.b16 %v3412
      %v3474 = vunpack.c.l.b16 %v3415
      %v3475 = vunpack.c.l.b16 %v3419
      %v3476 = vunpack.c.l.b16 %v3422
      %v3477 = vunpack.c.l.b16 %v3426
      %v3478 = vunpack.c.l.b16 %v3429
      %v3479 = vunpack.c.l.b16 %v3433
      %v3480 = vunpack.c.l.b16 %v3436
      %v3481 = vunpack.c.l.b16 %v3440
      %v3482 = vunpack.c.l.b16 %v3443
      %v3483 = vunpack.c.l.b16 %v3447
      %v3484 = vunpack.c.l.b16 %v3450
      %v3485 = vpack.c.b16 %v3454, %v3453
      %v3486 = vpack.c.b16 %v3456, %v3455
      %v3487 = vpack.c.b16 %v3458, %v3457
      %v3488 = vpack.c.b16 %v3460, %v3459
      %v3489 = vpack.c.b16 %v3462, %v3461
      %v3490 = vpack.c.b16 %v3464, %v3463
      %v3491 = vpack.c.b16 %v3466, %v3465
      %v3492 = vpack.c.b16 %v3468, %v3467
      %v3493 = vpack.c.b16 %v3470, %v3469
      %v3494 = vpack.c.b16 %v3472, %v3471
      %v3495 = vpack.c.b16 %v3474, %v3473
      %v3496 = vpack.c.b16 %v3476, %v3475
      %v3497 = vpack.c.b16 %v3478, %v3477
      %v3498 = vpack.c.b16 %v3480, %v3479
      %v3499 = vpack.c.b16 %v3482, %v3481
      %v3500 = vpack.c.b16 %v3484, %v3483
      %v3502 = vsel %vm553, %v3485, 0
      %v3505 = vsel %vm553, %v3486, 0
      %v3508 = vsel %vm553, %v3487, 0
      %v3511 = vsel %vm553, %v3488, 0
      %v3514 = vsel %vm553, %v3489, 0
      %v3517 = vsel %vm553, %v3490, 0
      %v3520 = vsel %vm553, %v3491, 0
      %v3523 = vsel %vm553, %v3492, 0
      %v3526 = vsel %vm553, %v3493, 0
      %v3529 = vsel %vm553, %v3494, 0
      %v3532 = vsel %vm553, %v3495, 0
      %v3535 = vsel %vm553, %v3496, 0
      %v3538 = vsel %vm553, %v3497, 0
      %v3541 = vsel %vm553, %v3498, 0
      %v3544 = vsel %vm553, %v3499, 0
      %v3547 = vsel %vm553, %v3500, 0
      %v3550 = vsel %vm602, %v3452, 0
      %3552 = vmatprep.subr.bf16.mxu0 0
      %3553 = vmatpush1.bf16.msra.mxu0 0
      %3554 = vmatprep.subr.bf16.mxu0 0
      %3555 = vmatpush1.bf16.msra.mxu0 0
      %3556 = vmatprep.subr.bf16.mxu0 0
      %3557 = vmatpush1.bf16.msra.mxu0 0
      %3558 = vmatprep.subr.bf16.mxu0 0
      %3559 = vmatpush1.bf16.msra.mxu0 0
      %3560 = vmatprep.subr.bf16.mxu0 0
      %3561 = vmatpush1.bf16.msra.mxu0 0
      %3562 = vmatprep.subr.bf16.mxu0 0
      %3563 = vmatpush1.bf16.msra.mxu0 0
      %3564 = vmatprep.subr.bf16.mxu0 0
      %3565 = vmatpush1.bf16.msra.mxu0 0
      %3566 = vmatprep.subr.bf16.mxu0 0
      %3567 = vmatpush1.bf16.msra.mxu0 %v3550
      %3568 = vmatprep.subr.bf16.mxu0 0
      %3569 = vmatpush2.bf16.msra.mxu0 0
      %3570 = vmatprep.subr.bf16.mxu0 0
      %3571 = vmatpush2.bf16.msra.mxu0 0
      %3572 = vmatprep.subr.bf16.mxu0 0
      %3573 = vmatpush2.bf16.msra.mxu0 0
      %3574 = vmatprep.subr.bf16.mxu0 0
      %3575 = vmatpush2.bf16.msra.mxu0 0
      %3576 = vmatprep.subr.bf16.mxu0 0
      %3577 = vmatpush2.bf16.msra.mxu0 0
      %3578 = vmatprep.subr.bf16.mxu0 0
      %3579 = vmatpush2.bf16.msra.mxu0 0
      %3580 = vmatprep.subr.bf16.mxu0 0
      %3581 = vmatpush2.bf16.msra.mxu0 0
      %3582 = vmatprep.subr.bf16.mxu0 0
      %3583 = vmatpush2.bf16.msra.mxu0 0
      %3584 = vmatprep.mubr.bf16.mxu0 0
      %3585 = vmatmul.mubr.bf16.gmra.mxu0 %v3502
      %v3586 = vpop.f32.mrf.mxu0
      %v3587 = vadd.f32 0.0, %v3586
      %v3588 = vpop.f32.mrf.mxu0
      %v3589 = vpop.f32.mrf.mxu0
      %v3590 = vadd.f32 0.0, %v3589
      %v3591 = vpop.f32.mrf.mxu0
      %3592 = vmatprep.mubr.bf16.mxu0 0
      %3593 = vmatmul.mubr.bf16.gmra.mxu0 %v3505
      %v3594 = vpop.f32.mrf.mxu0
      %v3595 = vadd.f32 0.0, %v3594
      %v3596 = vpop.f32.mrf.mxu0
      %v3597 = vpop.f32.mrf.mxu0
      %v3598 = vadd.f32 0.0, %v3597
      %v3599 = vpop.f32.mrf.mxu0
      %3600 = vmatprep.mubr.bf16.mxu0 0
      %3601 = vmatmul.mubr.bf16.gmra.mxu0 %v3508
      %v3602 = vpop.f32.mrf.mxu0
      %v3603 = vadd.f32 0.0, %v3602
      %v3604 = vpop.f32.mrf.mxu0
      %v3605 = vpop.f32.mrf.mxu0
      %v3606 = vadd.f32 0.0, %v3605
      %v3607 = vpop.f32.mrf.mxu0
      %3608 = vmatprep.mubr.bf16.mxu0 0
      %3609 = vmatmul.mubr.bf16.gmra.mxu0 %v3511
      %v3610 = vpop.f32.mrf.mxu0
      %v3611 = vadd.f32 0.0, %v3610
      %v3612 = vpop.f32.mrf.mxu0
      %v3613 = vpop.f32.mrf.mxu0
      %v3614 = vadd.f32 0.0, %v3613
      %v3615 = vpop.f32.mrf.mxu0
      %3616 = vmatprep.mubr.bf16.mxu0 0
      %3617 = vmatmul.mubr.bf16.gmra.mxu0 %v3514
      %v3618 = vpop.f32.mrf.mxu0
      %v3619 = vadd.f32 0.0, %v3618
      %v3620 = vpop.f32.mrf.mxu0
      %v3621 = vpop.f32.mrf.mxu0
      %v3622 = vadd.f32 0.0, %v3621
      %v3623 = vpop.f32.mrf.mxu0
      %3624 = vmatprep.mubr.bf16.mxu0 0
      %3625 = vmatmul.mubr.bf16.gmra.mxu0 %v3517
      %v3626 = vpop.f32.mrf.mxu0
      %v3627 = vadd.f32 0.0, %v3626
      %v3628 = vpop.f32.mrf.mxu0
      %v3629 = vpop.f32.mrf.mxu0
      %v3630 = vadd.f32 0.0, %v3629
      %v3631 = vpop.f32.mrf.mxu0
      %3632 = vmatprep.mubr.bf16.mxu0 0
      %3633 = vmatmul.mubr.bf16.gmra.mxu0 %v3520
      %v3634 = vpop.f32.mrf.mxu0
      %v3635 = vadd.f32 0.0, %v3634
      %v3636 = vpop.f32.mrf.mxu0
      %v3637 = vpop.f32.mrf.mxu0
      %v3638 = vadd.f32 0.0, %v3637
      %v3639 = vpop.f32.mrf.mxu0
      %3640 = vmatprep.mubr.bf16.mxu0 0
      %3641 = vmatmul.mubr.bf16.gmra.mxu0 %v3523
      %v3642 = vpop.f32.mrf.mxu0
      %v3643 = vadd.f32 0.0, %v3642
      %v3644 = vpop.f32.mrf.mxu0
      %v3645 = vpop.f32.mrf.mxu0
      %v3646 = vadd.f32 0.0, %v3645
      %v3647 = vpop.f32.mrf.mxu0
      %3648 = vmatprep.mubr.bf16.mxu0 0
      %3649 = vmatmul.mubr.bf16.gmra.mxu0 %v3526
      %v3650 = vpop.f32.mrf.mxu0
      %v3651 = vadd.f32 0.0, %v3650
      %v3652 = vpop.f32.mrf.mxu0
      %v3653 = vpop.f32.mrf.mxu0
      %v3654 = vadd.f32 0.0, %v3653
      %v3655 = vpop.f32.mrf.mxu0
      %3656 = vmatprep.mubr.bf16.mxu0 0
      %3657 = vmatmul.mubr.bf16.gmra.mxu0 %v3529
      %v3658 = vpop.f32.mrf.mxu0
      %v3659 = vadd.f32 0.0, %v3658
      %v3660 = vpop.f32.mrf.mxu0
      %v3661 = vpop.f32.mrf.mxu0
      %v3662 = vadd.f32 0.0, %v3661
      %v3663 = vpop.f32.mrf.mxu0
      %3664 = vmatprep.mubr.bf16.mxu0 0
      %3665 = vmatmul.mubr.bf16.gmra.mxu0 %v3532
      %v3666 = vpop.f32.mrf.mxu0
      %v3667 = vadd.f32 0.0, %v3666
      %v3668 = vpop.f32.mrf.mxu0
      %v3669 = vpop.f32.mrf.mxu0
      %v3670 = vadd.f32 0.0, %v3669
      %v3671 = vpop.f32.mrf.mxu0
      %3672 = vmatprep.mubr.bf16.mxu0 0
      %3673 = vmatmul.mubr.bf16.gmra.mxu0 %v3535
      %v3674 = vpop.f32.mrf.mxu0
      %v3675 = vadd.f32 0.0, %v3674
      %v3676 = vpop.f32.mrf.mxu0
      %v3677 = vpop.f32.mrf.mxu0
      %v3678 = vadd.f32 0.0, %v3677
      %v3679 = vpop.f32.mrf.mxu0
      %3680 = vmatprep.mubr.bf16.mxu0 0
      %3681 = vmatmul.mubr.bf16.gmra.mxu0 %v3538
      %v3682 = vpop.f32.mrf.mxu0
      %v3683 = vadd.f32 0.0, %v3682
      %v3684 = vpop.f32.mrf.mxu0
      %v3685 = vpop.f32.mrf.mxu0
      %v3686 = vadd.f32 0.0, %v3685
      %v3687 = vpop.f32.mrf.mxu0
      %3688 = vmatprep.mubr.bf16.mxu0 0
      %3689 = vmatmul.mubr.bf16.gmra.mxu0 %v3541
      %v3690 = vpop.f32.mrf.mxu0
      %v3691 = vadd.f32 0.0, %v3690
      %v3692 = vpop.f32.mrf.mxu0
      %v3693 = vpop.f32.mrf.mxu0
      %v3694 = vadd.f32 0.0, %v3693
      %v3695 = vpop.f32.mrf.mxu0
      %3696 = vmatprep.mubr.bf16.mxu0 0
      %3697 = vmatmul.mubr.bf16.gmra.mxu0 %v3544
      %v3698 = vpop.f32.mrf.mxu0
      %v3699 = vadd.f32 0.0, %v3698
      %v3700 = vpop.f32.mrf.mxu0
      %v3701 = vpop.f32.mrf.mxu0
      %v3702 = vadd.f32 0.0, %v3701
      %v3703 = vpop.f32.mrf.mxu0
      %3704 = vmatprep.mubr.bf16.mxu0 0
      %3705 = vmatmul.mubr.bf16.gmra.mxu0 %v3547
      %v3706 = vpop.f32.mrf.mxu0
      %v3707 = vadd.f32 0.0, %v3706
      %v3708 = vpop.f32.mrf.mxu0
      %v3709 = vpop.f32.mrf.mxu0
      %v3710 = vadd.f32 0.0, %v3709
      %v3711 = vpop.f32.mrf.mxu0
      %3712 = vdwg.mxu0
      %v3713 = vadd.f32 %v3211, %v3587
      %v3714 = vadd.f32 %v3212, %v3590
      %v3715 = vadd.f32 %v3213, %v3595
      %v3716 = vadd.f32 %v3214, %v3598
      %v3717 = vadd.f32 %v3215, %v3603
      %v3718 = vadd.f32 %v3216, %v3606
      %v3719 = vadd.f32 %v3217, %v3611
      %v3720 = vadd.f32 %v3218, %v3614
      %v3721 = vadd.f32 %v3219, %v3619
      %v3722 = vadd.f32 %v3220, %v3622
      %v3723 = vadd.f32 %v3221, %v3627
      %v3724 = vadd.f32 %v3222, %v3630
      %v3725 = vadd.f32 %v3223, %v3635
      %v3726 = vadd.f32 %v3224, %v3638
      %v3727 = vadd.f32 %v3225, %v3643
      %v3728 = vadd.f32 %v3226, %v3646
      %v3729 = vadd.f32 %v3227, %v3651
      %v3730 = vadd.f32 %v3228, %v3654
      %v3731 = vadd.f32 %v3229, %v3659
      %v3732 = vadd.f32 %v3230, %v3662
      %v3733 = vadd.f32 %v3231, %v3667
      %v3734 = vadd.f32 %v3232, %v3670
      %v3735 = vadd.f32 %v3233, %v3675
      %v3736 = vadd.f32 %v3234, %v3678
      %v3737 = vadd.f32 %v3235, %v3683
      %v3738 = vadd.f32 %v3236, %v3686
      %v3739 = vadd.f32 %v3237, %v3691
      %v3740 = vadd.f32 %v3238, %v3694
      %v3741 = vadd.f32 %v3239, %v3699
      %v3742 = vadd.f32 %v3240, %v3702
      %v3743 = vadd.f32 %v3241, %v3707
      %v3744 = vadd.f32 %v3242, %v3710
      %v3745 = vld [vmem:[%s2884 + $0x18] sm:$0xf]
      %v3746 = vld [vmem:[%s2884 + $0x1c] sm:$0xf]
      %v3747 = vld [vmem:[%s2884 + $0x44] sm:$0xf]
      %v3748 = vld [vmem:[%s2884 + $0x48] sm:$0xf]
      %v3749 = vld [vmem:[%s2884 + $0x70] sm:$0xf]
      %v3750 = vld [vmem:[%s2884 + $0x74] sm:$0xf]
      %v3751 = vld [vmem:[%s2884 + $0x9c] sm:$0xf]
      %v3752 = vld [vmem:[%s2884 + $0xa0] sm:$0xf]
      %v3753 = vld [vmem:[%s2884 + $0xc8] sm:$0xf]
      %v3754 = vld [vmem:[%s2884 + $0xcc] sm:$0xf]
      %v3755 = vld [vmem:[%s2884 + $0xf4] sm:$0xf]
      %v3756 = vld [vmem:[%s2884 + $0xf8] sm:$0xf]
      %v3757 = vld [vmem:[%s2884 + $0x120] sm:$0xf]
      %v3758 = vld [vmem:[%s2884 + $0x124] sm:$0xf]
      %v3759 = vld [vmem:[%s2884 + $0x14c] sm:$0xf]
      %v3760 = vld [vmem:[%s2884 + $0x150] sm:$0xf]
      %v3761 = vld [vmem:[%s2884 + $0x178] sm:$0xf]
      %v3762 = vld [vmem:[%s2884 + $0x17c] sm:$0xf]
      %v3763 = vld [vmem:[%s2884 + $0x1a4] sm:$0xf]
      %v3764 = vld [vmem:[%s2884 + $0x1a8] sm:$0xf]
      %v3765 = vld [vmem:[%s2884 + $0x1d0] sm:$0xf]
      %v3766 = vld [vmem:[%s2884 + $0x1d4] sm:$0xf]
      %v3767 = vld [vmem:[%s2884 + $0x1fc] sm:$0xf]
      %v3768 = vld [vmem:[%s2884 + $0x200] sm:$0xf]
      %v3769 = vld [vmem:[%s2884 + $0x228] sm:$0xf]
      %v3770 = vld [vmem:[%s2884 + $0x22c] sm:$0xf]
      %v3771 = vld [vmem:[%s2884 + $0x254] sm:$0xf]
      %v3772 = vld [vmem:[%s2884 + $0x258] sm:$0xf]
      %v3773 = vld [vmem:[%s2884 + $0x280] sm:$0xf]
      %v3774 = vld [vmem:[%s2884 + $0x284] sm:$0xf]
      %v3775 = vld [vmem:[%s2884 + $0x2ac] sm:$0xf]
      %v3776 = vld [vmem:[%s2884 + $0x2b0] sm:$0xf]
      %s3777 = scalar_lea.vmem %s2, 32
      %v3778 = vld [vmem:[%s3777] sm:$0xf]
      %v3811 = vunpack.c.l.b16 %v3745
      %v3812 = vunpack.c.l.b16 %v3746
      %v3813 = vunpack.c.l.b16 %v3747
      %v3814 = vunpack.c.l.b16 %v3748
      %v3815 = vunpack.c.l.b16 %v3749
      %v3816 = vunpack.c.l.b16 %v3750
      %v3817 = vunpack.c.l.b16 %v3751
      %v3818 = vunpack.c.l.b16 %v3752
      %v3819 = vunpack.c.l.b16 %v3753
      %v3820 = vunpack.c.l.b16 %v3754
      %v3821 = vunpack.c.l.b16 %v3755
      %v3822 = vunpack.c.l.b16 %v3756
      %v3823 = vunpack.c.l.b16 %v3757
      %v3824 = vunpack.c.l.b16 %v3758
      %v3825 = vunpack.c.l.b16 %v3759
      %v3826 = vunpack.c.l.b16 %v3760
      %v3827 = vunpack.c.l.b16 %v3761
      %v3828 = vunpack.c.l.b16 %v3762
      %v3829 = vunpack.c.l.b16 %v3763
      %v3830 = vunpack.c.l.b16 %v3764
      %v3831 = vunpack.c.l.b16 %v3765
      %v3832 = vunpack.c.l.b16 %v3766
      %v3833 = vunpack.c.l.b16 %v3767
      %v3834 = vunpack.c.l.b16 %v3768
      %v3835 = vunpack.c.l.b16 %v3769
      %v3836 = vunpack.c.l.b16 %v3770
      %v3837 = vunpack.c.l.b16 %v3771
      %v3838 = vunpack.c.l.b16 %v3772
      %v3839 = vunpack.c.l.b16 %v3773
      %v3840 = vunpack.c.l.b16 %v3774
      %v3841 = vunpack.c.l.b16 %v3775
      %v3842 = vunpack.c.l.b16 %v3776
      %v3843 = vpack.c.b16 %v3812, %v3811
      %v3844 = vpack.c.b16 %v3814, %v3813
      %v3845 = vpack.c.b16 %v3816, %v3815
      %v3846 = vpack.c.b16 %v3818, %v3817
      %v3847 = vpack.c.b16 %v3820, %v3819
      %v3848 = vpack.c.b16 %v3822, %v3821
      %v3849 = vpack.c.b16 %v3824, %v3823
      %v3850 = vpack.c.b16 %v3826, %v3825
      %v3851 = vpack.c.b16 %v3828, %v3827
      %v3852 = vpack.c.b16 %v3830, %v3829
      %v3853 = vpack.c.b16 %v3832, %v3831
      %v3854 = vpack.c.b16 %v3834, %v3833
      %v3855 = vpack.c.b16 %v3836, %v3835
      %v3856 = vpack.c.b16 %v3838, %v3837
      %v3857 = vpack.c.b16 %v3840, %v3839
      %v3858 = vpack.c.b16 %v3842, %v3841
      %v3860 = vsel %vm553, %v3843, 0
      %v3863 = vsel %vm553, %v3844, 0
      %v3866 = vsel %vm553, %v3845, 0
      %v3869 = vsel %vm553, %v3846, 0
      %v3872 = vsel %vm553, %v3847, 0
      %v3875 = vsel %vm553, %v3848, 0
      %v3878 = vsel %vm553, %v3849, 0
      %v3881 = vsel %vm553, %v3850, 0
      %v3884 = vsel %vm553, %v3851, 0
      %v3887 = vsel %vm553, %v3852, 0
      %v3890 = vsel %vm553, %v3853, 0
      %v3893 = vsel %vm553, %v3854, 0
      %v3896 = vsel %vm553, %v3855, 0
      %v3899 = vsel %vm553, %v3856, 0
      %v3902 = vsel %vm553, %v3857, 0
      %v3905 = vsel %vm553, %v3858, 0
      %v3908 = vsel %vm602, %v3778, 0
      %3910 = vmatprep.subr.bf16.mxu0 0
      %3911 = vmatpush1.bf16.msra.mxu0 0
      %3912 = vmatprep.subr.bf16.mxu0 0
      %3913 = vmatpush1.bf16.msra.mxu0 0
      %3914 = vmatprep.subr.bf16.mxu0 0
      %3915 = vmatpush1.bf16.msra.mxu0 0
      %3916 = vmatprep.subr.bf16.mxu0 0
      %3917 = vmatpush1.bf16.msra.mxu0 0
      %3918 = vmatprep.subr.bf16.mxu0 0
      %3919 = vmatpush1.bf16.msra.mxu0 0
      %3920 = vmatprep.subr.bf16.mxu0 0
      %3921 = vmatpush1.bf16.msra.mxu0 0
      %3922 = vmatprep.subr.bf16.mxu0 0
      %3923 = vmatpush1.bf16.msra.mxu0 0
      %3924 = vmatprep.subr.bf16.mxu0 0
      %3925 = vmatpush1.bf16.msra.mxu0 %v3908
      %3926 = vmatprep.subr.bf16.mxu0 0
      %3927 = vmatpush2.bf16.msra.mxu0 0
      %3928 = vmatprep.subr.bf16.mxu0 0
      %3929 = vmatpush2.bf16.msra.mxu0 0
      %3930 = vmatprep.subr.bf16.mxu0 0
      %3931 = vmatpush2.bf16.msra.mxu0 0
      %3932 = vmatprep.subr.bf16.mxu0 0
      %3933 = vmatpush2.bf16.msra.mxu0 0
      %3934 = vmatprep.subr.bf16.mxu0 0
      %3935 = vmatpush2.bf16.msra.mxu0 0
      %3936 = vmatprep.subr.bf16.mxu0 0
      %3937 = vmatpush2.bf16.msra.mxu0 0
      %3938 = vmatprep.subr.bf16.mxu0 0
      %3939 = vmatpush2.bf16.msra.mxu0 0
      %3940 = vmatprep.subr.bf16.mxu0 0
      %3941 = vmatpush2.bf16.msra.mxu0 0
      %3942 = vmatprep.mubr.bf16.mxu0 0
      %3943 = vmatmul.mubr.bf16.gmra.mxu0 %v3860
      %v3944 = vpop.f32.mrf.mxu0
      %v3945 = vadd.f32 0.0, %v3944
      %v3946 = vpop.f32.mrf.mxu0
      %v3947 = vpop.f32.mrf.mxu0
      %v3948 = vadd.f32 0.0, %v3947
      %v3949 = vpop.f32.mrf.mxu0
      %3950 = vmatprep.mubr.bf16.mxu0 0
      %3951 = vmatmul.mubr.bf16.gmra.mxu0 %v3863
      %v3952 = vpop.f32.mrf.mxu0
      %v3953 = vadd.f32 0.0, %v3952
      %v3954 = vpop.f32.mrf.mxu0
      %v3955 = vpop.f32.mrf.mxu0
      %v3956 = vadd.f32 0.0, %v3955
      %v3957 = vpop.f32.mrf.mxu0
      %3958 = vmatprep.mubr.bf16.mxu0 0
      %3959 = vmatmul.mubr.bf16.gmra.mxu0 %v3866
      %v3960 = vpop.f32.mrf.mxu0
      %v3961 = vadd.f32 0.0, %v3960
      %v3962 = vpop.f32.mrf.mxu0
      %v3963 = vpop.f32.mrf.mxu0
      %v3964 = vadd.f32 0.0, %v3963
      %v3965 = vpop.f32.mrf.mxu0
      %3966 = vmatprep.mubr.bf16.mxu0 0
      %3967 = vmatmul.mubr.bf16.gmra.mxu0 %v3869
      %v3968 = vpop.f32.mrf.mxu0
      %v3969 = vadd.f32 0.0, %v3968
      %v3970 = vpop.f32.mrf.mxu0
      %v3971 = vpop.f32.mrf.mxu0
      %v3972 = vadd.f32 0.0, %v3971
      %v3973 = vpop.f32.mrf.mxu0
      %3974 = vmatprep.mubr.bf16.mxu0 0
      %3975 = vmatmul.mubr.bf16.gmra.mxu0 %v3872
      %v3976 = vpop.f32.mrf.mxu0
      %v3977 = vadd.f32 0.0, %v3976
      %v3978 = vpop.f32.mrf.mxu0
      %v3979 = vpop.f32.mrf.mxu0
      %v3980 = vadd.f32 0.0, %v3979
      %v3981 = vpop.f32.mrf.mxu0
      %3982 = vmatprep.mubr.bf16.mxu0 0
      %3983 = vmatmul.mubr.bf16.gmra.mxu0 %v3875
      %v3984 = vpop.f32.mrf.mxu0
      %v3985 = vadd.f32 0.0, %v3984
      %v3986 = vpop.f32.mrf.mxu0
      %v3987 = vpop.f32.mrf.mxu0
      %v3988 = vadd.f32 0.0, %v3987
      %v3989 = vpop.f32.mrf.mxu0
      %3990 = vmatprep.mubr.bf16.mxu0 0
      %3991 = vmatmul.mubr.bf16.gmra.mxu0 %v3878
      %v3992 = vpop.f32.mrf.mxu0
      %v3993 = vadd.f32 0.0, %v3992
      %v3994 = vpop.f32.mrf.mxu0
      %v3995 = vpop.f32.mrf.mxu0
      %v3996 = vadd.f32 0.0, %v3995
      %v3997 = vpop.f32.mrf.mxu0
      %3998 = vmatprep.mubr.bf16.mxu0 0
      %3999 = vmatmul.mubr.bf16.gmra.mxu0 %v3881
      %v4000 = vpop.f32.mrf.mxu0
      %v4001 = vadd.f32 0.0, %v4000
      %v4002 = vpop.f32.mrf.mxu0
      %v4003 = vpop.f32.mrf.mxu0
      %v4004 = vadd.f32 0.0, %v4003
      %v4005 = vpop.f32.mrf.mxu0
      %4006 = vmatprep.mubr.bf16.mxu0 0
      %4007 = vmatmul.mubr.bf16.gmra.mxu0 %v3884
      %v4008 = vpop.f32.mrf.mxu0
      %v4009 = vadd.f32 0.0, %v4008
      %v4010 = vpop.f32.mrf.mxu0
      %v4011 = vpop.f32.mrf.mxu0
      %v4012 = vadd.f32 0.0, %v4011
      %v4013 = vpop.f32.mrf.mxu0
      %4014 = vmatprep.mubr.bf16.mxu0 0
      %4015 = vmatmul.mubr.bf16.gmra.mxu0 %v3887
      %v4016 = vpop.f32.mrf.mxu0
      %v4017 = vadd.f32 0.0, %v4016
      %v4018 = vpop.f32.mrf.mxu0
      %v4019 = vpop.f32.mrf.mxu0
      %v4020 = vadd.f32 0.0, %v4019
      %v4021 = vpop.f32.mrf.mxu0
      %4022 = vmatprep.mubr.bf16.mxu0 0
      %4023 = vmatmul.mubr.bf16.gmra.mxu0 %v3890
      %v4024 = vpop.f32.mrf.mxu0
      %v4025 = vadd.f32 0.0, %v4024
      %v4026 = vpop.f32.mrf.mxu0
      %v4027 = vpop.f32.mrf.mxu0
      %v4028 = vadd.f32 0.0, %v4027
      %v4029 = vpop.f32.mrf.mxu0
      %4030 = vmatprep.mubr.bf16.mxu0 0
      %4031 = vmatmul.mubr.bf16.gmra.mxu0 %v3893
      %v4032 = vpop.f32.mrf.mxu0
      %v4033 = vadd.f32 0.0, %v4032
      %v4034 = vpop.f32.mrf.mxu0
      %v4035 = vpop.f32.mrf.mxu0
      %v4036 = vadd.f32 0.0, %v4035
      %v4037 = vpop.f32.mrf.mxu0
      %4038 = vmatprep.mubr.bf16.mxu0 0
      %4039 = vmatmul.mubr.bf16.gmra.mxu0 %v3896
      %v4040 = vpop.f32.mrf.mxu0
      %v4041 = vadd.f32 0.0, %v4040
      %v4042 = vpop.f32.mrf.mxu0
      %v4043 = vpop.f32.mrf.mxu0
      %v4044 = vadd.f32 0.0, %v4043
      %v4045 = vpop.f32.mrf.mxu0
      %4046 = vmatprep.mubr.bf16.mxu0 0
      %4047 = vmatmul.mubr.bf16.gmra.mxu0 %v3899
      %v4048 = vpop.f32.mrf.mxu0
      %v4049 = vadd.f32 0.0, %v4048
      %v4050 = vpop.f32.mrf.mxu0
      %v4051 = vpop.f32.mrf.mxu0
      %v4052 = vadd.f32 0.0, %v4051
      %v4053 = vpop.f32.mrf.mxu0
      %4054 = vmatprep.mubr.bf16.mxu0 0
      %4055 = vmatmul.mubr.bf16.gmra.mxu0 %v3902
      %v4056 = vpop.f32.mrf.mxu0
      %v4057 = vadd.f32 0.0, %v4056
      %v4058 = vpop.f32.mrf.mxu0
      %v4059 = vpop.f32.mrf.mxu0
      %v4060 = vadd.f32 0.0, %v4059
      %v4061 = vpop.f32.mrf.mxu0
      %4062 = vmatprep.mubr.bf16.mxu0 0
      %4063 = vmatmul.mubr.bf16.gmra.mxu0 %v3905
      %v4064 = vpop.f32.mrf.mxu0
      %v4065 = vadd.f32 0.0, %v4064
      %v4066 = vpop.f32.mrf.mxu0
      %v4067 = vpop.f32.mrf.mxu0
      %v4068 = vadd.f32 0.0, %v4067
      %v4069 = vpop.f32.mrf.mxu0
      %4070 = vdwg.mxu0
      %v4071 = vadd.f32 %v3713, %v3945
      %v4072 = vadd.f32 %v3714, %v3948
      %v4073 = vadd.f32 %v3715, %v3953
      %v4074 = vadd.f32 %v3716, %v3956
      %v4075 = vadd.f32 %v3717, %v3961
      %v4076 = vadd.f32 %v3718, %v3964
      %v4077 = vadd.f32 %v3719, %v3969
      %v4078 = vadd.f32 %v3720, %v3972
      %v4079 = vadd.f32 %v3721, %v3977
      %v4080 = vadd.f32 %v3722, %v3980
      %v4081 = vadd.f32 %v3723, %v3985
      %v4082 = vadd.f32 %v3724, %v3988
      %v4083 = vadd.f32 %v3725, %v3993
      %v4084 = vadd.f32 %v3726, %v3996
      %v4085 = vadd.f32 %v3727, %v4001
      %v4086 = vadd.f32 %v3728, %v4004
      %v4087 = vadd.f32 %v3729, %v4009
      %v4088 = vadd.f32 %v3730, %v4012
      %v4089 = vadd.f32 %v3731, %v4017
      %v4090 = vadd.f32 %v3732, %v4020
      %v4091 = vadd.f32 %v3733, %v4025
      %v4092 = vadd.f32 %v3734, %v4028
      %v4093 = vadd.f32 %v3735, %v4033
      %v4094 = vadd.f32 %v3736, %v4036
      %v4095 = vadd.f32 %v3737, %v4041
      %v4096 = vadd.f32 %v3738, %v4044
      %v4097 = vadd.f32 %v3739, %v4049
      %v4098 = vadd.f32 %v3740, %v4052
      %v4099 = vadd.f32 %v3741, %v4057
      %v4100 = vadd.f32 %v3742, %v4060
      %v4101 = vadd.f32 %v3743, %v4065
      %v4102 = vadd.f32 %v3744, %v4068
      %s4103 = scalar_lea.vmem %s5, 1
      %v4104 = vld [vmem:[%s4103] sm:$0x1]
      %v4106 = vlaneseq
      %v4107 = vshrl.u32 %v4106, 7
      %v4108 = vsub.s32 0, %v4107
      %v4109 = vrot.slane %v4104, %v4108
      %v4111 = vadd.f32 %v4071, %v4109
      %v4112 = vadd.f32 %v4072, %v4109
      %v4113 = vadd.f32 %v4073, %v4109
      %v4114 = vadd.f32 %v4074, %v4109
      %v4115 = vadd.f32 %v4075, %v4109
      %v4116 = vadd.f32 %v4076, %v4109
      %v4117 = vadd.f32 %v4077, %v4109
      %v4118 = vadd.f32 %v4078, %v4109
      %v4119 = vadd.f32 %v4079, %v4109
      %v4120 = vadd.f32 %v4080, %v4109
      %v4121 = vadd.f32 %v4081, %v4109
      %v4122 = vadd.f32 %v4082, %v4109
      %v4123 = vadd.f32 %v4083, %v4109
      %v4124 = vadd.f32 %v4084, %v4109
      %v4125 = vadd.f32 %v4085, %v4109
      %v4126 = vadd.f32 %v4086, %v4109
      %v4127 = vadd.f32 %v4087, %v4109
      %v4128 = vadd.f32 %v4088, %v4109
      %v4129 = vadd.f32 %v4089, %v4109
      %v4130 = vadd.f32 %v4090, %v4109
      %v4131 = vadd.f32 %v4091, %v4109
      %v4132 = vadd.f32 %v4092, %v4109
      %v4133 = vadd.f32 %v4093, %v4109
      %v4134 = vadd.f32 %v4094, %v4109
      %v4135 = vadd.f32 %v4095, %v4109
      %v4136 = vadd.f32 %v4096, %v4109
      %v4137 = vadd.f32 %v4097, %v4109
      %v4138 = vadd.f32 %v4098, %v4109
      %v4139 = vadd.f32 %v4099, %v4109
      %v4140 = vadd.f32 %v4100, %v4109
      %v4141 = vadd.f32 %v4101, %v4109
      %v4142 = vadd.f32 %v4102, %v4109
      %v4143 = vmax.f32 %v4111, 0.0
      %v4144 = vmax.f32 %v4112, 0.0
      %v4145 = vmax.f32 %v4113, 0.0
      %v4146 = vmax.f32 %v4114, 0.0
      %v4147 = vmax.f32 %v4115, 0.0
      %v4148 = vmax.f32 %v4116, 0.0
      %v4149 = vmax.f32 %v4117, 0.0
      %v4150 = vmax.f32 %v4118, 0.0
      %v4151 = vmax.f32 %v4119, 0.0
      %v4152 = vmax.f32 %v4120, 0.0
      %v4153 = vmax.f32 %v4121, 0.0
      %v4154 = vmax.f32 %v4122, 0.0
      %v4155 = vmax.f32 %v4123, 0.0
      %v4156 = vmax.f32 %v4124, 0.0
      %v4157 = vmax.f32 %v4125, 0.0
      %v4158 = vmax.f32 %v4126, 0.0
      %v4159 = vmax.f32 %v4127, 0.0
      %v4160 = vmax.f32 %v4128, 0.0
      %v4161 = vmax.f32 %v4129, 0.0
      %v4162 = vmax.f32 %v4130, 0.0
      %v4163 = vmax.f32 %v4131, 0.0
      %v4164 = vmax.f32 %v4132, 0.0
      %v4165 = vmax.f32 %v4133, 0.0
      %v4166 = vmax.f32 %v4134, 0.0
      %v4167 = vmax.f32 %v4135, 0.0
      %v4168 = vmax.f32 %v4136, 0.0
      %v4169 = vmax.f32 %v4137, 0.0
      %v4170 = vmax.f32 %v4138, 0.0
      %v4171 = vmax.f32 %v4139, 0.0
      %v4172 = vmax.f32 %v4140, 0.0
      %v4173 = vmax.f32 %v4141, 0.0
      %v4174 = vmax.f32 %v4142, 0.0
      %v4175 = vpack.c.bf16 %v4144, %v4143
      %v4176 = vpack.c.bf16 %v4146, %v4145
      %v4177 = vpack.c.bf16 %v4148, %v4147
      %v4178 = vpack.c.bf16 %v4150, %v4149
      %v4179 = vpack.c.bf16 %v4152, %v4151
      %v4180 = vpack.c.bf16 %v4154, %v4153
      %v4181 = vpack.c.bf16 %v4156, %v4155
      %v4182 = vpack.c.bf16 %v4158, %v4157
      %v4183 = vpack.c.bf16 %v4160, %v4159
      %v4184 = vpack.c.bf16 %v4162, %v4161
      %v4185 = vpack.c.bf16 %v4164, %v4163
      %v4186 = vpack.c.bf16 %v4166, %v4165
      %v4187 = vpack.c.bf16 %v4168, %v4167
      %v4188 = vpack.c.bf16 %v4170, %v4169
      %v4189 = vpack.c.bf16 %v4172, %v4171
      %v4190 = vpack.c.bf16 %v4174, %v4173
      %s4191 = scalar_lea.vmem %s4, 2
      %v4192 = vld [vmem:[%s4191] sm:$0x3]
      %vm4193 = vcmask 31744
      %v4195 = vsel %vm4193, %v4175, 0
      %v4198 = vsel %vm4193, %v4176, 0
      %v4201 = vsel %vm4193, %v4177, 0
      %v4204 = vsel %vm4193, %v4178, 0
      %v4207 = vsel %vm4193, %v4179, 0
      %v4210 = vsel %vm4193, %v4180, 0
      %v4213 = vsel %vm4193, %v4181, 0
      %v4216 = vsel %vm4193, %v4182, 0
      %v4219 = vsel %vm4193, %v4183, 0
      %v4222 = vsel %vm4193, %v4184, 0
      %v4225 = vsel %vm4193, %v4185, 0
      %v4228 = vsel %vm4193, %v4186, 0
      %v4231 = vsel %vm4193, %v4187, 0
      %v4234 = vsel %vm4193, %v4188, 0
      %v4237 = vsel %vm4193, %v4189, 0
      %v4240 = vsel %vm4193, %v4190, 0
      %vm4242 = vcmask 1041408
      %v4244 = vsel %vm4242, %v4192, 0
      %4246 = vmatprep.subr.bf16.mxu0 0
      %4247 = vmatpush1.bf16.msra.mxu0 0
      %4248 = vmatprep.subr.bf16.mxu0 0
      %4249 = vmatpush1.bf16.msra.mxu0 0
      %4250 = vmatprep.subr.bf16.mxu0 0
      %4251 = vmatpush1.bf16.msra.mxu0 0
      %4252 = vmatprep.subr.bf16.mxu0 0
      %4253 = vmatpush1.bf16.msra.mxu0 0
      %4254 = vmatprep.subr.bf16.mxu0 0
      %4255 = vmatpush1.bf16.msra.mxu0 0
      %4256 = vmatprep.subr.bf16.mxu0 0
      %4257 = vmatpush1.bf16.msra.mxu0 0
      %4258 = vmatprep.subr.bf16.mxu0 0
      %4259 = vmatpush1.bf16.msra.mxu0 0
      %4260 = vmatprep.subr.bf16.mxu0 0
      %4261 = vmatpush1.bf16.msra.mxu0 %v4244
      %4262 = vmatprep.subr.bf16.mxu0 0
      %4263 = vmatpush2.bf16.msra.mxu0 0
      %4264 = vmatprep.subr.bf16.mxu0 0
      %4265 = vmatpush2.bf16.msra.mxu0 0
      %4266 = vmatprep.subr.bf16.mxu0 0
      %4267 = vmatpush2.bf16.msra.mxu0 0
      %4268 = vmatprep.subr.bf16.mxu0 0
      %4269 = vmatpush2.bf16.msra.mxu0 0
      %4270 = vmatprep.subr.bf16.mxu0 0
      %4271 = vmatpush2.bf16.msra.mxu0 0
      %4272 = vmatprep.subr.bf16.mxu0 0
      %4273 = vmatpush2.bf16.msra.mxu0 0
      %4274 = vmatprep.subr.bf16.mxu0 0
      %4275 = vmatpush2.bf16.msra.mxu0 0
      %4276 = vmatprep.subr.bf16.mxu0 0
      %4277 = vmatpush2.bf16.msra.mxu0 0
      %4278 = vmatprep.mubr.bf16.mxu0 0
      %4279 = vmatmul.mubr.bf16.gmra.mxu0 %v4195
      %v4280 = vpop.f32.mrf.mxu0
      %v4281 = vadd.f32 0.0, %v4280
      %v4282 = vpop.f32.mrf.mxu0
      %v4283 = vpop.f32.mrf.mxu0
      %v4284 = vadd.f32 0.0, %v4283
      %v4285 = vpop.f32.mrf.mxu0
      %4286 = vmatprep.mubr.bf16.mxu0 0
      %4287 = vmatmul.mubr.bf16.gmra.mxu0 %v4198
      %v4288 = vpop.f32.mrf.mxu0
      %v4289 = vadd.f32 0.0, %v4288
      %v4290 = vpop.f32.mrf.mxu0
      %v4291 = vpop.f32.mrf.mxu0
      %v4292 = vadd.f32 0.0, %v4291
      %v4293 = vpop.f32.mrf.mxu0
      %4294 = vmatprep.mubr.bf16.mxu0 0
      %4295 = vmatmul.mubr.bf16.gmra.mxu0 %v4201
      %v4296 = vpop.f32.mrf.mxu0
      %v4297 = vadd.f32 0.0, %v4296
      %v4298 = vpop.f32.mrf.mxu0
      %v4299 = vpop.f32.mrf.mxu0
      %v4300 = vadd.f32 0.0, %v4299
      %v4301 = vpop.f32.mrf.mxu0
      %4302 = vmatprep.mubr.bf16.mxu0 0
      %4303 = vmatmul.mubr.bf16.gmra.mxu0 %v4204
      %v4304 = vpop.f32.mrf.mxu0
      %v4305 = vadd.f32 0.0, %v4304
      %v4306 = vpop.f32.mrf.mxu0
      %v4307 = vpop.f32.mrf.mxu0
      %v4308 = vadd.f32 0.0, %v4307
      %v4309 = vpop.f32.mrf.mxu0
      %4310 = vmatprep.mubr.bf16.mxu0 0
      %4311 = vmatmul.mubr.bf16.gmra.mxu0 %v4207
      %v4312 = vpop.f32.mrf.mxu0
      %v4313 = vadd.f32 0.0, %v4312
      %v4314 = vpop.f32.mrf.mxu0
      %v4315 = vpop.f32.mrf.mxu0
      %v4316 = vadd.f32 0.0, %v4315
      %v4317 = vpop.f32.mrf.mxu0
      %4318 = vmatprep.mubr.bf16.mxu0 0
      %4319 = vmatmul.mubr.bf16.gmra.mxu0 %v4210
      %v4320 = vpop.f32.mrf.mxu0
      %v4321 = vadd.f32 0.0, %v4320
      %v4322 = vpop.f32.mrf.mxu0
      %v4323 = vpop.f32.mrf.mxu0
      %v4324 = vadd.f32 0.0, %v4323
      %v4325 = vpop.f32.mrf.mxu0
      %4326 = vmatprep.mubr.bf16.mxu0 0
      %4327 = vmatmul.mubr.bf16.gmra.mxu0 %v4213
      %v4328 = vpop.f32.mrf.mxu0
      %v4329 = vadd.f32 0.0, %v4328
      %v4330 = vpop.f32.mrf.mxu0
      %v4331 = vpop.f32.mrf.mxu0
      %v4332 = vadd.f32 0.0, %v4331
      %v4333 = vpop.f32.mrf.mxu0
      %4334 = vmatprep.mubr.bf16.mxu0 0
      %4335 = vmatmul.mubr.bf16.gmra.mxu0 %v4216
      %v4336 = vpop.f32.mrf.mxu0
      %v4337 = vadd.f32 0.0, %v4336
      %v4338 = vpop.f32.mrf.mxu0
      %v4339 = vpop.f32.mrf.mxu0
      %v4340 = vadd.f32 0.0, %v4339
      %v4341 = vpop.f32.mrf.mxu0
      %4342 = vmatprep.mubr.bf16.mxu0 0
      %4343 = vmatmul.mubr.bf16.gmra.mxu0 %v4219
      %v4344 = vpop.f32.mrf.mxu0
      %v4345 = vadd.f32 0.0, %v4344
      %v4346 = vpop.f32.mrf.mxu0
      %v4347 = vpop.f32.mrf.mxu0
      %v4348 = vadd.f32 0.0, %v4347
      %v4349 = vpop.f32.mrf.mxu0
      %4350 = vmatprep.mubr.bf16.mxu0 0
      %4351 = vmatmul.mubr.bf16.gmra.mxu0 %v4222
      %v4352 = vpop.f32.mrf.mxu0
      %v4353 = vadd.f32 0.0, %v4352
      %v4354 = vpop.f32.mrf.mxu0
      %v4355 = vpop.f32.mrf.mxu0
      %v4356 = vadd.f32 0.0, %v4355
      %v4357 = vpop.f32.mrf.mxu0
      %4358 = vmatprep.mubr.bf16.mxu0 0
      %4359 = vmatmul.mubr.bf16.gmra.mxu0 %v4225
      %v4360 = vpop.f32.mrf.mxu0
      %v4361 = vadd.f32 0.0, %v4360
      %v4362 = vpop.f32.mrf.mxu0
      %v4363 = vpop.f32.mrf.mxu0
      %v4364 = vadd.f32 0.0, %v4363
      %v4365 = vpop.f32.mrf.mxu0
      %4366 = vmatprep.mubr.bf16.mxu0 0
      %4367 = vmatmul.mubr.bf16.gmra.mxu0 %v4228
      %v4368 = vpop.f32.mrf.mxu0
      %v4369 = vadd.f32 0.0, %v4368
      %v4370 = vpop.f32.mrf.mxu0
      %v4371 = vpop.f32.mrf.mxu0
      %v4372 = vadd.f32 0.0, %v4371
      %v4373 = vpop.f32.mrf.mxu0
      %4374 = vmatprep.mubr.bf16.mxu0 0
      %4375 = vmatmul.mubr.bf16.gmra.mxu0 %v4231
      %v4376 = vpop.f32.mrf.mxu0
      %v4377 = vadd.f32 0.0, %v4376
      %v4378 = vpop.f32.mrf.mxu0
      %v4379 = vpop.f32.mrf.mxu0
      %v4380 = vadd.f32 0.0, %v4379
      %v4381 = vpop.f32.mrf.mxu0
      %4382 = vmatprep.mubr.bf16.mxu0 0
      %4383 = vmatmul.mubr.bf16.gmra.mxu0 %v4234
      %v4384 = vpop.f32.mrf.mxu0
      %v4385 = vadd.f32 0.0, %v4384
      %v4386 = vpop.f32.mrf.mxu0
      %v4387 = vpop.f32.mrf.mxu0
      %v4388 = vadd.f32 0.0, %v4387
      %v4389 = vpop.f32.mrf.mxu0
      %4390 = vmatprep.mubr.bf16.mxu0 0
      %4391 = vmatmul.mubr.bf16.gmra.mxu0 %v4237
      %v4392 = vpop.f32.mrf.mxu0
      %v4393 = vadd.f32 0.0, %v4392
      %v4394 = vpop.f32.mrf.mxu0
      %v4395 = vpop.f32.mrf.mxu0
      %v4396 = vadd.f32 0.0, %v4395
      %v4397 = vpop.f32.mrf.mxu0
      %4398 = vmatprep.mubr.bf16.mxu0 0
      %4399 = vmatmul.mubr.bf16.gmra.mxu0 %v4240
      %v4400 = vpop.f32.mrf.mxu0
      %v4401 = vadd.f32 0.0, %v4400
      %v4402 = vpop.f32.mrf.mxu0
      %v4403 = vpop.f32.mrf.mxu0
      %v4404 = vadd.f32 0.0, %v4403
      %v4405 = vpop.f32.mrf.mxu0
      %4406 = vdwg.mxu0
      %v4408 = vsel %vm4193, %v799, 0
      %v4411 = vsel %vm4193, %v800, 0
      %v4414 = vsel %vm4193, %v801, 0
      %v4417 = vsel %vm4193, %v802, 0
      %v4420 = vsel %vm4193, %v803, 0
      %v4423 = vsel %vm4193, %v804, 0
      %v4426 = vsel %vm4193, %v805, 0
      %v4429 = vsel %vm4193, %v806, 0
      %v4432 = vsel %vm4193, %v807, 0
      %v4435 = vsel %vm4193, %v808, 0
      %v4438 = vsel %vm4193, %v809, 0
      %v4441 = vsel %vm4193, %v810, 0
      %v4444 = vsel %vm4193, %v811, 0
      %v4447 = vsel %vm4193, %v812, 0
      %v4450 = vsel %vm4193, %v813, 0
      %v4453 = vsel %vm4193, %v814, 0
      %v4456 = vsel %vm4242, %v815, 0
      %4458 = vmatprep.subr.bf16.mxu0 0
      %4459 = vmatpush1.bf16.msra.mxu0 0
      %4460 = vmatprep.subr.bf16.mxu0 0
      %4461 = vmatpush1.bf16.msra.mxu0 0
      %4462 = vmatprep.subr.bf16.mxu0 0
      %4463 = vmatpush1.bf16.msra.mxu0 0
      %4464 = vmatprep.subr.bf16.mxu0 0
      %4465 = vmatpush1.bf16.msra.mxu0 0
      %4466 = vmatprep.subr.bf16.mxu0 0
      %4467 = vmatpush1.bf16.msra.mxu0 0
      %4468 = vmatprep.subr.bf16.mxu0 0
      %4469 = vmatpush1.bf16.msra.mxu0 0
      %4470 = vmatprep.subr.bf16.mxu0 0
      %4471 = vmatpush1.bf16.msra.mxu0 0
      %4472 = vmatprep.subr.bf16.mxu0 0
      %4473 = vmatpush1.bf16.msra.mxu0 %v4456
      %4474 = vmatprep.subr.bf16.mxu0 0
      %4475 = vmatpush2.bf16.msra.mxu0 0
      %4476 = vmatprep.subr.bf16.mxu0 0
      %4477 = vmatpush2.bf16.msra.mxu0 0
      %4478 = vmatprep.subr.bf16.mxu0 0
      %4479 = vmatpush2.bf16.msra.mxu0 0
      %4480 = vmatprep.subr.bf16.mxu0 0
      %4481 = vmatpush2.bf16.msra.mxu0 0
      %4482 = vmatprep.subr.bf16.mxu0 0
      %4483 = vmatpush2.bf16.msra.mxu0 0
      %4484 = vmatprep.subr.bf16.mxu0 0
      %4485 = vmatpush2.bf16.msra.mxu0 0
      %4486 = vmatprep.subr.bf16.mxu0 0
      %4487 = vmatpush2.bf16.msra.mxu0 0
      %4488 = vmatprep.subr.bf16.mxu0 0
      %4489 = vmatpush2.bf16.msra.mxu0 0
      %4490 = vmatprep.mubr.bf16.mxu0 0
      %4491 = vmatmul.mubr.bf16.gmra.mxu0 %v4408
      %v4492 = vpop.f32.mrf.mxu0
      %v4493 = vadd.f32 %v4281, %v4492
      %v4494 = vpop.f32.mrf.mxu0
      %v4495 = vpop.f32.mrf.mxu0
      %v4496 = vadd.f32 %v4284, %v4495
      %v4497 = vpop.f32.mrf.mxu0
      %4498 = vmatprep.mubr.bf16.mxu0 0
      %4499 = vmatmul.mubr.bf16.gmra.mxu0 %v4411
      %v4500 = vpop.f32.mrf.mxu0
      %v4501 = vadd.f32 %v4289, %v4500
      %v4502 = vpop.f32.mrf.mxu0
      %v4503 = vpop.f32.mrf.mxu0
      %v4504 = vadd.f32 %v4292, %v4503
      %v4505 = vpop.f32.mrf.mxu0
      %4506 = vmatprep.mubr.bf16.mxu0 0
      %4507 = vmatmul.mubr.bf16.gmra.mxu0 %v4414
      %v4508 = vpop.f32.mrf.mxu0
      %v4509 = vadd.f32 %v4297, %v4508
      %v4510 = vpop.f32.mrf.mxu0
      %v4511 = vpop.f32.mrf.mxu0
      %v4512 = vadd.f32 %v4300, %v4511
      %v4513 = vpop.f32.mrf.mxu0
      %4514 = vmatprep.mubr.bf16.mxu0 0
      %4515 = vmatmul.mubr.bf16.gmra.mxu0 %v4417
      %v4516 = vpop.f32.mrf.mxu0
      %v4517 = vadd.f32 %v4305, %v4516
      %v4518 = vpop.f32.mrf.mxu0
      %v4519 = vpop.f32.mrf.mxu0
      %v4520 = vadd.f32 %v4308, %v4519
      %v4521 = vpop.f32.mrf.mxu0
      %4522 = vmatprep.mubr.bf16.mxu0 0
      %4523 = vmatmul.mubr.bf16.gmra.mxu0 %v4420
      %v4524 = vpop.f32.mrf.mxu0
      %v4525 = vadd.f32 %v4313, %v4524
      %v4526 = vpop.f32.mrf.mxu0
      %v4527 = vpop.f32.mrf.mxu0
      %v4528 = vadd.f32 %v4316, %v4527
      %v4529 = vpop.f32.mrf.mxu0
      %4530 = vmatprep.mubr.bf16.mxu0 0
      %4531 = vmatmul.mubr.bf16.gmra.mxu0 %v4423
      %v4532 = vpop.f32.mrf.mxu0
      %v4533 = vadd.f32 %v4321, %v4532
      %v4534 = vpop.f32.mrf.mxu0
      %v4535 = vpop.f32.mrf.mxu0
      %v4536 = vadd.f32 %v4324, %v4535
      %v4537 = vpop.f32.mrf.mxu0
      %4538 = vmatprep.mubr.bf16.mxu0 0
      %4539 = vmatmul.mubr.bf16.gmra.mxu0 %v4426
      %v4540 = vpop.f32.mrf.mxu0
      %v4541 = vadd.f32 %v4329, %v4540
      %v4542 = vpop.f32.mrf.mxu0
      %v4543 = vpop.f32.mrf.mxu0
      %v4544 = vadd.f32 %v4332, %v4543
      %v4545 = vpop.f32.mrf.mxu0
      %4546 = vmatprep.mubr.bf16.mxu0 0
      %4547 = vmatmul.mubr.bf16.gmra.mxu0 %v4429
      %v4548 = vpop.f32.mrf.mxu0
      %v4549 = vadd.f32 %v4337, %v4548
      %v4550 = vpop.f32.mrf.mxu0
      %v4551 = vpop.f32.mrf.mxu0
      %v4552 = vadd.f32 %v4340, %v4551
      %v4553 = vpop.f32.mrf.mxu0
      %4554 = vmatprep.mubr.bf16.mxu0 0
      %4555 = vmatmul.mubr.bf16.gmra.mxu0 %v4432
      %v4556 = vpop.f32.mrf.mxu0
      %v4557 = vadd.f32 %v4345, %v4556
      %v4558 = vpop.f32.mrf.mxu0
      %v4559 = vpop.f32.mrf.mxu0
      %v4560 = vadd.f32 %v4348, %v4559
      %v4561 = vpop.f32.mrf.mxu0
      %4562 = vmatprep.mubr.bf16.mxu0 0
      %4563 = vmatmul.mubr.bf16.gmra.mxu0 %v4435
      %v4564 = vpop.f32.mrf.mxu0
      %v4565 = vadd.f32 %v4353, %v4564
      %v4566 = vpop.f32.mrf.mxu0
      %v4567 = vpop.f32.mrf.mxu0
      %v4568 = vadd.f32 %v4356, %v4567
      %v4569 = vpop.f32.mrf.mxu0
      %4570 = vmatprep.mubr.bf16.mxu0 0
      %4571 = vmatmul.mubr.bf16.gmra.mxu0 %v4438
      %v4572 = vpop.f32.mrf.mxu0
      %v4573 = vadd.f32 %v4361, %v4572
      %v4574 = vpop.f32.mrf.mxu0
      %v4575 = vpop.f32.mrf.mxu0
      %v4576 = vadd.f32 %v4364, %v4575
      %v4577 = vpop.f32.mrf.mxu0
      %4578 = vmatprep.mubr.bf16.mxu0 0
      %4579 = vmatmul.mubr.bf16.gmra.mxu0 %v4441
      %v4580 = vpop.f32.mrf.mxu0
      %v4581 = vadd.f32 %v4369, %v4580
      %v4582 = vpop.f32.mrf.mxu0
      %v4583 = vpop.f32.mrf.mxu0
      %v4584 = vadd.f32 %v4372, %v4583
      %v4585 = vpop.f32.mrf.mxu0
      %4586 = vmatprep.mubr.bf16.mxu0 0
      %4587 = vmatmul.mubr.bf16.gmra.mxu0 %v4444
      %v4588 = vpop.f32.mrf.mxu0
      %v4589 = vadd.f32 %v4377, %v4588
      %v4590 = vpop.f32.mrf.mxu0
      %v4591 = vpop.f32.mrf.mxu0
      %v4592 = vadd.f32 %v4380, %v4591
      %v4593 = vpop.f32.mrf.mxu0
      %4594 = vmatprep.mubr.bf16.mxu0 0
      %4595 = vmatmul.mubr.bf16.gmra.mxu0 %v4447
      %v4596 = vpop.f32.mrf.mxu0
      %v4597 = vadd.f32 %v4385, %v4596
      %v4598 = vpop.f32.mrf.mxu0
      %v4599 = vpop.f32.mrf.mxu0
      %v4600 = vadd.f32 %v4388, %v4599
      %v4601 = vpop.f32.mrf.mxu0
      %4602 = vmatprep.mubr.bf16.mxu0 0
      %4603 = vmatmul.mubr.bf16.gmra.mxu0 %v4450
      %v4604 = vpop.f32.mrf.mxu0
      %v4605 = vadd.f32 %v4393, %v4604
      %v4606 = vpop.f32.mrf.mxu0
      %v4607 = vpop.f32.mrf.mxu0
      %v4608 = vadd.f32 %v4396, %v4607
      %v4609 = vpop.f32.mrf.mxu0
      %4610 = vmatprep.mubr.bf16.mxu0 0
      %4611 = vmatmul.mubr.bf16.gmra.mxu0 %v4453
      %v4612 = vpop.f32.mrf.mxu0
      %v4613 = vadd.f32 %v4401, %v4612
      %v4614 = vpop.f32.mrf.mxu0
      %v4615 = vpop.f32.mrf.mxu0
      %v4616 = vadd.f32 %v4404, %v4615
      %v4617 = vpop.f32.mrf.mxu0
      %4618 = vdwg.mxu0
      %s4619 = scalar_lea.vmem %s2, 52
      %v4620 = vld [vmem:[%s4619] sm:$0xf]
      %s4621 = scalar_lea.vmem %s5, 2
      %v4622 = vld [vmem:[%s4621] sm:$0x1]
      %v4624 = vlaneseq
      %v4625 = vshrl.u32 %v4624, 7
      %v4626 = vsub.s32 0, %v4625
      %v4627 = vrot.slane %v4622, %v4626
      %v4630 = vsel %vm602, %v4620, 0
      %4632 = vmatprep.subr.bf16.mxu0 0
      %4633 = vmatpush1.bf16.msra.mxu0 0
      %4634 = vmatprep.subr.bf16.mxu0 0
      %4635 = vmatpush1.bf16.msra.mxu0 0
      %4636 = vmatprep.subr.bf16.mxu0 0
      %4637 = vmatpush1.bf16.msra.mxu0 0
      %4638 = vmatprep.subr.bf16.mxu0 0
      %4639 = vmatpush1.bf16.msra.mxu0 0
      %4640 = vmatprep.subr.bf16.mxu0 0
      %4641 = vmatpush1.bf16.msra.mxu0 0
      %4642 = vmatprep.subr.bf16.mxu0 0
      %4643 = vmatpush1.bf16.msra.mxu0 0
      %4644 = vmatprep.subr.bf16.mxu0 0
      %4645 = vmatpush1.bf16.msra.mxu0 0
      %4646 = vmatprep.subr.bf16.mxu0 0
      %4647 = vmatpush1.bf16.msra.mxu0 %v4630
      %4648 = vmatprep.subr.bf16.mxu0 0
      %4649 = vmatpush2.bf16.msra.mxu0 0
      %4650 = vmatprep.subr.bf16.mxu0 0
      %4651 = vmatpush2.bf16.msra.mxu0 0
      %4652 = vmatprep.subr.bf16.mxu0 0
      %4653 = vmatpush2.bf16.msra.mxu0 0
      %4654 = vmatprep.subr.bf16.mxu0 0
      %4655 = vmatpush2.bf16.msra.mxu0 0
      %4656 = vmatprep.subr.bf16.mxu0 0
      %4657 = vmatpush2.bf16.msra.mxu0 0
      %4658 = vmatprep.subr.bf16.mxu0 0
      %4659 = vmatpush2.bf16.msra.mxu0 0
      %4660 = vmatprep.subr.bf16.mxu0 0
      %4661 = vmatpush2.bf16.msra.mxu0 0
      %4662 = vmatprep.subr.bf16.mxu0 0
      %4663 = vmatpush2.bf16.msra.mxu0 0
      %4664 = vmatprep.mubr.bf16.mxu0 0
      %4665 = vmatmul.mubr.bf16.gmra.mxu0 %v555
      %v4666 = vpop.f32.mrf.mxu0
      %v4667 = vadd.f32 %v4627, %v4666
      %v4668 = vpop.f32.mrf.mxu0
      %v4669 = vpop.f32.mrf.mxu0
      %v4670 = vadd.f32 %v4627, %v4669
      %v4671 = vpop.f32.mrf.mxu0
      %4672 = vmatprep.mubr.bf16.mxu0 0
      %4673 = vmatmul.mubr.bf16.gmra.mxu0 %v558
      %v4674 = vpop.f32.mrf.mxu0
      %v4675 = vadd.f32 %v4627, %v4674
      %v4676 = vpop.f32.mrf.mxu0
      %v4677 = vpop.f32.mrf.mxu0
      %v4678 = vadd.f32 %v4627, %v4677
      %v4679 = vpop.f32.mrf.mxu0
      %4680 = vmatprep.mubr.bf16.mxu0 0
      %4681 = vmatmul.mubr.bf16.gmra.mxu0 %v561
      %v4682 = vpop.f32.mrf.mxu0
      %v4683 = vadd.f32 %v4627, %v4682
      %v4684 = vpop.f32.mrf.mxu0
      %v4685 = vpop.f32.mrf.mxu0
      %v4686 = vadd.f32 %v4627, %v4685
      %v4687 = vpop.f32.mrf.mxu0
      %4688 = vmatprep.mubr.bf16.mxu0 0
      %4689 = vmatmul.mubr.bf16.gmra.mxu0 %v564
      %v4690 = vpop.f32.mrf.mxu0
      %v4691 = vadd.f32 %v4627, %v4690
      %v4692 = vpop.f32.mrf.mxu0
      %v4693 = vpop.f32.mrf.mxu0
      %v4694 = vadd.f32 %v4627, %v4693
      %v4695 = vpop.f32.mrf.mxu0
      %4696 = vmatprep.mubr.bf16.mxu0 0
      %4697 = vmatmul.mubr.bf16.gmra.mxu0 %v567
      %v4698 = vpop.f32.mrf.mxu0
      %v4699 = vadd.f32 %v4627, %v4698
      %v4700 = vpop.f32.mrf.mxu0
      %v4701 = vpop.f32.mrf.mxu0
      %v4702 = vadd.f32 %v4627, %v4701
      %v4703 = vpop.f32.mrf.mxu0
      %4704 = vmatprep.mubr.bf16.mxu0 0
      %4705 = vmatmul.mubr.bf16.gmra.mxu0 %v570
      %v4706 = vpop.f32.mrf.mxu0
      %v4707 = vadd.f32 %v4627, %v4706
      %v4708 = vpop.f32.mrf.mxu0
      %v4709 = vpop.f32.mrf.mxu0
      %v4710 = vadd.f32 %v4627, %v4709
      %v4711 = vpop.f32.mrf.mxu0
      %4712 = vmatprep.mubr.bf16.mxu0 0
      %4713 = vmatmul.mubr.bf16.gmra.mxu0 %v573
      %v4714 = vpop.f32.mrf.mxu0
      %v4715 = vadd.f32 %v4627, %v4714
      %v4716 = vpop.f32.mrf.mxu0
      %v4717 = vpop.f32.mrf.mxu0
      %v4718 = vadd.f32 %v4627, %v4717
      %v4719 = vpop.f32.mrf.mxu0
      %4720 = vmatprep.mubr.bf16.mxu0 0
      %4721 = vmatmul.mubr.bf16.gmra.mxu0 %v576
      %v4722 = vpop.f32.mrf.mxu0
      %v4723 = vadd.f32 %v4627, %v4722
      %v4724 = vpop.f32.mrf.mxu0
      %v4725 = vpop.f32.mrf.mxu0
      %v4726 = vadd.f32 %v4627, %v4725
      %v4727 = vpop.f32.mrf.mxu0
      %4728 = vmatprep.mubr.bf16.mxu0 0
      %4729 = vmatmul.mubr.bf16.gmra.mxu0 %v579
      %v4730 = vpop.f32.mrf.mxu0
      %v4731 = vadd.f32 %v4627, %v4730
      %v4732 = vpop.f32.mrf.mxu0
      %v4733 = vpop.f32.mrf.mxu0
      %v4734 = vadd.f32 %v4627, %v4733
      %v4735 = vpop.f32.mrf.mxu0
      %4736 = vmatprep.mubr.bf16.mxu0 0
      %4737 = vmatmul.mubr.bf16.gmra.mxu0 %v582
      %v4738 = vpop.f32.mrf.mxu0
      %v4739 = vadd.f32 %v4627, %v4738
      %v4740 = vpop.f32.mrf.mxu0
      %v4741 = vpop.f32.mrf.mxu0
      %v4742 = vadd.f32 %v4627, %v4741
      %v4743 = vpop.f32.mrf.mxu0
      %4744 = vmatprep.mubr.bf16.mxu0 0
      %4745 = vmatmul.mubr.bf16.gmra.mxu0 %v585
      %v4746 = vpop.f32.mrf.mxu0
      %v4747 = vadd.f32 %v4627, %v4746
      %v4748 = vpop.f32.mrf.mxu0
      %v4749 = vpop.f32.mrf.mxu0
      %v4750 = vadd.f32 %v4627, %v4749
      %v4751 = vpop.f32.mrf.mxu0
      %4752 = vmatprep.mubr.bf16.mxu0 0
      %4753 = vmatmul.mubr.bf16.gmra.mxu0 %v588
      %v4754 = vpop.f32.mrf.mxu0
      %v4755 = vadd.f32 %v4627, %v4754
      %v4756 = vpop.f32.mrf.mxu0
      %v4757 = vpop.f32.mrf.mxu0
      %v4758 = vadd.f32 %v4627, %v4757
      %v4759 = vpop.f32.mrf.mxu0
      %4760 = vmatprep.mubr.bf16.mxu0 0
      %4761 = vmatmul.mubr.bf16.gmra.mxu0 %v591
      %v4762 = vpop.f32.mrf.mxu0
      %v4763 = vadd.f32 %v4627, %v4762
      %v4764 = vpop.f32.mrf.mxu0
      %v4765 = vpop.f32.mrf.mxu0
      %v4766 = vadd.f32 %v4627, %v4765
      %v4767 = vpop.f32.mrf.mxu0
      %4768 = vmatprep.mubr.bf16.mxu0 0
      %4769 = vmatmul.mubr.bf16.gmra.mxu0 %v594
      %v4770 = vpop.f32.mrf.mxu0
      %v4771 = vadd.f32 %v4627, %v4770
      %v4772 = vpop.f32.mrf.mxu0
      %v4773 = vpop.f32.mrf.mxu0
      %v4774 = vadd.f32 %v4627, %v4773
      %v4775 = vpop.f32.mrf.mxu0
      %4776 = vmatprep.mubr.bf16.mxu0 0
      %4777 = vmatmul.mubr.bf16.gmra.mxu0 %v597
      %v4778 = vpop.f32.mrf.mxu0
      %v4779 = vadd.f32 %v4627, %v4778
      %v4780 = vpop.f32.mrf.mxu0
      %v4781 = vpop.f32.mrf.mxu0
      %v4782 = vadd.f32 %v4627, %v4781
      %v4783 = vpop.f32.mrf.mxu0
      %4784 = vmatprep.mubr.bf16.mxu0 0
      %4785 = vmatmul.mubr.bf16.gmra.mxu0 %v600
      %v4786 = vpop.f32.mrf.mxu0
      %v4787 = vadd.f32 %v4627, %v4786
      %v4788 = vpop.f32.mrf.mxu0
      %v4789 = vpop.f32.mrf.mxu0
      %v4790 = vadd.f32 %v4627, %v4789
      %v4791 = vpop.f32.mrf.mxu0
      %4792 = vdwg.mxu0
      %v4793 = vmax.f32 %v4667, 0.0
      %v4794 = vmax.f32 %v4670, 0.0
      %v4795 = vmax.f32 %v4675, 0.0
      %v4796 = vmax.f32 %v4678, 0.0
      %v4797 = vmax.f32 %v4683, 0.0
      %v4798 = vmax.f32 %v4686, 0.0
      %v4799 = vmax.f32 %v4691, 0.0
      %v4800 = vmax.f32 %v4694, 0.0
      %v4801 = vmax.f32 %v4699, 0.0
      %v4802 = vmax.f32 %v4702, 0.0
      %v4803 = vmax.f32 %v4707, 0.0
      %v4804 = vmax.f32 %v4710, 0.0
      %v4805 = vmax.f32 %v4715, 0.0
      %v4806 = vmax.f32 %v4718, 0.0
      %v4807 = vmax.f32 %v4723, 0.0
      %v4808 = vmax.f32 %v4726, 0.0
      %v4809 = vmax.f32 %v4731, 0.0
      %v4810 = vmax.f32 %v4734, 0.0
      %v4811 = vmax.f32 %v4739, 0.0
      %v4812 = vmax.f32 %v4742, 0.0
      %v4813 = vmax.f32 %v4747, 0.0
      %v4814 = vmax.f32 %v4750, 0.0
      %v4815 = vmax.f32 %v4755, 0.0
      %v4816 = vmax.f32 %v4758, 0.0
      %v4817 = vmax.f32 %v4763, 0.0
      %v4818 = vmax.f32 %v4766, 0.0
      %v4819 = vmax.f32 %v4771, 0.0
      %v4820 = vmax.f32 %v4774, 0.0
      %v4821 = vmax.f32 %v4779, 0.0
      %v4822 = vmax.f32 %v4782, 0.0
      %v4823 = vmax.f32 %v4787, 0.0
      %v4824 = vmax.f32 %v4790, 0.0
      %v4825 = vpack.c.bf16 %v4794, %v4793
      %v4826 = vpack.c.bf16 %v4796, %v4795
      %v4827 = vpack.c.bf16 %v4798, %v4797
      %v4828 = vpack.c.bf16 %v4800, %v4799
      %v4829 = vpack.c.bf16 %v4802, %v4801
      %v4830 = vpack.c.bf16 %v4804, %v4803
      %v4831 = vpack.c.bf16 %v4806, %v4805
      %v4832 = vpack.c.bf16 %v4808, %v4807
      %v4833 = vpack.c.bf16 %v4810, %v4809
      %v4834 = vpack.c.bf16 %v4812, %v4811
      %v4835 = vpack.c.bf16 %v4814, %v4813
      %v4836 = vpack.c.bf16 %v4816, %v4815
      %v4837 = vpack.c.bf16 %v4818, %v4817
      %v4838 = vpack.c.bf16 %v4820, %v4819
      %v4839 = vpack.c.bf16 %v4822, %v4821
      %v4840 = vpack.c.bf16 %v4824, %v4823
      %s4841 = scalar_lea.vmem %s4, 4
      %v4842 = vld [vmem:[%s4841] sm:$0x3]
      %v4844 = vsel %vm4193, %v4825, 0
      %v4847 = vsel %vm4193, %v4826, 0
      %v4850 = vsel %vm4193, %v4827, 0
      %v4853 = vsel %vm4193, %v4828, 0
      %v4856 = vsel %vm4193, %v4829, 0
      %v4859 = vsel %vm4193, %v4830, 0
      %v4862 = vsel %vm4193, %v4831, 0
      %v4865 = vsel %vm4193, %v4832, 0
      %v4868 = vsel %vm4193, %v4833, 0
      %v4871 = vsel %vm4193, %v4834, 0
      %v4874 = vsel %vm4193, %v4835, 0
      %v4877 = vsel %vm4193, %v4836, 0
      %v4880 = vsel %vm4193, %v4837, 0
      %v4883 = vsel %vm4193, %v4838, 0
      %v4886 = vsel %vm4193, %v4839, 0
      %v4889 = vsel %vm4193, %v4840, 0
      %v4892 = vsel %vm4242, %v4842, 0
      %4894 = vmatprep.subr.bf16.mxu0 0
      %4895 = vmatpush1.bf16.msra.mxu0 0
      %4896 = vmatprep.subr.bf16.mxu0 0
      %4897 = vmatpush1.bf16.msra.mxu0 0
      %4898 = vmatprep.subr.bf16.mxu0 0
      %4899 = vmatpush1.bf16.msra.mxu0 0
      %4900 = vmatprep.subr.bf16.mxu0 0
      %4901 = vmatpush1.bf16.msra.mxu0 0
      %4902 = vmatprep.subr.bf16.mxu0 0
      %4903 = vmatpush1.bf16.msra.mxu0 0
      %4904 = vmatprep.subr.bf16.mxu0 0
      %4905 = vmatpush1.bf16.msra.mxu0 0
      %4906 = vmatprep.subr.bf16.mxu0 0
      %4907 = vmatpush1.bf16.msra.mxu0 0
      %4908 = vmatprep.subr.bf16.mxu0 0
      %4909 = vmatpush1.bf16.msra.mxu0 %v4892
      %4910 = vmatprep.subr.bf16.mxu0 0
      %4911 = vmatpush2.bf16.msra.mxu0 0
      %4912 = vmatprep.subr.bf16.mxu0 0
      %4913 = vmatpush2.bf16.msra.mxu0 0
      %4914 = vmatprep.subr.bf16.mxu0 0
      %4915 = vmatpush2.bf16.msra.mxu0 0
      %4916 = vmatprep.subr.bf16.mxu0 0
      %4917 = vmatpush2.bf16.msra.mxu0 0
      %4918 = vmatprep.subr.bf16.mxu0 0
      %4919 = vmatpush2.bf16.msra.mxu0 0
      %4920 = vmatprep.subr.bf16.mxu0 0
      %4921 = vmatpush2.bf16.msra.mxu0 0
      %4922 = vmatprep.subr.bf16.mxu0 0
      %4923 = vmatpush2.bf16.msra.mxu0 0
      %4924 = vmatprep.subr.bf16.mxu0 0
      %4925 = vmatpush2.bf16.msra.mxu0 0
      %4926 = vmatprep.mubr.bf16.mxu0 0
      %4927 = vmatmul.mubr.bf16.gmra.mxu0 %v4844
      %v4928 = vpop.f32.mrf.mxu0
      %v4929 = vadd.f32 0.0, %v4928
      %v4930 = vpop.f32.mrf.mxu0
      %v4931 = vpop.f32.mrf.mxu0
      %v4932 = vadd.f32 0.0, %v4931
      %v4933 = vpop.f32.mrf.mxu0
      %4934 = vmatprep.mubr.bf16.mxu0 0
      %4935 = vmatmul.mubr.bf16.gmra.mxu0 %v4847
      %v4936 = vpop.f32.mrf.mxu0
      %v4937 = vadd.f32 0.0, %v4936
      %v4938 = vpop.f32.mrf.mxu0
      %v4939 = vpop.f32.mrf.mxu0
      %v4940 = vadd.f32 0.0, %v4939
      %v4941 = vpop.f32.mrf.mxu0
      %4942 = vmatprep.mubr.bf16.mxu0 0
      %4943 = vmatmul.mubr.bf16.gmra.mxu0 %v4850
      %v4944 = vpop.f32.mrf.mxu0
      %v4945 = vadd.f32 0.0, %v4944
      %v4946 = vpop.f32.mrf.mxu0
      %v4947 = vpop.f32.mrf.mxu0
      %v4948 = vadd.f32 0.0, %v4947
      %v4949 = vpop.f32.mrf.mxu0
      %4950 = vmatprep.mubr.bf16.mxu0 0
      %4951 = vmatmul.mubr.bf16.gmra.mxu0 %v4853
      %v4952 = vpop.f32.mrf.mxu0
      %v4953 = vadd.f32 0.0, %v4952
      %v4954 = vpop.f32.mrf.mxu0
      %v4955 = vpop.f32.mrf.mxu0
      %v4956 = vadd.f32 0.0, %v4955
      %v4957 = vpop.f32.mrf.mxu0
      %4958 = vmatprep.mubr.bf16.mxu0 0
      %4959 = vmatmul.mubr.bf16.gmra.mxu0 %v4856
      %v4960 = vpop.f32.mrf.mxu0
      %v4961 = vadd.f32 0.0, %v4960
      %v4962 = vpop.f32.mrf.mxu0
      %v4963 = vpop.f32.mrf.mxu0
      %v4964 = vadd.f32 0.0, %v4963
      %v4965 = vpop.f32.mrf.mxu0
      %4966 = vmatprep.mubr.bf16.mxu0 0
      %4967 = vmatmul.mubr.bf16.gmra.mxu0 %v4859
      %v4968 = vpop.f32.mrf.mxu0
      %v4969 = vadd.f32 0.0, %v4968
      %v4970 = vpop.f32.mrf.mxu0
      %v4971 = vpop.f32.mrf.mxu0
      %v4972 = vadd.f32 0.0, %v4971
      %v4973 = vpop.f32.mrf.mxu0
      %4974 = vmatprep.mubr.bf16.mxu0 0
      %4975 = vmatmul.mubr.bf16.gmra.mxu0 %v4862
      %v4976 = vpop.f32.mrf.mxu0
      %v4977 = vadd.f32 0.0, %v4976
      %v4978 = vpop.f32.mrf.mxu0
      %v4979 = vpop.f32.mrf.mxu0
      %v4980 = vadd.f32 0.0, %v4979
      %v4981 = vpop.f32.mrf.mxu0
      %4982 = vmatprep.mubr.bf16.mxu0 0
      %4983 = vmatmul.mubr.bf16.gmra.mxu0 %v4865
      %v4984 = vpop.f32.mrf.mxu0
      %v4985 = vadd.f32 0.0, %v4984
      %v4986 = vpop.f32.mrf.mxu0
      %v4987 = vpop.f32.mrf.mxu0
      %v4988 = vadd.f32 0.0, %v4987
      %v4989 = vpop.f32.mrf.mxu0
      %4990 = vmatprep.mubr.bf16.mxu0 0
      %4991 = vmatmul.mubr.bf16.gmra.mxu0 %v4868
      %v4992 = vpop.f32.mrf.mxu0
      %v4993 = vadd.f32 0.0, %v4992
      %v4994 = vpop.f32.mrf.mxu0
      %v4995 = vpop.f32.mrf.mxu0
      %v4996 = vadd.f32 0.0, %v4995
      %v4997 = vpop.f32.mrf.mxu0
      %4998 = vmatprep.mubr.bf16.mxu0 0
      %4999 = vmatmul.mubr.bf16.gmra.mxu0 %v4871
      %v5000 = vpop.f32.mrf.mxu0
      %v5001 = vadd.f32 0.0, %v5000
      %v5002 = vpop.f32.mrf.mxu0
      %v5003 = vpop.f32.mrf.mxu0
      %v5004 = vadd.f32 0.0, %v5003
      %v5005 = vpop.f32.mrf.mxu0
      %5006 = vmatprep.mubr.bf16.mxu0 0
      %5007 = vmatmul.mubr.bf16.gmra.mxu0 %v4874
      %v5008 = vpop.f32.mrf.mxu0
      %v5009 = vadd.f32 0.0, %v5008
      %v5010 = vpop.f32.mrf.mxu0
      %v5011 = vpop.f32.mrf.mxu0
      %v5012 = vadd.f32 0.0, %v5011
      %v5013 = vpop.f32.mrf.mxu0
      %5014 = vmatprep.mubr.bf16.mxu0 0
      %5015 = vmatmul.mubr.bf16.gmra.mxu0 %v4877
      %v5016 = vpop.f32.mrf.mxu0
      %v5017 = vadd.f32 0.0, %v5016
      %v5018 = vpop.f32.mrf.mxu0
      %v5019 = vpop.f32.mrf.mxu0
      %v5020 = vadd.f32 0.0, %v5019
      %v5021 = vpop.f32.mrf.mxu0
      %5022 = vmatprep.mubr.bf16.mxu0 0
      %5023 = vmatmul.mubr.bf16.gmra.mxu0 %v4880
      %v5024 = vpop.f32.mrf.mxu0
      %v5025 = vadd.f32 0.0, %v5024
      %v5026 = vpop.f32.mrf.mxu0
      %v5027 = vpop.f32.mrf.mxu0
      %v5028 = vadd.f32 0.0, %v5027
      %v5029 = vpop.f32.mrf.mxu0
      %5030 = vmatprep.mubr.bf16.mxu0 0
      %5031 = vmatmul.mubr.bf16.gmra.mxu0 %v4883
      %v5032 = vpop.f32.mrf.mxu0
      %v5033 = vadd.f32 0.0, %v5032
      %v5034 = vpop.f32.mrf.mxu0
      %v5035 = vpop.f32.mrf.mxu0
      %v5036 = vadd.f32 0.0, %v5035
      %v5037 = vpop.f32.mrf.mxu0
      %5038 = vmatprep.mubr.bf16.mxu0 0
      %5039 = vmatmul.mubr.bf16.gmra.mxu0 %v4886
      %v5040 = vpop.f32.mrf.mxu0
      %v5041 = vadd.f32 0.0, %v5040
      %v5042 = vpop.f32.mrf.mxu0
      %v5043 = vpop.f32.mrf.mxu0
      %v5044 = vadd.f32 0.0, %v5043
      %v5045 = vpop.f32.mrf.mxu0
      %5046 = vmatprep.mubr.bf16.mxu0 0
      %5047 = vmatmul.mubr.bf16.gmra.mxu0 %v4889
      %v5048 = vpop.f32.mrf.mxu0
      %v5049 = vadd.f32 0.0, %v5048
      %v5050 = vpop.f32.mrf.mxu0
      %v5051 = vpop.f32.mrf.mxu0
      %v5052 = vadd.f32 0.0, %v5051
      %v5053 = vpop.f32.mrf.mxu0
      %5054 = vdwg.mxu0
      %v5055 = vadd.f32 %v4493, %v4929
      %v5056 = vadd.f32 %v4496, %v4932
      %v5057 = vadd.f32 %v4501, %v4937
      %v5058 = vadd.f32 %v4504, %v4940
      %v5059 = vadd.f32 %v4509, %v4945
      %v5060 = vadd.f32 %v4512, %v4948
      %v5061 = vadd.f32 %v4517, %v4953
      %v5062 = vadd.f32 %v4520, %v4956
      %v5063 = vadd.f32 %v4525, %v4961
      %v5064 = vadd.f32 %v4528, %v4964
      %v5065 = vadd.f32 %v4533, %v4969
      %v5066 = vadd.f32 %v4536, %v4972
      %v5067 = vadd.f32 %v4541, %v4977
      %v5068 = vadd.f32 %v4544, %v4980
      %v5069 = vadd.f32 %v4549, %v4985
      %v5070 = vadd.f32 %v4552, %v4988
      %v5071 = vadd.f32 %v4557, %v4993
      %v5072 = vadd.f32 %v4560, %v4996
      %v5073 = vadd.f32 %v4565, %v5001
      %v5074 = vadd.f32 %v4568, %v5004
      %v5075 = vadd.f32 %v4573, %v5009
      %v5076 = vadd.f32 %v4576, %v5012
      %v5077 = vadd.f32 %v4581, %v5017
      %v5078 = vadd.f32 %v4584, %v5020
      %v5079 = vadd.f32 %v4589, %v5025
      %v5080 = vadd.f32 %v4592, %v5028
      %v5081 = vadd.f32 %v4597, %v5033
      %v5082 = vadd.f32 %v4600, %v5036
      %v5083 = vadd.f32 %v4605, %v5041
      %v5084 = vadd.f32 %v4608, %v5044
      %v5085 = vadd.f32 %v4613, %v5049
      %v5086 = vadd.f32 %v4616, %v5052
      %s5087 = scalar_lea.vmem %s2, 88
      %v5088 = vld [vmem:[%s5087] sm:$0xf]
      %s5089 = scalar_lea.vmem %s5, 3
      %v5090 = vld [vmem:[%s5089] sm:$0x1]
      %v5092 = vlaneseq
      %v5093 = vshrl.u32 %v5092, 7
      %v5094 = vsub.s32 0, %v5093
      %v5095 = vrot.slane %v5090, %v5094
      %v5098 = vsel %vm602, %v5088, 0
      %5100 = vmatprep.subr.bf16.mxu0 0
      %5101 = vmatpush1.bf16.msra.mxu0 0
      %5102 = vmatprep.subr.bf16.mxu0 0
      %5103 = vmatpush1.bf16.msra.mxu0 0
      %5104 = vmatprep.subr.bf16.mxu0 0
      %5105 = vmatpush1.bf16.msra.mxu0 0
      %5106 = vmatprep.subr.bf16.mxu0 0
      %5107 = vmatpush1.bf16.msra.mxu0 0
      %5108 = vmatprep.subr.bf16.mxu0 0
      %5109 = vmatpush1.bf16.msra.mxu0 0
      %5110 = vmatprep.subr.bf16.mxu0 0
      %5111 = vmatpush1.bf16.msra.mxu0 0
      %5112 = vmatprep.subr.bf16.mxu0 0
      %5113 = vmatpush1.bf16.msra.mxu0 0
      %5114 = vmatprep.subr.bf16.mxu0 0
      %5115 = vmatpush1.bf16.msra.mxu0 %v5098
      %5116 = vmatprep.subr.bf16.mxu0 0
      %5117 = vmatpush2.bf16.msra.mxu0 0
      %5118 = vmatprep.subr.bf16.mxu0 0
      %5119 = vmatpush2.bf16.msra.mxu0 0
      %5120 = vmatprep.subr.bf16.mxu0 0
      %5121 = vmatpush2.bf16.msra.mxu0 0
      %5122 = vmatprep.subr.bf16.mxu0 0
      %5123 = vmatpush2.bf16.msra.mxu0 0
      %5124 = vmatprep.subr.bf16.mxu0 0
      %5125 = vmatpush2.bf16.msra.mxu0 0
      %5126 = vmatprep.subr.bf16.mxu0 0
      %5127 = vmatpush2.bf16.msra.mxu0 0
      %5128 = vmatprep.subr.bf16.mxu0 0
      %5129 = vmatpush2.bf16.msra.mxu0 0
      %5130 = vmatprep.subr.bf16.mxu0 0
      %5131 = vmatpush2.bf16.msra.mxu0 0
      %5132 = vmatprep.mubr.bf16.mxu0 0
      %5133 = vmatmul.mubr.bf16.gmra.mxu0 %v555
      %v5134 = vpop.f32.mrf.mxu0
      %v5135 = vadd.f32 %v5095, %v5134
      %v5136 = vpop.f32.mrf.mxu0
      %v5137 = vpop.f32.mrf.mxu0
      %v5138 = vadd.f32 %v5095, %v5137
      %v5139 = vpop.f32.mrf.mxu0
      %5140 = vmatprep.mubr.bf16.mxu0 0
      %5141 = vmatmul.mubr.bf16.gmra.mxu0 %v558
      %v5142 = vpop.f32.mrf.mxu0
      %v5143 = vadd.f32 %v5095, %v5142
      %v5144 = vpop.f32.mrf.mxu0
      %v5145 = vpop.f32.mrf.mxu0
      %v5146 = vadd.f32 %v5095, %v5145
      %v5147 = vpop.f32.mrf.mxu0
      %5148 = vmatprep.mubr.bf16.mxu0 0
      %5149 = vmatmul.mubr.bf16.gmra.mxu0 %v561
      %v5150 = vpop.f32.mrf.mxu0
      %v5151 = vadd.f32 %v5095, %v5150
      %v5152 = vpop.f32.mrf.mxu0
      %v5153 = vpop.f32.mrf.mxu0
      %v5154 = vadd.f32 %v5095, %v5153
      %v5155 = vpop.f32.mrf.mxu0
      %5156 = vmatprep.mubr.bf16.mxu0 0
      %5157 = vmatmul.mubr.bf16.gmra.mxu0 %v564
      %v5158 = vpop.f32.mrf.mxu0
      %v5159 = vadd.f32 %v5095, %v5158
      %v5160 = vpop.f32.mrf.mxu0
      %v5161 = vpop.f32.mrf.mxu0
      %v5162 = vadd.f32 %v5095, %v5161
      %v5163 = vpop.f32.mrf.mxu0
      %5164 = vmatprep.mubr.bf16.mxu0 0
      %5165 = vmatmul.mubr.bf16.gmra.mxu0 %v567
      %v5166 = vpop.f32.mrf.mxu0
      %v5167 = vadd.f32 %v5095, %v5166
      %v5168 = vpop.f32.mrf.mxu0
      %v5169 = vpop.f32.mrf.mxu0
      %v5170 = vadd.f32 %v5095, %v5169
      %v5171 = vpop.f32.mrf.mxu0
      %5172 = vmatprep.mubr.bf16.mxu0 0
      %5173 = vmatmul.mubr.bf16.gmra.mxu0 %v570
      %v5174 = vpop.f32.mrf.mxu0
      %v5175 = vadd.f32 %v5095, %v5174
      %v5176 = vpop.f32.mrf.mxu0
      %v5177 = vpop.f32.mrf.mxu0
      %v5178 = vadd.f32 %v5095, %v5177
      %v5179 = vpop.f32.mrf.mxu0
      %5180 = vmatprep.mubr.bf16.mxu0 0
      %5181 = vmatmul.mubr.bf16.gmra.mxu0 %v573
      %v5182 = vpop.f32.mrf.mxu0
      %v5183 = vadd.f32 %v5095, %v5182
      %v5184 = vpop.f32.mrf.mxu0
      %v5185 = vpop.f32.mrf.mxu0
      %v5186 = vadd.f32 %v5095, %v5185
      %v5187 = vpop.f32.mrf.mxu0
      %5188 = vmatprep.mubr.bf16.mxu0 0
      %5189 = vmatmul.mubr.bf16.gmra.mxu0 %v576
      %v5190 = vpop.f32.mrf.mxu0
      %v5191 = vadd.f32 %v5095, %v5190
      %v5192 = vpop.f32.mrf.mxu0
      %v5193 = vpop.f32.mrf.mxu0
      %v5194 = vadd.f32 %v5095, %v5193
      %v5195 = vpop.f32.mrf.mxu0
      %5196 = vmatprep.mubr.bf16.mxu0 0
      %5197 = vmatmul.mubr.bf16.gmra.mxu0 %v579
      %v5198 = vpop.f32.mrf.mxu0
      %v5199 = vadd.f32 %v5095, %v5198
      %v5200 = vpop.f32.mrf.mxu0
      %v5201 = vpop.f32.mrf.mxu0
      %v5202 = vadd.f32 %v5095, %v5201
      %v5203 = vpop.f32.mrf.mxu0
      %5204 = vmatprep.mubr.bf16.mxu0 0
      %5205 = vmatmul.mubr.bf16.gmra.mxu0 %v582
      %v5206 = vpop.f32.mrf.mxu0
      %v5207 = vadd.f32 %v5095, %v5206
      %v5208 = vpop.f32.mrf.mxu0
      %v5209 = vpop.f32.mrf.mxu0
      %v5210 = vadd.f32 %v5095, %v5209
      %v5211 = vpop.f32.mrf.mxu0
      %5212 = vmatprep.mubr.bf16.mxu0 0
      %5213 = vmatmul.mubr.bf16.gmra.mxu0 %v585
      %v5214 = vpop.f32.mrf.mxu0
      %v5215 = vadd.f32 %v5095, %v5214
      %v5216 = vpop.f32.mrf.mxu0
      %v5217 = vpop.f32.mrf.mxu0
      %v5218 = vadd.f32 %v5095, %v5217
      %v5219 = vpop.f32.mrf.mxu0
      %5220 = vmatprep.mubr.bf16.mxu0 0
      %5221 = vmatmul.mubr.bf16.gmra.mxu0 %v588
      %v5222 = vpop.f32.mrf.mxu0
      %v5223 = vadd.f32 %v5095, %v5222
      %v5224 = vpop.f32.mrf.mxu0
      %v5225 = vpop.f32.mrf.mxu0
      %v5226 = vadd.f32 %v5095, %v5225
      %v5227 = vpop.f32.mrf.mxu0
      %5228 = vmatprep.mubr.bf16.mxu0 0
      %5229 = vmatmul.mubr.bf16.gmra.mxu0 %v591
      %v5230 = vpop.f32.mrf.mxu0
      %v5231 = vadd.f32 %v5095, %v5230
      %v5232 = vpop.f32.mrf.mxu0
      %v5233 = vpop.f32.mrf.mxu0
      %v5234 = vadd.f32 %v5095, %v5233
      %v5235 = vpop.f32.mrf.mxu0
      %5236 = vmatprep.mubr.bf16.mxu0 0
      %5237 = vmatmul.mubr.bf16.gmra.mxu0 %v594
      %v5238 = vpop.f32.mrf.mxu0
      %v5239 = vadd.f32 %v5095, %v5238
      %v5240 = vpop.f32.mrf.mxu0
      %v5241 = vpop.f32.mrf.mxu0
      %v5242 = vadd.f32 %v5095, %v5241
      %v5243 = vpop.f32.mrf.mxu0
      %5244 = vmatprep.mubr.bf16.mxu0 0
      %5245 = vmatmul.mubr.bf16.gmra.mxu0 %v597
      %v5246 = vpop.f32.mrf.mxu0
      %v5247 = vadd.f32 %v5095, %v5246
      %v5248 = vpop.f32.mrf.mxu0
      %v5249 = vpop.f32.mrf.mxu0
      %v5250 = vadd.f32 %v5095, %v5249
      %v5251 = vpop.f32.mrf.mxu0
      %5252 = vmatprep.mubr.bf16.mxu0 0
      %5253 = vmatmul.mubr.bf16.gmra.mxu0 %v600
      %v5254 = vpop.f32.mrf.mxu0
      %v5255 = vadd.f32 %v5095, %v5254
      %v5256 = vpop.f32.mrf.mxu0
      %v5257 = vpop.f32.mrf.mxu0
      %v5258 = vadd.f32 %v5095, %v5257
      %v5259 = vpop.f32.mrf.mxu0
      %5260 = vdwg.mxu0
      %v5261 = vmax.f32 %v5135, 0.0
      %v5262 = vmax.f32 %v5138, 0.0
      %v5263 = vmax.f32 %v5143, 0.0
      %v5264 = vmax.f32 %v5146, 0.0
      %v5265 = vmax.f32 %v5151, 0.0
      %v5266 = vmax.f32 %v5154, 0.0
      %v5267 = vmax.f32 %v5159, 0.0
      %v5268 = vmax.f32 %v5162, 0.0
      %v5269 = vmax.f32 %v5167, 0.0
      %v5270 = vmax.f32 %v5170, 0.0
      %v5271 = vmax.f32 %v5175, 0.0
      %v5272 = vmax.f32 %v5178, 0.0
      %v5273 = vmax.f32 %v5183, 0.0
      %v5274 = vmax.f32 %v5186, 0.0
      %v5275 = vmax.f32 %v5191, 0.0
      %v5276 = vmax.f32 %v5194, 0.0
      %v5277 = vmax.f32 %v5199, 0.0
      %v5278 = vmax.f32 %v5202, 0.0
      %v5279 = vmax.f32 %v5207, 0.0
      %v5280 = vmax.f32 %v5210, 0.0
      %v5281 = vmax.f32 %v5215, 0.0
      %v5282 = vmax.f32 %v5218, 0.0
      %v5283 = vmax.f32 %v5223, 0.0
      %v5284 = vmax.f32 %v5226, 0.0
      %v5285 = vmax.f32 %v5231, 0.0
      %v5286 = vmax.f32 %v5234, 0.0
      %v5287 = vmax.f32 %v5239, 0.0
      %v5288 = vmax.f32 %v5242, 0.0
      %v5289 = vmax.f32 %v5247, 0.0
      %v5290 = vmax.f32 %v5250, 0.0
      %v5291 = vmax.f32 %v5255, 0.0
      %v5292 = vmax.f32 %v5258, 0.0
      %v5293 = vpack.c.bf16 %v5262, %v5261
      %v5294 = vpack.c.bf16 %v5264, %v5263
      %v5295 = vpack.c.bf16 %v5266, %v5265
      %v5296 = vpack.c.bf16 %v5268, %v5267
      %v5297 = vpack.c.bf16 %v5270, %v5269
      %v5298 = vpack.c.bf16 %v5272, %v5271
      %v5299 = vpack.c.bf16 %v5274, %v5273
      %v5300 = vpack.c.bf16 %v5276, %v5275
      %v5301 = vpack.c.bf16 %v5278, %v5277
      %v5302 = vpack.c.bf16 %v5280, %v5279
      %v5303 = vpack.c.bf16 %v5282, %v5281
      %v5304 = vpack.c.bf16 %v5284, %v5283
      %v5305 = vpack.c.bf16 %v5286, %v5285
      %v5306 = vpack.c.bf16 %v5288, %v5287
      %v5307 = vpack.c.bf16 %v5290, %v5289
      %v5308 = vpack.c.bf16 %v5292, %v5291
      %s5309 = scalar_lea.vmem %s4, 6
      %v5310 = vld [vmem:[%s5309] sm:$0x3]
      %v5312 = vsel %vm4193, %v5293, 0
      %v5315 = vsel %vm4193, %v5294, 0
      %v5318 = vsel %vm4193, %v5295, 0
      %v5321 = vsel %vm4193, %v5296, 0
      %v5324 = vsel %vm4193, %v5297, 0
      %v5327 = vsel %vm4193, %v5298, 0
      %v5330 = vsel %vm4193, %v5299, 0
      %v5333 = vsel %vm4193, %v5300, 0
      %v5336 = vsel %vm4193, %v5301, 0
      %v5339 = vsel %vm4193, %v5302, 0
      %v5342 = vsel %vm4193, %v5303, 0
      %v5345 = vsel %vm4193, %v5304, 0
      %v5348 = vsel %vm4193, %v5305, 0
      %v5351 = vsel %vm4193, %v5306, 0
      %v5354 = vsel %vm4193, %v5307, 0
      %v5357 = vsel %vm4193, %v5308, 0
      %v5360 = vsel %vm4242, %v5310, 0
      %5362 = vmatprep.subr.bf16.mxu0 0
      %5363 = vmatpush1.bf16.msra.mxu0 0
      %5364 = vmatprep.subr.bf16.mxu0 0
      %5365 = vmatpush1.bf16.msra.mxu0 0
      %5366 = vmatprep.subr.bf16.mxu0 0
      %5367 = vmatpush1.bf16.msra.mxu0 0
      %5368 = vmatprep.subr.bf16.mxu0 0
      %5369 = vmatpush1.bf16.msra.mxu0 0
      %5370 = vmatprep.subr.bf16.mxu0 0
      %5371 = vmatpush1.bf16.msra.mxu0 0
      %5372 = vmatprep.subr.bf16.mxu0 0
      %5373 = vmatpush1.bf16.msra.mxu0 0
      %5374 = vmatprep.subr.bf16.mxu0 0
      %5375 = vmatpush1.bf16.msra.mxu0 0
      %5376 = vmatprep.subr.bf16.mxu0 0
      %5377 = vmatpush1.bf16.msra.mxu0 %v5360
      %5378 = vmatprep.subr.bf16.mxu0 0
      %5379 = vmatpush2.bf16.msra.mxu0 0
      %5380 = vmatprep.subr.bf16.mxu0 0
      %5381 = vmatpush2.bf16.msra.mxu0 0
      %5382 = vmatprep.subr.bf16.mxu0 0
      %5383 = vmatpush2.bf16.msra.mxu0 0
      %5384 = vmatprep.subr.bf16.mxu0 0
      %5385 = vmatpush2.bf16.msra.mxu0 0
      %5386 = vmatprep.subr.bf16.mxu0 0
      %5387 = vmatpush2.bf16.msra.mxu0 0
      %5388 = vmatprep.subr.bf16.mxu0 0
      %5389 = vmatpush2.bf16.msra.mxu0 0
      %5390 = vmatprep.subr.bf16.mxu0 0
      %5391 = vmatpush2.bf16.msra.mxu0 0
      %5392 = vmatprep.subr.bf16.mxu0 0
      %5393 = vmatpush2.bf16.msra.mxu0 0
      %5394 = vmatprep.mubr.bf16.mxu0 0
      %5395 = vmatmul.mubr.bf16.gmra.mxu0 %v5312
      %v5396 = vpop.f32.mrf.mxu0
      %v5397 = vadd.f32 0.0, %v5396
      %v5398 = vpop.f32.mrf.mxu0
      %v5399 = vpop.f32.mrf.mxu0
      %v5400 = vadd.f32 0.0, %v5399
      %v5401 = vpop.f32.mrf.mxu0
      %5402 = vmatprep.mubr.bf16.mxu0 0
      %5403 = vmatmul.mubr.bf16.gmra.mxu0 %v5315
      %v5404 = vpop.f32.mrf.mxu0
      %v5405 = vadd.f32 0.0, %v5404
      %v5406 = vpop.f32.mrf.mxu0
      %v5407 = vpop.f32.mrf.mxu0
      %v5408 = vadd.f32 0.0, %v5407
      %v5409 = vpop.f32.mrf.mxu0
      %5410 = vmatprep.mubr.bf16.mxu0 0
      %5411 = vmatmul.mubr.bf16.gmra.mxu0 %v5318
      %v5412 = vpop.f32.mrf.mxu0
      %v5413 = vadd.f32 0.0, %v5412
      %v5414 = vpop.f32.mrf.mxu0
      %v5415 = vpop.f32.mrf.mxu0
      %v5416 = vadd.f32 0.0, %v5415
      %v5417 = vpop.f32.mrf.mxu0
      %5418 = vmatprep.mubr.bf16.mxu0 0
      %5419 = vmatmul.mubr.bf16.gmra.mxu0 %v5321
      %v5420 = vpop.f32.mrf.mxu0
      %v5421 = vadd.f32 0.0, %v5420
      %v5422 = vpop.f32.mrf.mxu0
      %v5423 = vpop.f32.mrf.mxu0
      %v5424 = vadd.f32 0.0, %v5423
      %v5425 = vpop.f32.mrf.mxu0
      %5426 = vmatprep.mubr.bf16.mxu0 0
      %5427 = vmatmul.mubr.bf16.gmra.mxu0 %v5324
      %v5428 = vpop.f32.mrf.mxu0
      %v5429 = vadd.f32 0.0, %v5428
      %v5430 = vpop.f32.mrf.mxu0
      %v5431 = vpop.f32.mrf.mxu0
      %v5432 = vadd.f32 0.0, %v5431
      %v5433 = vpop.f32.mrf.mxu0
      %5434 = vmatprep.mubr.bf16.mxu0 0
      %5435 = vmatmul.mubr.bf16.gmra.mxu0 %v5327
      %v5436 = vpop.f32.mrf.mxu0
      %v5437 = vadd.f32 0.0, %v5436
      %v5438 = vpop.f32.mrf.mxu0
      %v5439 = vpop.f32.mrf.mxu0
      %v5440 = vadd.f32 0.0, %v5439
      %v5441 = vpop.f32.mrf.mxu0
      %5442 = vmatprep.mubr.bf16.mxu0 0
      %5443 = vmatmul.mubr.bf16.gmra.mxu0 %v5330
      %v5444 = vpop.f32.mrf.mxu0
      %v5445 = vadd.f32 0.0, %v5444
      %v5446 = vpop.f32.mrf.mxu0
      %v5447 = vpop.f32.mrf.mxu0
      %v5448 = vadd.f32 0.0, %v5447
      %v5449 = vpop.f32.mrf.mxu0
      %5450 = vmatprep.mubr.bf16.mxu0 0
      %5451 = vmatmul.mubr.bf16.gmra.mxu0 %v5333
      %v5452 = vpop.f32.mrf.mxu0
      %v5453 = vadd.f32 0.0, %v5452
      %v5454 = vpop.f32.mrf.mxu0
      %v5455 = vpop.f32.mrf.mxu0
      %v5456 = vadd.f32 0.0, %v5455
      %v5457 = vpop.f32.mrf.mxu0
      %5458 = vmatprep.mubr.bf16.mxu0 0
      %5459 = vmatmul.mubr.bf16.gmra.mxu0 %v5336
      %v5460 = vpop.f32.mrf.mxu0
      %v5461 = vadd.f32 0.0, %v5460
      %v5462 = vpop.f32.mrf.mxu0
      %v5463 = vpop.f32.mrf.mxu0
      %v5464 = vadd.f32 0.0, %v5463
      %v5465 = vpop.f32.mrf.mxu0
      %5466 = vmatprep.mubr.bf16.mxu0 0
      %5467 = vmatmul.mubr.bf16.gmra.mxu0 %v5339
      %v5468 = vpop.f32.mrf.mxu0
      %v5469 = vadd.f32 0.0, %v5468
      %v5470 = vpop.f32.mrf.mxu0
      %v5471 = vpop.f32.mrf.mxu0
      %v5472 = vadd.f32 0.0, %v5471
      %v5473 = vpop.f32.mrf.mxu0
      %5474 = vmatprep.mubr.bf16.mxu0 0
      %5475 = vmatmul.mubr.bf16.gmra.mxu0 %v5342
      %v5476 = vpop.f32.mrf.mxu0
      %v5477 = vadd.f32 0.0, %v5476
      %v5478 = vpop.f32.mrf.mxu0
      %v5479 = vpop.f32.mrf.mxu0
      %v5480 = vadd.f32 0.0, %v5479
      %v5481 = vpop.f32.mrf.mxu0
      %5482 = vmatprep.mubr.bf16.mxu0 0
      %5483 = vmatmul.mubr.bf16.gmra.mxu0 %v5345
      %v5484 = vpop.f32.mrf.mxu0
      %v5485 = vadd.f32 0.0, %v5484
      %v5486 = vpop.f32.mrf.mxu0
      %v5487 = vpop.f32.mrf.mxu0
      %v5488 = vadd.f32 0.0, %v5487
      %v5489 = vpop.f32.mrf.mxu0
      %5490 = vmatprep.mubr.bf16.mxu0 0
      %5491 = vmatmul.mubr.bf16.gmra.mxu0 %v5348
      %v5492 = vpop.f32.mrf.mxu0
      %v5493 = vadd.f32 0.0, %v5492
      %v5494 = vpop.f32.mrf.mxu0
      %v5495 = vpop.f32.mrf.mxu0
      %v5496 = vadd.f32 0.0, %v5495
      %v5497 = vpop.f32.mrf.mxu0
      %5498 = vmatprep.mubr.bf16.mxu0 0
      %5499 = vmatmul.mubr.bf16.gmra.mxu0 %v5351
      %v5500 = vpop.f32.mrf.mxu0
      %v5501 = vadd.f32 0.0, %v5500
      %v5502 = vpop.f32.mrf.mxu0
      %v5503 = vpop.f32.mrf.mxu0
      %v5504 = vadd.f32 0.0, %v5503
      %v5505 = vpop.f32.mrf.mxu0
      %5506 = vmatprep.mubr.bf16.mxu0 0
      %5507 = vmatmul.mubr.bf16.gmra.mxu0 %v5354
      %v5508 = vpop.f32.mrf.mxu0
      %v5509 = vadd.f32 0.0, %v5508
      %v5510 = vpop.f32.mrf.mxu0
      %v5511 = vpop.f32.mrf.mxu0
      %v5512 = vadd.f32 0.0, %v5511
      %v5513 = vpop.f32.mrf.mxu0
      %5514 = vmatprep.mubr.bf16.mxu0 0
      %5515 = vmatmul.mubr.bf16.gmra.mxu0 %v5357
      %v5516 = vpop.f32.mrf.mxu0
      %v5517 = vadd.f32 0.0, %v5516
      %v5518 = vpop.f32.mrf.mxu0
      %v5519 = vpop.f32.mrf.mxu0
      %v5520 = vadd.f32 0.0, %v5519
      %v5521 = vpop.f32.mrf.mxu0
      %5522 = vdwg.mxu0
      %v5523 = vadd.f32 %v5055, %v5397
      %v5524 = vadd.f32 %v5056, %v5400
      %v5525 = vadd.f32 %v5057, %v5405
      %v5526 = vadd.f32 %v5058, %v5408
      %v5527 = vadd.f32 %v5059, %v5413
      %v5528 = vadd.f32 %v5060, %v5416
      %v5529 = vadd.f32 %v5061, %v5421
      %v5530 = vadd.f32 %v5062, %v5424
      %v5531 = vadd.f32 %v5063, %v5429
      %v5532 = vadd.f32 %v5064, %v5432
      %v5533 = vadd.f32 %v5065, %v5437
      %v5534 = vadd.f32 %v5066, %v5440
      %v5535 = vadd.f32 %v5067, %v5445
      %v5536 = vadd.f32 %v5068, %v5448
      %v5537 = vadd.f32 %v5069, %v5453
      %v5538 = vadd.f32 %v5070, %v5456
      %v5539 = vadd.f32 %v5071, %v5461
      %v5540 = vadd.f32 %v5072, %v5464
      %v5541 = vadd.f32 %v5073, %v5469
      %v5542 = vadd.f32 %v5074, %v5472
      %v5543 = vadd.f32 %v5075, %v5477
      %v5544 = vadd.f32 %v5076, %v5480
      %v5545 = vadd.f32 %v5077, %v5485
      %v5546 = vadd.f32 %v5078, %v5488
      %v5547 = vadd.f32 %v5079, %v5493
      %v5548 = vadd.f32 %v5080, %v5496
      %v5549 = vadd.f32 %v5081, %v5501
      %v5550 = vadd.f32 %v5082, %v5504
      %v5551 = vadd.f32 %v5083, %v5509
      %v5552 = vadd.f32 %v5084, %v5512
      %v5553 = vadd.f32 %v5085, %v5517
      %v5554 = vadd.f32 %v5086, %v5520
      %v5555 = vunpack.c.l.bf16 %v356
      %v5556 = vunpack.c.l.bf16 %v359
      %v5557 = vunpack.c.l.bf16 %v363
      %v5558 = vunpack.c.l.bf16 %v366
      %v5559 = vunpack.c.l.bf16 %v370
      %v5560 = vunpack.c.l.bf16 %v373
      %v5561 = vunpack.c.l.bf16 %v377
      %v5562 = vunpack.c.l.bf16 %v380
      %v5563 = vunpack.c.l.bf16 %v384
      %v5564 = vunpack.c.l.bf16 %v387
      %v5565 = vunpack.c.l.bf16 %v391
      %v5566 = vunpack.c.l.bf16 %v394
      %v5567 = vunpack.c.l.bf16 %v398
      %v5568 = vunpack.c.l.bf16 %v401
      %v5569 = vunpack.c.l.bf16 %v405
      %v5570 = vunpack.c.l.bf16 %v408
      %v5571 = vunpack.c.l.bf16 %v412
      %v5572 = vunpack.c.l.bf16 %v415
      %v5573 = vunpack.c.l.bf16 %v419
      %v5574 = vunpack.c.l.bf16 %v422
      %v5575 = vunpack.c.l.bf16 %v426
      %v5576 = vunpack.c.l.bf16 %v429
      %v5577 = vunpack.c.l.bf16 %v433
      %v5578 = vunpack.c.l.bf16 %v436
      %v5579 = vunpack.c.l.bf16 %v440
      %v5580 = vunpack.c.l.bf16 %v443
      %v5581 = vunpack.c.l.bf16 %v447
      %v5582 = vunpack.c.l.bf16 %v450
      %v5583 = vunpack.c.l.bf16 %v454
      %v5584 = vunpack.c.l.bf16 %v457
      %v5585 = vunpack.c.l.bf16 %v461
      %v5586 = vunpack.c.l.bf16 %v464
      %v5587 = vsel %vm553, %v5555, 0.0
      %v5588 = vsel %vm553, %v5556, 0.0
      %v5589 = vadd.f32 %v5587, %v5588
      %v5590 = vsel %vm553, %v5557, 0.0
      %v5591 = vadd.f32 %v5589, %v5590
      %v5592 = vsel %vm553, %v5558, 0.0
      %v5593 = vadd.f32 %v5591, %v5592
      %v5594 = vsel %vm553, %v5559, 0.0
      %v5595 = vadd.f32 %v5593, %v5594
      %v5596 = vsel %vm553, %v5560, 0.0
      %v5597 = vadd.f32 %v5595, %v5596
      %v5598 = vsel %vm553, %v5561, 0.0
      %v5599 = vadd.f32 %v5597, %v5598
      %v5600 = vsel %vm553, %v5562, 0.0
      %v5601 = vadd.f32 %v5599, %v5600
      %v5602 = vsel %vm553, %v5563, 0.0
      %v5603 = vadd.f32 %v5601, %v5602
      %v5604 = vsel %vm553, %v5564, 0.0
      %v5605 = vadd.f32 %v5603, %v5604
      %v5606 = vsel %vm553, %v5565, 0.0
      %v5607 = vadd.f32 %v5605, %v5606
      %v5608 = vsel %vm553, %v5566, 0.0
      %v5609 = vadd.f32 %v5607, %v5608
      %v5610 = vsel %vm553, %v5567, 0.0
      %v5611 = vadd.f32 %v5609, %v5610
      %v5612 = vsel %vm553, %v5568, 0.0
      %v5613 = vadd.f32 %v5611, %v5612
      %v5614 = vsel %vm553, %v5569, 0.0
      %v5615 = vadd.f32 %v5613, %v5614
      %v5616 = vsel %vm553, %v5570, 0.0
      %v5617 = vadd.f32 %v5615, %v5616
      %v5618 = vsel %vm553, %v5571, 0.0
      %v5619 = vadd.f32 %v5617, %v5618
      %v5620 = vsel %vm553, %v5572, 0.0
      %v5621 = vadd.f32 %v5619, %v5620
      %v5622 = vsel %vm553, %v5573, 0.0
      %v5623 = vadd.f32 %v5621, %v5622
      %v5624 = vsel %vm553, %v5574, 0.0
      %v5625 = vadd.f32 %v5623, %v5624
      %v5626 = vsel %vm553, %v5575, 0.0
      %v5627 = vadd.f32 %v5625, %v5626
      %v5628 = vsel %vm553, %v5576, 0.0
      %v5629 = vadd.f32 %v5627, %v5628
      %v5630 = vsel %vm553, %v5577, 0.0
      %v5631 = vadd.f32 %v5629, %v5630
      %v5632 = vsel %vm553, %v5578, 0.0
      %v5633 = vadd.f32 %v5631, %v5632
      %v5634 = vsel %vm553, %v5579, 0.0
      %v5635 = vadd.f32 %v5633, %v5634
      %v5636 = vsel %vm553, %v5580, 0.0
      %v5637 = vadd.f32 %v5635, %v5636
      %v5638 = vsel %vm553, %v5581, 0.0
      %v5639 = vadd.f32 %v5637, %v5638
      %v5640 = vsel %vm553, %v5582, 0.0
      %v5641 = vadd.f32 %v5639, %v5640
      %v5642 = vsel %vm553, %v5583, 0.0
      %v5643 = vadd.f32 %v5641, %v5642
      %v5644 = vsel %vm553, %v5584, 0.0
      %v5645 = vadd.f32 %v5643, %v5644
      %v5646 = vsel %vm553, %v5585, 0.0
      %v5647 = vadd.f32 %v5645, %v5646
      %v5648 = vsel %vm553, %v5586, 0.0
      %v5649 = vadd.f32 %v5647, %v5648
      %v5650 = vrot.slane %v5649, 4
      %v5651 = vadd.f32 %v5649, %v5650
      %v5652 = vrot.slane %v5651, 2
      %v5653 = vadd.f32 %v5651, %v5652
      %v5654 = vrot.slane %v5653, 1
      %v5655 = vadd.f32 %v5653, %v5654
      %v5656 = vrcp.pop 256.0
      %v5657 = vmul.f32 %v5655, %v5656
      %v5658 = vld [vmem:[%s3] sm:$0xf]
      %v5659 = vunpack.c.l.bf16 %v5658
      %s5660 = scalar_lea.vmem %s5, 4
      %v5661 = vld [vmem:[%s5660] sm:$0x1]
      %v5663 = vsel %vm553, %v5657, 0
      %5665 = vmatprep.subr.mxu0 0.0
      %5666 = vmatpush1.msra.mxu0 0.0
      %5667 = vmatprep.subr.mxu0 0.0
      %5668 = vmatpush1.msra.mxu0 0.0
      %5669 = vmatprep.subr.mxu0 0.0
      %5670 = vmatpush1.msra.mxu0 0.0
      %5671 = vmatprep.subr.mxu0 0.0
      %5672 = vmatpush1.msra.mxu0 0.0
      %5673 = vmatprep.subr.mxu0 0.0
      %5674 = vmatpush1.msra.mxu0 0.0
      %5675 = vmatprep.subr.mxu0 0.0
      %5676 = vmatpush1.msra.mxu0 0.0
      %5677 = vmatprep.subr.mxu0 0.0
      %5678 = vmatpush1.msra.mxu0 0.0
      %5679 = vmatprep.subr.mxu0 0.0
      %5680 = vmatpush1.msra.mxu0 0.0
      %5681 = vmatprep.subr.mxu0 0.0
      %5682 = vmatpush1.msra.mxu0 0.0
      %5683 = vmatprep.subr.mxu0 0.0
      %5684 = vmatpush1.msra.mxu0 0.0
      %5685 = vmatprep.subr.mxu0 0.0
      %5686 = vmatpush1.msra.mxu0 0.0
      %5687 = vmatprep.subr.mxu0 0.0
      %5688 = vmatpush1.msra.mxu0 0.0
      %5689 = vmatprep.subr.mxu0 0.0
      %5690 = vmatpush1.msra.mxu0 0.0
      %5691 = vmatprep.subr.mxu0 0.0
      %5692 = vmatpush1.msra.mxu0 0.0
      %5693 = vmatprep.subr.mxu0 0.0
      %5694 = vmatpush1.msra.mxu0 0.0
      %5695 = vmatprep.subr.mxu0 0.0
      %5696 = vmatpush1.msra.mxu0 %v5659
      %5697 = vmatprep.subr.mxu0 0.0
      %5698 = vmatpush2.msra.mxu0 0.0
      %5699 = vmatprep.subr.mxu0 0.0
      %5700 = vmatpush2.msra.mxu0 0.0
      %5701 = vmatprep.subr.mxu0 0.0
      %5702 = vmatpush2.msra.mxu0 0.0
      %5703 = vmatprep.subr.mxu0 0.0
      %5704 = vmatpush2.msra.mxu0 0.0
      %5705 = vmatprep.subr.mxu0 0.0
      %5706 = vmatpush2.msra.mxu0 0.0
      %5707 = vmatprep.subr.mxu0 0.0
      %5708 = vmatpush2.msra.mxu0 0.0
      %5709 = vmatprep.subr.mxu0 0.0
      %5710 = vmatpush2.msra.mxu0 0.0
      %5711 = vmatprep.subr.mxu0 0.0
      %5712 = vmatpush2.msra.mxu0 0.0
      %5713 = vmatprep.subr.mxu0 0.0
      %5714 = vmatpush2.msra.mxu0 0.0
      %5715 = vmatprep.subr.mxu0 0.0
      %5716 = vmatpush2.msra.mxu0 0.0
      %5717 = vmatprep.subr.mxu0 0.0
      %5718 = vmatpush2.msra.mxu0 0.0
      %5719 = vmatprep.subr.mxu0 0.0
      %5720 = vmatpush2.msra.mxu0 0.0
      %5721 = vmatprep.subr.mxu0 0.0
      %5722 = vmatpush2.msra.mxu0 0.0
      %5723 = vmatprep.subr.mxu0 0.0
      %5724 = vmatpush2.msra.mxu0 0.0
      %5725 = vmatprep.subr.mxu0 0.0
      %5726 = vmatpush2.msra.mxu0 0.0
      %5727 = vmatprep.subr.mxu0 0.0
      %5728 = vmatpush2.msra.mxu0 0.0
      %5729 = vmatprep.mubr.f32.mxu0 0.0
      %5730 = vmatmul.mubr.f32.gmra.mxu0 %v5663
      %v5731 = vpop.f32.mrf.mxu0
      %v5732 = vadd.f32 %v5661, %v5731
      %v5733 = vpop.f32.mrf.mxu0
      %5734 = vdwg.mxu0
      %v5735 = vmax.f32 %v5732, 0.0
      %s5736 = scalar_lea.vmem %s4, 8
      %v5737 = vld [vmem:[%s5736] sm:$0x3]
      %v5738 = vunpack.c.l.bf16 %v5737
      %v5740 = vsel %vm4193, %v5735, 0
      %v5743 = vsel %vm602, %v5738, 0
      %5745 = vmatprep.subr.mxu0 0.0
      %5746 = vmatpush1.msra.mxu0 0.0
      %5747 = vmatprep.subr.mxu0 0.0
      %5748 = vmatpush1.msra.mxu0 0.0
      %5749 = vmatprep.subr.mxu0 0.0
      %5750 = vmatpush1.msra.mxu0 0.0
      %5751 = vmatprep.subr.mxu0 0.0
      %5752 = vmatpush1.msra.mxu0 0.0
      %5753 = vmatprep.subr.mxu0 0.0
      %5754 = vmatpush1.msra.mxu0 0.0
      %5755 = vmatprep.subr.mxu0 0.0
      %5756 = vmatpush1.msra.mxu0 0.0
      %5757 = vmatprep.subr.mxu0 0.0
      %5758 = vmatpush1.msra.mxu0 0.0
      %5759 = vmatprep.subr.mxu0 0.0
      %5760 = vmatpush1.msra.mxu0 0.0
      %5761 = vmatprep.subr.mxu0 0.0
      %5762 = vmatpush1.msra.mxu0 0.0
      %5763 = vmatprep.subr.mxu0 0.0
      %5764 = vmatpush1.msra.mxu0 0.0
      %5765 = vmatprep.subr.mxu0 0.0
      %5766 = vmatpush1.msra.mxu0 0.0
      %5767 = vmatprep.subr.mxu0 0.0
      %5768 = vmatpush1.msra.mxu0 0.0
      %5769 = vmatprep.subr.mxu0 0.0
      %5770 = vmatpush1.msra.mxu0 0.0
      %5771 = vmatprep.subr.mxu0 0.0
      %5772 = vmatpush1.msra.mxu0 0.0
      %5773 = vmatprep.subr.mxu0 0.0
      %5774 = vmatpush1.msra.mxu0 0.0
      %5775 = vmatprep.subr.mxu0 0.0
      %5776 = vmatpush1.msra.mxu0 %v5743
      %5777 = vmatprep.subr.mxu0 0.0
      %5778 = vmatpush2.msra.mxu0 0.0
      %5779 = vmatprep.subr.mxu0 0.0
      %5780 = vmatpush2.msra.mxu0 0.0
      %5781 = vmatprep.subr.mxu0 0.0
      %5782 = vmatpush2.msra.mxu0 0.0
      %5783 = vmatprep.subr.mxu0 0.0
      %5784 = vmatpush2.msra.mxu0 0.0
      %5785 = vmatprep.subr.mxu0 0.0
      %5786 = vmatpush2.msra.mxu0 0.0
      %5787 = vmatprep.subr.mxu0 0.0
      %5788 = vmatpush2.msra.mxu0 0.0
      %5789 = vmatprep.subr.mxu0 0.0
      %5790 = vmatpush2.msra.mxu0 0.0
      %5791 = vmatprep.subr.mxu0 0.0
      %5792 = vmatpush2.msra.mxu0 0.0
      %5793 = vmatprep.subr.mxu0 0.0
      %5794 = vmatpush2.msra.mxu0 0.0
      %5795 = vmatprep.subr.mxu0 0.0
      %5796 = vmatpush2.msra.mxu0 0.0
      %5797 = vmatprep.subr.mxu0 0.0
      %5798 = vmatpush2.msra.mxu0 0.0
      %5799 = vmatprep.subr.mxu0 0.0
      %5800 = vmatpush2.msra.mxu0 0.0
      %5801 = vmatprep.subr.mxu0 0.0
      %5802 = vmatpush2.msra.mxu0 0.0
      %5803 = vmatprep.subr.mxu0 0.0
      %5804 = vmatpush2.msra.mxu0 0.0
      %5805 = vmatprep.subr.mxu0 0.0
      %5806 = vmatpush2.msra.mxu0 0.0
      %5807 = vmatprep.subr.mxu0 0.0
      %5808 = vmatpush2.msra.mxu0 0.0
      %5809 = vmatprep.mubr.f32.mxu0 0.0
      %5810 = vmatmul.mubr.f32.gmra.mxu0 %v5740
      %v5811 = vpop.f32.mrf.mxu0
      %v5812 = vadd.f32 0.0, %v5811
      %v5813 = vpop.f32.mrf.mxu0
      %5814 = vdwg.mxu0
      %v5815 = vlaneseq
      %v5816 = vshrl.u32 %v5815, 7
      %v5817 = vsub.s32 0, %v5816
      %v5818 = vrot.slane %v5812, %v5817
      %v5819 = vadd.f32 %v5523, %v5818
      %v5820 = vadd.f32 %v5524, %v5818
      %v5821 = vadd.f32 %v5525, %v5818
      %v5822 = vadd.f32 %v5526, %v5818
      %v5823 = vadd.f32 %v5527, %v5818
      %v5824 = vadd.f32 %v5528, %v5818
      %v5825 = vadd.f32 %v5529, %v5818
      %v5826 = vadd.f32 %v5530, %v5818
      %v5827 = vadd.f32 %v5531, %v5818
      %v5828 = vadd.f32 %v5532, %v5818
      %v5829 = vadd.f32 %v5533, %v5818
      %v5830 = vadd.f32 %v5534, %v5818
      %v5831 = vadd.f32 %v5535, %v5818
      %v5832 = vadd.f32 %v5536, %v5818
      %v5833 = vadd.f32 %v5537, %v5818
      %v5834 = vadd.f32 %v5538, %v5818
      %v5835 = vadd.f32 %v5539, %v5818
      %v5836 = vadd.f32 %v5540, %v5818
      %v5837 = vadd.f32 %v5541, %v5818
      %v5838 = vadd.f32 %v5542, %v5818
      %v5839 = vadd.f32 %v5543, %v5818
      %v5840 = vadd.f32 %v5544, %v5818
      %v5841 = vadd.f32 %v5545, %v5818
      %v5842 = vadd.f32 %v5546, %v5818
      %v5843 = vadd.f32 %v5547, %v5818
      %v5844 = vadd.f32 %v5548, %v5818
      %v5845 = vadd.f32 %v5549, %v5818
      %v5846 = vadd.f32 %v5550, %v5818
      %v5847 = vadd.f32 %v5551, %v5818
      %v5848 = vadd.f32 %v5552, %v5818
      %v5849 = vadd.f32 %v5553, %v5818
      %v5850 = vadd.f32 %v5554, %v5818
      %s5851 = scalar_lea.vmem %s5, 5
      %v5852 = vld [vmem:[%s5851] sm:$0x1]
      %v5854 = vlaneseq
      %v5855 = vshrl.u32 %v5854, 7
      %v5856 = vsub.s32 0, %v5855
      %v5857 = vrot.slane %v5852, %v5856
      %v5859 = vadd.f32 %v5819, %v5857
      %v5860 = vadd.f32 %v5820, %v5857
      %v5861 = vadd.f32 %v5821, %v5857
      %v5862 = vadd.f32 %v5822, %v5857
      %v5863 = vadd.f32 %v5823, %v5857
      %v5864 = vadd.f32 %v5824, %v5857
      %v5865 = vadd.f32 %v5825, %v5857
      %v5866 = vadd.f32 %v5826, %v5857
      %v5867 = vadd.f32 %v5827, %v5857
      %v5868 = vadd.f32 %v5828, %v5857
      %v5869 = vadd.f32 %v5829, %v5857
      %v5870 = vadd.f32 %v5830, %v5857
      %v5871 = vadd.f32 %v5831, %v5857
      %v5872 = vadd.f32 %v5832, %v5857
      %v5873 = vadd.f32 %v5833, %v5857
      %v5874 = vadd.f32 %v5834, %v5857
      %v5875 = vadd.f32 %v5835, %v5857
      %v5876 = vadd.f32 %v5836, %v5857
      %v5877 = vadd.f32 %v5837, %v5857
      %v5878 = vadd.f32 %v5838, %v5857
      %v5879 = vadd.f32 %v5839, %v5857
      %v5880 = vadd.f32 %v5840, %v5857
      %v5881 = vadd.f32 %v5841, %v5857
      %v5882 = vadd.f32 %v5842, %v5857
      %v5883 = vadd.f32 %v5843, %v5857
      %v5884 = vadd.f32 %v5844, %v5857
      %v5885 = vadd.f32 %v5845, %v5857
      %v5886 = vadd.f32 %v5846, %v5857
      %v5887 = vadd.f32 %v5847, %v5857
      %v5888 = vadd.f32 %v5848, %v5857
      %v5889 = vadd.f32 %v5849, %v5857
      %v5890 = vadd.f32 %v5850, %v5857
      %v5891 = vmax.f32 %v5859, 0.0
      %v5892 = vmax.f32 %v5860, 0.0
      %v5893 = vmax.f32 %v5861, 0.0
      %v5894 = vmax.f32 %v5862, 0.0
      %v5895 = vmax.f32 %v5863, 0.0
      %v5896 = vmax.f32 %v5864, 0.0
      %v5897 = vmax.f32 %v5865, 0.0
      %v5898 = vmax.f32 %v5866, 0.0
      %v5899 = vmax.f32 %v5867, 0.0
      %v5900 = vmax.f32 %v5868, 0.0
      %v5901 = vmax.f32 %v5869, 0.0
      %v5902 = vmax.f32 %v5870, 0.0
      %v5903 = vmax.f32 %v5871, 0.0
      %v5904 = vmax.f32 %v5872, 0.0
      %v5905 = vmax.f32 %v5873, 0.0
      %v5906 = vmax.f32 %v5874, 0.0
      %v5907 = vmax.f32 %v5875, 0.0
      %v5908 = vmax.f32 %v5876, 0.0
      %v5909 = vmax.f32 %v5877, 0.0
      %v5910 = vmax.f32 %v5878, 0.0
      %v5911 = vmax.f32 %v5879, 0.0
      %v5912 = vmax.f32 %v5880, 0.0
      %v5913 = vmax.f32 %v5881, 0.0
      %v5914 = vmax.f32 %v5882, 0.0
      %v5915 = vmax.f32 %v5883, 0.0
      %v5916 = vmax.f32 %v5884, 0.0
      %v5917 = vmax.f32 %v5885, 0.0
      %v5918 = vmax.f32 %v5886, 0.0
      %v5919 = vmax.f32 %v5887, 0.0
      %v5920 = vmax.f32 %v5888, 0.0
      %v5921 = vmax.f32 %v5889, 0.0
      %v5922 = vmax.f32 %v5890, 0.0
      %5923 = vst.msk [vmem:[%s251] sm:$0xff] %vm4193, %v5891
      %5924 = vst.msk [vmem:[%s251 + $0x8] sm:$0xff] %vm4193, %v5892
      %5925 = vst.msk [vmem:[%s251 + $0x10] sm:$0xff] %vm4193, %v5893
      %5926 = vst.msk [vmem:[%s251 + $0x18] sm:$0xff] %vm4193, %v5894
      %5927 = vst.msk [vmem:[%s251 + $0x20] sm:$0xff] %vm4193, %v5895
      %5928 = vst.msk [vmem:[%s251 + $0x28] sm:$0xff] %vm4193, %v5896
      %5929 = vst.msk [vmem:[%s251 + $0x30] sm:$0xff] %vm4193, %v5897
      %5930 = vst.msk [vmem:[%s251 + $0x38] sm:$0xff] %vm4193, %v5898
      %5931 = vst.msk [vmem:[%s251 + $0x40] sm:$0xff] %vm4193, %v5899
      %5932 = vst.msk [vmem:[%s251 + $0x48] sm:$0xff] %vm4193, %v5900
      %5933 = vst.msk [vmem:[%s251 + $0x50] sm:$0xff] %vm4193, %v5901
      %5934 = vst.msk [vmem:[%s251 + $0x58] sm:$0xff] %vm4193, %v5902
      %5935 = vst.msk [vmem:[%s251 + $0x60] sm:$0xff] %vm4193, %v5903
      %5936 = vst.msk [vmem:[%s251 + $0x68] sm:$0xff] %vm4193, %v5904
      %5937 = vst.msk [vmem:[%s251 + $0x70] sm:$0xff] %vm4193, %v5905
      %5938 = vst.msk [vmem:[%s251 + $0x78] sm:$0xff] %vm4193, %v5906
      %5939 = vst.msk [vmem:[%s251 + $0x80] sm:$0xff] %vm4193, %v5907
      %5940 = vst.msk [vmem:[%s251 + $0x88] sm:$0xff] %vm4193, %v5908
      %5941 = vst.msk [vmem:[%s251 + $0x90] sm:$0xff] %vm4193, %v5909
      %5942 = vst.msk [vmem:[%s251 + $0x98] sm:$0xff] %vm4193, %v5910
      %5943 = vst.msk [vmem:[%s251 + $0xa0] sm:$0xff] %vm4193, %v5911
      %5944 = vst.msk [vmem:[%s251 + $0xa8] sm:$0xff] %vm4193, %v5912
      %5945 = vst.msk [vmem:[%s251 + $0xb0] sm:$0xff] %vm4193, %v5913
      %5946 = vst.msk [vmem:[%s251 + $0xb8] sm:$0xff] %vm4193, %v5914
      %5947 = vst.msk [vmem:[%s251 + $0xc0] sm:$0xff] %vm4193, %v5915
      %5948 = vst.msk [vmem:[%s251 + $0xc8] sm:$0xff] %vm4193, %v5916
      %5949 = vst.msk [vmem:[%s251 + $0xd0] sm:$0xff] %vm4193, %v5917
      %5950 = vst.msk [vmem:[%s251 + $0xd8] sm:$0xff] %vm4193, %v5918
      %5951 = vst.msk [vmem:[%s251 + $0xe0] sm:$0xff] %vm4193, %v5919
      %5952 = vst.msk [vmem:[%s251 + $0xe8] sm:$0xff] %vm4193, %v5920
      %5953 = vst.msk [vmem:[%s251 + $0xf0] sm:$0xff] %vm4193, %v5921
      %5954 = vst.msk [vmem:[%s251 + $0xf8] sm:$0xff] %vm4193, %v5922
      %p5955 = scmp.lt.s32.totalorder %s17, 1
      %s5956 = scalar_select %p5955, %s17, 1
      %s5957 = smul.addr %s5956, 32
      %s5958 = smul.addr %s5957, 8
      %s5959 = scalar_lea.vmem %s6, %s5958
      // Predicated region
      $region45: #{spp_module_forward.1} parent=43 // pred_check
        %p5960 = pneg %p166
      $region46: #{spp_module_forward.1} parent=43 // pred_check_branch
        %5962 = sbr.rel (%p5960) target = $region48
      $region47: #{spp_module_forward.1} parent=43 // pred_region
        _
      $region48: #{spp_module_forward.1} parent=43 // pred_fallthru
        _
    $region44: #{spp_module_forward.1} parent=5 // pred_fallthru
      _
    %p5963 = scmp.le.s32.totalorder 2, %s12
    // Predicated region
    $region49: #{spp_module_forward.1} parent=5 // pred_check
      %p5964 = pneg %p5963
    $region50: #{spp_module_forward.1} parent=5 // pred_check_branch
      %5966 = sbr.rel (%p5964) target = $region52
    $region51: #{spp_module_forward.1} parent=5 // pred_region
      %s5967 = ssub.s32 %s12, 2
      // Predicated region
      $region53: #{spp_module_forward.1} parent=51 // pred_check
        %p5968 = pneg %p172
      $region54: #{spp_module_forward.1} parent=51 // pred_check_branch
        %5970 = sbr.rel (%p5968) target = $region56
      $region55: #{spp_module_forward.1} parent=51 // pred_region
        %p5971 = scmp.lt.s32.totalorder %s18, 1
        %s5972 = scalar_select %p5971, %s18, 1
        %s5973 = smul.addr %s5972, 32
        %s5974 = smul.addr %s5973, 8
        %s5975 = scalar_lea.vmem %s6, %s5974
      $region56: #{spp_module_forward.1} parent=51 // pred_fallthru
        _
    $region52: #{spp_module_forward.1} parent=5 // pred_fallthru
      _
  $region6: #{spp_module_forward.1} parent=0 // loop_footer
    %s16 = sadd.s32 1, %s12
  $region7: #{spp_module_forward.1} parent=0 // loop_footer_branch
    %11 = sbr.rel target = $region3
  $region8: #{spp_module_forward.1} parent=0 // loop_exit
    _

</llo_original>
